<compile_context>
chip_gen: v7x
topology: tpu7x:2x2x1
jax: 0.10.0
libtpu: 0.0.40
codegen_flags: <defaults>
</compile_context>

<pallas_src>
import functools

import jax
import jax.numpy as jnp
from jax import lax
from jax.experimental import pallas as pl

LN_EPS = 1e-5   # nn.LayerNorm default eps
_LANE = 128
_SUBLANE = 8


def _round_up(x, m):
    return (x + m - 1) // m * m


# ------------------------------ Pallas kernel ------------------------------- #

def _layer_norm_masked(h, gamma, beta, inv_e, mask):
    """LayerNorm over the (zero-padded) channel axis; statistics over the E
    valid lanes only.  Padded lanes of `h` are exactly zero, so a full-lane sum
    equals the valid-lane sum; gamma/beta are zero on padded lanes so the
    padded output lanes stay exactly zero."""
    mean = jnp.sum(h, axis=-1, keepdims=True) * inv_e
    centered = h - mean                                   # reused for var AND output
    var = jnp.sum(jnp.where(mask, centered * centered, 0.0),
                  axis=-1, keepdims=True) * inv_e
    return centered * lax.rsqrt(var + LN_EPS) * gamma + beta


def _nextitnet_fused_kernel(x_ref, w1s_ref, w2s_ref, vecs_ref, fw_ref, fb_ref,
                            o_ref, *, n_blocks, e_dim):
    x = x_ref[...]                                        # (BSp, Ep) f32 slab
    ep = x.shape[-1]
    # Hoisted loop-invariants (built once for all unrolled blocks).
    mask = lax.broadcasted_iota(jnp.int32, (1, ep), 1) < e_dim
    inv_e = jnp.float32(1.0 / e_dim)

    for i in range(n_blocks):                             # static L -> unrolled
        w1 = w1s_ref[i]                                   # (Ep, Ep)
        w2 = w2s_ref[i]                                   # (Ep, Ep)
        v = vecs_ref[i]                                   # (8, Ep): b1,g1,be1,b2,g2,be2,0,0
        b1, g1, be1 = v[0:1], v[1:2], v[2:3]
        b2, g2, be2 = v[3:4], v[4:5], v[5:6]

        # conv1 (K=1 dilated Conv1d == pointwise channel matmul) + LN + ReLU
        h = jnp.dot(x, w1, preferred_element_type=jnp.float32) + b1
        h = _layer_norm_masked(h, g1, be1, inv_e, mask)
        h = jnp.maximum(h, 0.0)
        # conv2 + LN + ReLU
        h = jnp.dot(h, w2, preferred_element_type=jnp.float32) + b2
        h = _layer_norm_masked(h, g2, be2, inv_e, mask)
        h = jnp.maximum(h, 0.0)
        # residual
        x = x + h

    # final Linear over the padded vocab axis (lane-dense store; sliced outside)
    logits = jnp.dot(x, fw_ref[...], preferred_element_type=jnp.float32) + fb_ref[...]
    o_ref[...] = logits.astype(o_ref.dtype)


# ------------------------------ Python wrappers ------------------------------ #

def pack_params(params):
    """One-time repack: zero-pad lanes to 128 and stack per-block weights."""
    E = params["embedding"].shape[1]
    N = params["final_w"].shape[1]
    Ep, Np = _round_up(E, _LANE), _round_up(N, _LANE)

    def pad_mat(w, rows, cols):
        return jnp.pad(w, ((0, rows - w.shape[0]), (0, cols - w.shape[1])))

    def pad_vec(v):
        return jnp.pad(v, (0, Ep - v.shape[0]))

    zeros = jnp.zeros((Ep,), jnp.float32)
    w1s = jnp.stack([pad_mat(bp["w1"], Ep, Ep) for bp in params["blocks"]])
    w2s = jnp.stack([pad_mat(bp["w2"], Ep, Ep) for bp in params["blocks"]])
    vecs = jnp.stack([
        jnp.stack([pad_vec(bp["b1"]), pad_vec(bp["g1"]), pad_vec(bp["be1"]),
                   pad_vec(bp["b2"]), pad_vec(bp["g2"]), pad_vec(bp["be2"]),
                   zeros, zeros])
        for bp in params["blocks"]])                      # (L, 8, Ep)
    fw = pad_mat(params["final_w"], Ep, Np)
    fb = jnp.pad(params["final_b"], (0, Np - N)).reshape(1, Np)
    return dict(embedding=params["embedding"], w1s=w1s, w2s=w2s,
                vecs=vecs, fw=fw, fb=fb)


@jax.jit
def nextitnet_forward(packed, item_ids):
    B, S = item_ids.shape
    N, E = packed["embedding"].shape              # final layer outputs n_items+1 == N
    Ep, Np = packed["fw"].shape
    L = packed["w1s"].shape[0]
    BS = B * S
    BSp = _round_up(BS, _SUBLANE)

    # embedding gather stays in plain JAX (glue); flatten + zero-pad the slab.
    x = jnp.take(packed["embedding"], item_ids, axis=0).reshape(BS, E)
    x = jnp.pad(x, ((0, BSp - BS), (0, Ep - E)))

    kernel = functools.partial(_nextitnet_fused_kernel, n_blocks=L, e_dim=E)
    out = pl.pallas_call(
        kernel,
        out_shape=jax.ShapeDtypeStruct((BSp, Np), jnp.float32),
        # No grid: a single step with every operand whole-array resident in
        # VMEM (~0.65 MiB total here, far under every generation's budget).
    )(x, packed["w1s"], packed["w2s"], packed["vecs"], packed["fw"], packed["fb"])

    # dropout == identity (eval mode); strip the padding back off.
    return out[:BS, :N].reshape(B, S, N)


# --------------------------- parameter initialization ------------------------ #

def init_params(key, n_items, embedding_dim, dilations):
    E = embedding_dim
    n_out = n_items + 1
    k_emb, k_fw, k_fb, k_blocks = jax.random.split(key, 4)

    # nn.Embedding(n_items+1, E, padding_idx=0) with xavier_normal_
    std_emb = (2.0 / (n_out + E)) ** 0.5
    embedding = std_emb * jax.random.normal(k_emb, (n_out, E), jnp.float32)
    embedding = embedding.at[0].set(0.0)                  # padding_idx=0

    # NOTE: PyTorch inits LN gamma/beta to ones/zeros and final bias to zeros;
    # they are randomized here ("as if trained") so the correctness check
    # exercises every term of the forward pass.
    blocks = []
    scale = (1.0 / E) ** 0.5
    bkeys = jax.random.split(k_blocks, 8 * len(dilations)).reshape(
        len(dilations), 8, 2)
    for i, _dil in enumerate(dilations):
        kw1, kb1, kg1, kbe1, kw2, kb2, kg2, kbe2 = bkeys[i]
        blocks.append(dict(
            # Conv1d(E, E, K=1) weight (E_out, E_in, 1) stored transposed (E_in, E_out)
            w1=scale * jax.random.normal(kw1, (E, E), jnp.float32),
            b1=0.1 * jax.random.normal(kb1, (E,), jnp.float32),
            g1=1.0 + 0.1 * jax.random.normal(kg1, (E,), jnp.float32),
            be1=0.1 * jax.random.normal(kbe1, (E,), jnp.float32),
            w2=scale * jax.random.normal(kw2, (E, E), jnp.float32),
            b2=0.1 * jax.random.normal(kb2, (E,), jnp.float32),
            g2=1.0 + 0.1 * jax.random.normal(kg2, (E,), jnp.float32),
            be2=0.1 * jax.random.normal(kbe2, (E,), jnp.float32),
        ))

    # final Linear(E, n_items+1): xavier_normal_ weight
    std_fin = (2.0 / (E + n_out)) ** 0.5
    final_w = std_fin * jax.random.normal(k_fw, (E, n_out), jnp.float32)
    final_b = 0.01 * jax.random.normal(k_fb, (n_out,), jnp.float32)
    return dict(embedding=embedding, blocks=blocks,
                final_w=final_w, final_b=final_b)


# ----------------------------- pure-JAX reference ---------------------------- #

def _layer_norm_ref(h, gamma, beta):
    mean = jnp.mean(h, axis=-1, keepdims=True)
    var = jnp.mean((h - mean) ** 2, axis=-1, keepdims=True)
    return (h - mean) * lax.rsqrt(var + LN_EPS) * gamma + beta


def reference_forward(params, item_ids):
    hp = lax.Precision.HIGHEST          # match the kernel's full-f32 MXU matmuls
    x = jnp.take(params["embedding"], item_ids, axis=0)
    for p in params["blocks"]:
        h = jnp.dot(x, p["w1"], precision=hp) + p["b1"]
        h = _layer_norm_ref(h, p["g1"], p["be1"])
        h = jnp.maximum(h, 0.0)
        h = jnp.dot(h, p["w2"], precision=hp) + p["b2"]
        h = _layer_norm_ref(h, p["g2"], p["be2"])
        h = jnp.maximum(h, 0.0)
        x = x + h
    return jnp.dot(x, params["final_w"], precision=hp) + params["final_b"]


# ------------------------------------ main ----------------------------------- #

if __name__ == "__main__":
    n_items = 50
    embedding_dim = 32
    kernel_size = 1                  # see TODO(synk): only K=1 is well-defined
    dilations = [1, 2, 4, 8, 1, 2, 4, 8]
    B, S = 2, 8

    key = jax.random.PRNGKey(0)
    k_params, k_ids = jax.random.split(key)
    params = init_params(k_params, n_items, embedding_dim, dilations)
    item_ids = jax.random.randint(k_ids, (B, S), 1, n_items + 1, dtype=jnp.int32)

    packed = pack_params(params)
    out = jax.block_until_ready(nextitnet_forward(packed, item_ids))

    assert out.shape == (B, S, n_items + 1), out.shape
    ref = reference_forward(params, item_ids)
    max_err = float(jnp.max(jnp.abs(out - ref)))
    assert jnp.allclose(out, ref, atol=3e-5, rtol=3e-5), max_err
    print("KERNEL_OK")
</pallas_src>

<mosaic_0001>
module attributes {stable_mosaic.version = 11 : i64} {
  func.func @_nextitnet_fused_kernel(%arg0: memref<16x128xf32, #tpu.memory_space<vmem>>, %arg1: memref<8x128x128xf32, #tpu.memory_space<vmem>>, %arg2: memref<8x128x128xf32, #tpu.memory_space<vmem>>, %arg3: memref<8x8x128xf32, #tpu.memory_space<vmem>>, %arg4: memref<128x128xf32, #tpu.memory_space<vmem>>, %arg5: memref<1x128xf32, #tpu.memory_space<vmem>>, %arg6: memref<16x128xf32, #tpu.memory_space<vmem>>) attributes {dimension_semantics = [], scalar_prefetch = 0 : i64, scratch_operands = 0 : i64, tpu.core_type = #tpu.core_type<tc>} {
    %c0 = arith.constant 0 : index
    %c0_0 = arith.constant 0 : index
    %0 = vector.load %arg0[%c0, %c0_0] : memref<16x128xf32, #tpu.memory_space<vmem>>, vector<16x128xf32>
    %1 = tpu.iota {dimensions = array<i32: 1>} : vector<1x128xi32>
    %c32_i32 = arith.constant 32 : i32
    %2 = vector.broadcast %c32_i32 : i32 to vector<1x128xi32>
    %3 = arith.cmpi slt, %1, %2 : vector<1x128xi32>
    %c0_1 = arith.constant 0 : index
    %c0_2 = arith.constant 0 : index
    %c0_3 = arith.constant 0 : index
    %4 = vector.load %arg1[%c0_1, %c0_2, %c0_3] : memref<8x128x128xf32, #tpu.memory_space<vmem>>, vector<1x128x128xf32>
    %5 = vector.shape_cast %4 : vector<1x128x128xf32> to vector<128x128xf32>
    %c0_4 = arith.constant 0 : index
    %c0_5 = arith.constant 0 : index
    %c0_6 = arith.constant 0 : index
    %6 = vector.load %arg2[%c0_4, %c0_5, %c0_6] : memref<8x128x128xf32, #tpu.memory_space<vmem>>, vector<1x128x128xf32>
    %7 = vector.shape_cast %6 : vector<1x128x128xf32> to vector<128x128xf32>
    %c0_7 = arith.constant 0 : index
    %c0_8 = arith.constant 0 : index
    %c0_9 = arith.constant 0 : index
    %8 = vector.load %arg3[%c0_7, %c0_8, %c0_9] : memref<8x8x128xf32, #tpu.memory_space<vmem>>, vector<1x8x128xf32>
    %9 = vector.shape_cast %8 : vector<1x8x128xf32> to vector<8x128xf32>
    %10 = vector.extract_strided_slice %9 {offsets = [0, 0], sizes = [1, 128], strides = [1, 1]} : vector<8x128xf32> to vector<1x128xf32>
    %11 = vector.extract_strided_slice %9 {offsets = [1, 0], sizes = [1, 128], strides = [1, 1]} : vector<8x128xf32> to vector<1x128xf32>
    %12 = vector.extract_strided_slice %9 {offsets = [2, 0], sizes = [1, 128], strides = [1, 1]} : vector<8x128xf32> to vector<1x128xf32>
    %13 = vector.extract_strided_slice %9 {offsets = [3, 0], sizes = [1, 128], strides = [1, 1]} : vector<8x128xf32> to vector<1x128xf32>
    %14 = vector.extract_strided_slice %9 {offsets = [4, 0], sizes = [1, 128], strides = [1, 1]} : vector<8x128xf32> to vector<1x128xf32>
    %15 = vector.extract_strided_slice %9 {offsets = [5, 0], sizes = [1, 128], strides = [1, 1]} : vector<8x128xf32> to vector<1x128xf32>
    %cst = arith.constant dense<0.000000e+00> : vector<16x128xf32>
    %16 = tpu.matmul %0, %5, %cst {dimension_numbers = #tpu.dot_dimension_numbers<[1], [0], [0], [1], [0, 0, 1, 1], [], []>} : vector<16x128xf32>, vector<128x128xf32>, vector<16x128xf32> -> vector<16x128xf32>
    %17 = vector.broadcast %10 : vector<1x128xf32> to vector<16x128xf32>
    %18 = arith.addf %16, %17 : vector<16x128xf32>
    %cst_10 = arith.constant dense<0.000000e+00> : vector<16xf32>
    %19 = vector.multi_reduction <add>, %18, %cst_10 [1] : vector<16x128xf32> to vector<16xf32>
    %20 = vector.shape_cast %19 : vector<16xf32> to vector<16x1xf32>
    %cst_11 = arith.constant 3.125000e-02 : f32
    %21 = vector.broadcast %cst_11 : f32 to vector<16x1xf32>
    %22 = arith.mulf %20, %21 : vector<16x1xf32>
    %23 = vector.broadcast %22 : vector<16x1xf32> to vector<16x128xf32>
    %24 = arith.subf %18, %23 : vector<16x128xf32>
    %25 = arith.mulf %24, %24 : vector<16x128xf32>
    %cst_12 = arith.constant 0.000000e+00 : f32
    %26 = vector.shape_cast %3 : vector<1x128xi1> to vector<1x128xi1>
    %27 = vector.broadcast %26 : vector<1x128xi1> to vector<16x128xi1>
    %28 = vector.broadcast %cst_12 : f32 to vector<16x128xf32>
    %29 = arith.select %27, %25, %28 : vector<16x128xi1>, vector<16x128xf32>
    %cst_13 = arith.constant dense<0.000000e+00> : vector<16xf32>
    %30 = vector.multi_reduction <add>, %29, %cst_13 [1] : vector<16x128xf32> to vector<16xf32>
    %31 = vector.shape_cast %30 : vector<16xf32> to vector<16x1xf32>
    %cst_14 = arith.constant 3.125000e-02 : f32
    %32 = vector.broadcast %cst_14 : f32 to vector<16x1xf32>
    %33 = arith.mulf %31, %32 : vector<16x1xf32>
    %cst_15 = arith.constant 9.99999974E-6 : f32
    %34 = vector.broadcast %cst_15 : f32 to vector<16x1xf32>
    %35 = arith.addf %33, %34 : vector<16x1xf32>
    %36 = math.rsqrt %35 : vector<16x1xf32>
    %37 = vector.broadcast %36 : vector<16x1xf32> to vector<16x128xf32>
    %38 = arith.mulf %24, %37 : vector<16x128xf32>
    %39 = vector.broadcast %11 : vector<1x128xf32> to vector<16x128xf32>
    %40 = arith.mulf %38, %39 : vector<16x128xf32>
    %41 = vector.broadcast %12 : vector<1x128xf32> to vector<16x128xf32>
    %42 = arith.addf %40, %41 : vector<16x128xf32>
    %cst_16 = arith.constant 0.000000e+00 : f32
    %43 = vector.broadcast %cst_16 : f32 to vector<16x128xf32>
    %44 = arith.maximumf %42, %43 : vector<16x128xf32>
    %cst_17 = arith.constant dense<0.000000e+00> : vector<16x128xf32>
    %45 = tpu.matmul %44, %7, %cst_17 {dimension_numbers = #tpu.dot_dimension_numbers<[1], [0], [0], [1], [0, 0, 1, 1], [], []>} : vector<16x128xf32>, vector<128x128xf32>, vector<16x128xf32> -> vector<16x128xf32>
    %46 = vector.broadcast %13 : vector<1x128xf32> to vector<16x128xf32>
    %47 = arith.addf %45, %46 : vector<16x128xf32>
    %cst_18 = arith.constant dense<0.000000e+00> : vector<16xf32>
    %48 = vector.multi_reduction <add>, %47, %cst_18 [1] : vector<16x128xf32> to vector<16xf32>
    %49 = vector.shape_cast %48 : vector<16xf32> to vector<16x1xf32>
    %cst_19 = arith.constant 3.125000e-02 : f32
    %50 = vector.broadcast %cst_19 : f32 to vector<16x1xf32>
    %51 = arith.mulf %49, %50 : vector<16x1xf32>
    %52 = vector.broadcast %51 : vector<16x1xf32> to vector<16x128xf32>
    %53 = arith.subf %47, %52 : vector<16x128xf32>
    %54 = arith.mulf %53, %53 : vector<16x128xf32>
    %cst_20 = arith.constant 0.000000e+00 : f32
    %55 = vector.shape_cast %3 : vector<1x128xi1> to vector<1x128xi1>
    %56 = vector.broadcast %55 : vector<1x128xi1> to vector<16x128xi1>
    %57 = vector.broadcast %cst_20 : f32 to vector<16x128xf32>
    %58 = arith.select %56, %54, %57 : vector<16x128xi1>, vector<16x128xf32>
    %cst_21 = arith.constant dense<0.000000e+00> : vector<16xf32>
    %59 = vector.multi_reduction <add>, %58, %cst_21 [1] : vector<16x128xf32> to vector<16xf32>
    %60 = vector.shape_cast %59 : vector<16xf32> to vector<16x1xf32>
    %cst_22 = arith.constant 3.125000e-02 : f32
    %61 = vector.broadcast %cst_22 : f32 to vector<16x1xf32>
    %62 = arith.mulf %60, %61 : vector<16x1xf32>
    %cst_23 = arith.constant 9.99999974E-6 : f32
    %63 = vector.broadcast %cst_23 : f32 to vector<16x1xf32>
    %64 = arith.addf %62, %63 : vector<16x1xf32>
    %65 = math.rsqrt %64 : vector<16x1xf32>
    %66 = vector.broadcast %65 : vector<16x1xf32> to vector<16x128xf32>
    %67 = arith.mulf %53, %66 : vector<16x128xf32>
    %68 = vector.broadcast %14 : vector<1x128xf32> to vector<16x128xf32>
    %69 = arith.mulf %67, %68 : vector<16x128xf32>
    %70 = vector.broadcast %15 : vector<1x128xf32> to vector<16x128xf32>
    %71 = arith.addf %69, %70 : vector<16x128xf32>
    %cst_24 = arith.constant 0.000000e+00 : f32
    %72 = vector.broadcast %cst_24 : f32 to vector<16x128xf32>
    %73 = arith.maximumf %71, %72 : vector<16x128xf32>
    %74 = arith.addf %0, %73 : vector<16x128xf32>
    %c1 = arith.constant 1 : index
    %c0_25 = arith.constant 0 : index
    %c0_26 = arith.constant 0 : index
    %75 = vector.load %arg1[%c1, %c0_25, %c0_26] : memref<8x128x128xf32, #tpu.memory_space<vmem>>, vector<1x128x128xf32>
    %76 = vector.shape_cast %75 : vector<1x128x128xf32> to vector<128x128xf32>
    %c1_27 = arith.constant 1 : index
    %c0_28 = arith.constant 0 : index
    %c0_29 = arith.constant 0 : index
    %77 = vector.load %arg2[%c1_27, %c0_28, %c0_29] : memref<8x128x128xf32, #tpu.memory_space<vmem>>, vector<1x128x128xf32>
    %78 = vector.shape_cast %77 : vector<1x128x128xf32> to vector<128x128xf32>
    %c1_30 = arith.constant 1 : index
    %c0_31 = arith.constant 0 : index
    %c0_32 = arith.constant 0 : index
    %79 = vector.load %arg3[%c1_30, %c0_31, %c0_32] : memref<8x8x128xf32, #tpu.memory_space<vmem>>, vector<1x8x128xf32>
    %80 = vector.shape_cast %79 : vector<1x8x128xf32> to vector<8x128xf32>
    %81 = vector.extract_strided_slice %80 {offsets = [0, 0], sizes = [1, 128], strides = [1, 1]} : vector<8x128xf32> to vector<1x128xf32>
    %82 = vector.extract_strided_slice %80 {offsets = [1, 0], sizes = [1, 128], strides = [1, 1]} : vector<8x128xf32> to vector<1x128xf32>
    %83 = vector.extract_strided_slice %80 {offsets = [2, 0], sizes = [1, 128], strides = [1, 1]} : vector<8x128xf32> to vector<1x128xf32>
    %84 = vector.extract_strided_slice %80 {offsets = [3, 0], sizes = [1, 128], strides = [1, 1]} : vector<8x128xf32> to vector<1x128xf32>
    %85 = vector.extract_strided_slice %80 {offsets = [4, 0], sizes = [1, 128], strides = [1, 1]} : vector<8x128xf32> to vector<1x128xf32>
    %86 = vector.extract_strided_slice %80 {offsets = [5, 0], sizes = [1, 128], strides = [1, 1]} : vector<8x128xf32> to vector<1x128xf32>
    %cst_33 = arith.constant dense<0.000000e+00> : vector<16x128xf32>
    %87 = tpu.matmul %74, %76, %cst_33 {dimension_numbers = #tpu.dot_dimension_numbers<[1], [0], [0], [1], [0, 0, 1, 1], [], []>} : vector<16x128xf32>, vector<128x128xf32>, vector<16x128xf32> -> vector<16x128xf32>
    %88 = vector.broadcast %81 : vector<1x128xf32> to vector<16x128xf32>
    %89 = arith.addf %87, %88 : vector<16x128xf32>
    %cst_34 = arith.constant dense<0.000000e+00> : vector<16xf32>
    %90 = vector.multi_reduction <add>, %89, %cst_34 [1] : vector<16x128xf32> to vector<16xf32>
    %91 = vector.shape_cast %90 : vector<16xf32> to vector<16x1xf32>
    %cst_35 = arith.constant 3.125000e-02 : f32
    %92 = vector.broadcast %cst_35 : f32 to vector<16x1xf32>
    %93 = arith.mulf %91, %92 : vector<16x1xf32>
    %94 = vector.broadcast %93 : vector<16x1xf32> to vector<16x128xf32>
    %95 = arith.subf %89, %94 : vector<16x128xf32>
    %96 = arith.mulf %95, %95 : vector<16x128xf32>
    %cst_36 = arith.constant 0.000000e+00 : f32
    %97 = vector.shape_cast %3 : vector<1x128xi1> to vector<1x128xi1>
    %98 = vector.broadcast %97 : vector<1x128xi1> to vector<16x128xi1>
    %99 = vector.broadcast %cst_36 : f32 to vector<16x128xf32>
    %100 = arith.select %98, %96, %99 : vector<16x128xi1>, vector<16x128xf32>
    %cst_37 = arith.constant dense<0.000000e+00> : vector<16xf32>
    %101 = vector.multi_reduction <add>, %100, %cst_37 [1] : vector<16x128xf32> to vector<16xf32>
    %102 = vector.shape_cast %101 : vector<16xf32> to vector<16x1xf32>
    %cst_38 = arith.constant 3.125000e-02 : f32
    %103 = vector.broadcast %cst_38 : f32 to vector<16x1xf32>
    %104 = arith.mulf %102, %103 : vector<16x1xf32>
    %cst_39 = arith.constant 9.99999974E-6 : f32
    %105 = vector.broadcast %cst_39 : f32 to vector<16x1xf32>
    %106 = arith.addf %104, %105 : vector<16x1xf32>
    %107 = math.rsqrt %106 : vector<16x1xf32>
    %108 = vector.broadcast %107 : vector<16x1xf32> to vector<16x128xf32>
    %109 = arith.mulf %95, %108 : vector<16x128xf32>
    %110 = vector.broadcast %82 : vector<1x128xf32> to vector<16x128xf32>
    %111 = arith.mulf %109, %110 : vector<16x128xf32>
    %112 = vector.broadcast %83 : vector<1x128xf32> to vector<16x128xf32>
    %113 = arith.addf %111, %112 : vector<16x128xf32>
    %cst_40 = arith.constant 0.000000e+00 : f32
    %114 = vector.broadcast %cst_40 : f32 to vector<16x128xf32>
    %115 = arith.maximumf %113, %114 : vector<16x128xf32>
    %cst_41 = arith.constant dense<0.000000e+00> : vector<16x128xf32>
    %116 = tpu.matmul %115, %78, %cst_41 {dimension_numbers = #tpu.dot_dimension_numbers<[1], [0], [0], [1], [0, 0, 1, 1], [], []>} : vector<16x128xf32>, vector<128x128xf32>, vector<16x128xf32> -> vector<16x128xf32>
    %117 = vector.broadcast %84 : vector<1x128xf32> to vector<16x128xf32>
    %118 = arith.addf %116, %117 : vector<16x128xf32>
    %cst_42 = arith.constant dense<0.000000e+00> : vector<16xf32>
    %119 = vector.multi_reduction <add>, %118, %cst_42 [1] : vector<16x128xf32> to vector<16xf32>
    %120 = vector.shape_cast %119 : vector<16xf32> to vector<16x1xf32>
    %cst_43 = arith.constant 3.125000e-02 : f32
    %121 = vector.broadcast %cst_43 : f32 to vector<16x1xf32>
    %122 = arith.mulf %120, %121 : vector<16x1xf32>
    %123 = vector.broadcast %122 : vector<16x1xf32> to vector<16x128xf32>
    %124 = arith.subf %118, %123 : vector<16x128xf32>
    %125 = arith.mulf %124, %124 : vector<16x128xf32>
    %cst_44 = arith.constant 0.000000e+00 : f32
    %126 = vector.shape_cast %3 : vector<1x128xi1> to vector<1x128xi1>
    %127 = vector.broadcast %126 : vector<1x128xi1> to vector<16x128xi1>
    %128 = vector.broadcast %cst_44 : f32 to vector<16x128xf32>
    %129 = arith.select %127, %125, %128 : vector<16x128xi1>, vector<16x128xf32>
    %cst_45 = arith.constant dense<0.000000e+00> : vector<16xf32>
    %130 = vector.multi_reduction <add>, %129, %cst_45 [1] : vector<16x128xf32> to vector<16xf32>
    %131 = vector.shape_cast %130 : vector<16xf32> to vector<16x1xf32>
    %cst_46 = arith.constant 3.125000e-02 : f32
    %132 = vector.broadcast %cst_46 : f32 to vector<16x1xf32>
    %133 = arith.mulf %131, %132 : vector<16x1xf32>
    %cst_47 = arith.constant 9.99999974E-6 : f32
    %134 = vector.broadcast %cst_47 : f32 to vector<16x1xf32>
    %135 = arith.addf %133, %134 : vector<16x1xf32>
    %136 = math.rsqrt %135 : vector<16x1xf32>
    %137 = vector.broadcast %136 : vector<16x1xf32> to vector<16x128xf32>
    %138 = arith.mulf %124, %137 : vector<16x128xf32>
    %139 = vector.broadcast %85 : vector<1x128xf32> to vector<16x128xf32>
    %140 = arith.mulf %138, %139 : vector<16x128xf32>
    %141 = vector.broadcast %86 : vector<1x128xf32> to vector<16x128xf32>
    %142 = arith.addf %140, %141 : vector<16x128xf32>
    %cst_48 = arith.constant 0.000000e+00 : f32
    %143 = vector.broadcast %cst_48 : f32 to vector<16x128xf32>
    %144 = arith.maximumf %142, %143 : vector<16x128xf32>
    %145 = arith.addf %74, %144 : vector<16x128xf32>
    %c2 = arith.constant 2 : index
    %c0_49 = arith.constant 0 : index
    %c0_50 = arith.constant 0 : index
    %146 = vector.load %arg1[%c2, %c0_49, %c0_50] : memref<8x128x128xf32, #tpu.memory_space<vmem>>, vector<1x128x128xf32>
    %147 = vector.shape_cast %146 : vector<1x128x128xf32> to vector<128x128xf32>
    %c2_51 = arith.constant 2 : index
    %c0_52 = arith.constant 0 : index
    %c0_53 = arith.constant 0 : index
    %148 = vector.load %arg2[%c2_51, %c0_52, %c0_53] : memref<8x128x128xf32, #tpu.memory_space<vmem>>, vector<1x128x128xf32>
    %149 = vector.shape_cast %148 : vector<1x128x128xf32> to vector<128x128xf32>
    %c2_54 = arith.constant 2 : index
    %c0_55 = arith.constant 0 : index
    %c0_56 = arith.constant 0 : index
    %150 = vector.load %arg3[%c2_54, %c0_55, %c0_56] : memref<8x8x128xf32, #tpu.memory_space<vmem>>, vector<1x8x128xf32>
    %151 = vector.shape_cast %150 : vector<1x8x128xf32> to vector<8x128xf32>
    %152 = vector.extract_strided_slice %151 {offsets = [0, 0], sizes = [1, 128], strides = [1, 1]} : vector<8x128xf32> to vector<1x128xf32>
    %153 = vector.extract_strided_slice %151 {offsets = [1, 0], sizes = [1, 128], strides = [1, 1]} : vector<8x128xf32> to vector<1x128xf32>
    %154 = vector.extract_strided_slice %151 {offsets = [2, 0], sizes = [1, 128], strides = [1, 1]} : vector<8x128xf32> to vector<1x128xf32>
    %155 = vector.extract_strided_slice %151 {offsets = [3, 0], sizes = [1, 128], strides = [1, 1]} : vector<8x128xf32> to vector<1x128xf32>
    %156 = vector.extract_strided_slice %151 {offsets = [4, 0], sizes = [1, 128], strides = [1, 1]} : vector<8x128xf32> to vector<1x128xf32>
    %157 = vector.extract_strided_slice %151 {offsets = [5, 0], sizes = [1, 128], strides = [1, 1]} : vector<8x128xf32> to vector<1x128xf32>
    %cst_57 = arith.constant dense<0.000000e+00> : vector<16x128xf32>
    %158 = tpu.matmul %145, %147, %cst_57 {dimension_numbers = #tpu.dot_dimension_numbers<[1], [0], [0], [1], [0, 0, 1, 1], [], []>} : vector<16x128xf32>, vector<128x128xf32>, vector<16x128xf32> -> vector<16x128xf32>
    %159 = vector.broadcast %152 : vector<1x128xf32> to vector<16x128xf32>
    %160 = arith.addf %158, %159 : vector<16x128xf32>
    %cst_58 = arith.constant dense<0.000000e+00> : vector<16xf32>
    %161 = vector.multi_reduction <add>, %160, %cst_58 [1] : vector<16x128xf32> to vector<16xf32>
    %162 = vector.shape_cast %161 : vector<16xf32> to vector<16x1xf32>
    %cst_59 = arith.constant 3.125000e-02 : f32
    %163 = vector.broadcast %cst_59 : f32 to vector<16x1xf32>
    %164 = arith.mulf %162, %163 : vector<16x1xf32>
    %165 = vector.broadcast %164 : vector<16x1xf32> to vector<16x128xf32>
    %166 = arith.subf %160, %165 : vector<16x128xf32>
    %167 = arith.mulf %166, %166 : vector<16x128xf32>
    %cst_60 = arith.constant 0.000000e+00 : f32
    %168 = vector.shape_cast %3 : vector<1x128xi1> to vector<1x128xi1>
    %169 = vector.broadcast %168 : vector<1x128xi1> to vector<16x128xi1>
    %170 = vector.broadcast %cst_60 : f32 to vector<16x128xf32>
    %171 = arith.select %169, %167, %170 : vector<16x128xi1>, vector<16x128xf32>
    %cst_61 = arith.constant dense<0.000000e+00> : vector<16xf32>
    %172 = vector.multi_reduction <add>, %171, %cst_61 [1] : vector<16x128xf32> to vector<16xf32>
    %173 = vector.shape_cast %172 : vector<16xf32> to vector<16x1xf32>
    %cst_62 = arith.constant 3.125000e-02 : f32
    %174 = vector.broadcast %cst_62 : f32 to vector<16x1xf32>
    %175 = arith.mulf %173, %174 : vector<16x1xf32>
    %cst_63 = arith.constant 9.99999974E-6 : f32
    %176 = vector.broadcast %cst_63 : f32 to vector<16x1xf32>
    %177 = arith.addf %175, %176 : vector<16x1xf32>
    %178 = math.rsqrt %177 : vector<16x1xf32>
    %179 = vector.broadcast %178 : vector<16x1xf32> to vector<16x128xf32>
    %180 = arith.mulf %166, %179 : vector<16x128xf32>
    %181 = vector.broadcast %153 : vector<1x128xf32> to vector<16x128xf32>
    %182 = arith.mulf %180, %181 : vector<16x128xf32>
    %183 = vector.broadcast %154 : vector<1x128xf32> to vector<16x128xf32>
    %184 = arith.addf %182, %183 : vector<16x128xf32>
    %cst_64 = arith.constant 0.000000e+00 : f32
    %185 = vector.broadcast %cst_64 : f32 to vector<16x128xf32>
    %186 = arith.maximumf %184, %185 : vector<16x128xf32>
    %cst_65 = arith.constant dense<0.000000e+00> : vector<16x128xf32>
    %187 = tpu.matmul %186, %149, %cst_65 {dimension_numbers = #tpu.dot_dimension_numbers<[1], [0], [0], [1], [0, 0, 1, 1], [], []>} : vector<16x128xf32>, vector<128x128xf32>, vector<16x128xf32> -> vector<16x128xf32>
    %188 = vector.broadcast %155 : vector<1x128xf32> to vector<16x128xf32>
    %189 = arith.addf %187, %188 : vector<16x128xf32>
    %cst_66 = arith.constant dense<0.000000e+00> : vector<16xf32>
    %190 = vector.multi_reduction <add>, %189, %cst_66 [1] : vector<16x128xf32> to vector<16xf32>
    %191 = vector.shape_cast %190 : vector<16xf32> to vector<16x1xf32>
    %cst_67 = arith.constant 3.125000e-02 : f32
    %192 = vector.broadcast %cst_67 : f32 to vector<16x1xf32>
    %193 = arith.mulf %191, %192 : vector<16x1xf32>
    %194 = vector.broadcast %193 : vector<16x1xf32> to vector<16x128xf32>
    %195 = arith.subf %189, %194 : vector<16x128xf32>
    %196 = arith.mulf %195, %195 : vector<16x128xf32>
    %cst_68 = arith.constant 0.000000e+00 : f32
    %197 = vector.shape_cast %3 : vector<1x128xi1> to vector<1x128xi1>
    %198 = vector.broadcast %197 : vector<1x128xi1> to vector<16x128xi1>
    %199 = vector.broadcast %cst_68 : f32 to vector<16x128xf32>
    %200 = arith.select %198, %196, %199 : vector<16x128xi1>, vector<16x128xf32>
    %cst_69 = arith.constant dense<0.000000e+00> : vector<16xf32>
    %201 = vector.multi_reduction <add>, %200, %cst_69 [1] : vector<16x128xf32> to vector<16xf32>
    %202 = vector.shape_cast %201 : vector<16xf32> to vector<16x1xf32>
    %cst_70 = arith.constant 3.125000e-02 : f32
    %203 = vector.broadcast %cst_70 : f32 to vector<16x1xf32>
    %204 = arith.mulf %202, %203 : vector<16x1xf32>
    %cst_71 = arith.constant 9.99999974E-6 : f32
    %205 = vector.broadcast %cst_71 : f32 to vector<16x1xf32>
    %206 = arith.addf %204, %205 : vector<16x1xf32>
    %207 = math.rsqrt %206 : vector<16x1xf32>
    %208 = vector.broadcast %207 : vector<16x1xf32> to vector<16x128xf32>
    %209 = arith.mulf %195, %208 : vector<16x128xf32>
    %210 = vector.broadcast %156 : vector<1x128xf32> to vector<16x128xf32>
    %211 = arith.mulf %209, %210 : vector<16x128xf32>
    %212 = vector.broadcast %157 : vector<1x128xf32> to vector<16x128xf32>
    %213 = arith.addf %211, %212 : vector<16x128xf32>
    %cst_72 = arith.constant 0.000000e+00 : f32
    %214 = vector.broadcast %cst_72 : f32 to vector<16x128xf32>
    %215 = arith.maximumf %213, %214 : vector<16x128xf32>
    %216 = arith.addf %145, %215 : vector<16x128xf32>
    %c3 = arith.constant 3 : index
    %c0_73 = arith.constant 0 : index
    %c0_74 = arith.constant 0 : index
    %217 = vector.load %arg1[%c3, %c0_73, %c0_74] : memref<8x128x128xf32, #tpu.memory_space<vmem>>, vector<1x128x128xf32>
    %218 = vector.shape_cast %217 : vector<1x128x128xf32> to vector<128x128xf32>
    %c3_75 = arith.constant 3 : index
    %c0_76 = arith.constant 0 : index
    %c0_77 = arith.constant 0 : index
    %219 = vector.load %arg2[%c3_75, %c0_76, %c0_77] : memref<8x128x128xf32, #tpu.memory_space<vmem>>, vector<1x128x128xf32>
    %220 = vector.shape_cast %219 : vector<1x128x128xf32> to vector<128x128xf32>
    %c3_78 = arith.constant 3 : index
    %c0_79 = arith.constant 0 : index
    %c0_80 = arith.constant 0 : index
    %221 = vector.load %arg3[%c3_78, %c0_79, %c0_80] : memref<8x8x128xf32, #tpu.memory_space<vmem>>, vector<1x8x128xf32>
    %222 = vector.shape_cast %221 : vector<1x8x128xf32> to vector<8x128xf32>
    %223 = vector.extract_strided_slice %222 {offsets = [0, 0], sizes = [1, 128], strides = [1, 1]} : vector<8x128xf32> to vector<1x128xf32>
    %224 = vector.extract_strided_slice %222 {offsets = [1, 0], sizes = [1, 128], strides = [1, 1]} : vector<8x128xf32> to vector<1x128xf32>
    %225 = vector.extract_strided_slice %222 {offsets = [2, 0], sizes = [1, 128], strides = [1, 1]} : vector<8x128xf32> to vector<1x128xf32>
    %226 = vector.extract_strided_slice %222 {offsets = [3, 0], sizes = [1, 128], strides = [1, 1]} : vector<8x128xf32> to vector<1x128xf32>
    %227 = vector.extract_strided_slice %222 {offsets = [4, 0], sizes = [1, 128], strides = [1, 1]} : vector<8x128xf32> to vector<1x128xf32>
    %228 = vector.extract_strided_slice %222 {offsets = [5, 0], sizes = [1, 128], strides = [1, 1]} : vector<8x128xf32> to vector<1x128xf32>
    %cst_81 = arith.constant dense<0.000000e+00> : vector<16x128xf32>
    %229 = tpu.matmul %216, %218, %cst_81 {dimension_numbers = #tpu.dot_dimension_numbers<[1], [0], [0], [1], [0, 0, 1, 1], [], []>} : vector<16x128xf32>, vector<128x128xf32>, vector<16x128xf32> -> vector<16x128xf32>
    %230 = vector.broadcast %223 : vector<1x128xf32> to vector<16x128xf32>
    %231 = arith.addf %229, %230 : vector<16x128xf32>
    %cst_82 = arith.constant dense<0.000000e+00> : vector<16xf32>
    %232 = vector.multi_reduction <add>, %231, %cst_82 [1] : vector<16x128xf32> to vector<16xf32>
    %233 = vector.shape_cast %232 : vector<16xf32> to vector<16x1xf32>
    %cst_83 = arith.constant 3.125000e-02 : f32
    %234 = vector.broadcast %cst_83 : f32 to vector<16x1xf32>
    %235 = arith.mulf %233, %234 : vector<16x1xf32>
    %236 = vector.broadcast %235 : vector<16x1xf32> to vector<16x128xf32>
    %237 = arith.subf %231, %236 : vector<16x128xf32>
    %238 = arith.mulf %237, %237 : vector<16x128xf32>
    %cst_84 = arith.constant 0.000000e+00 : f32
    %239 = vector.shape_cast %3 : vector<1x128xi1> to vector<1x128xi1>
    %240 = vector.broadcast %239 : vector<1x128xi1> to vector<16x128xi1>
    %241 = vector.broadcast %cst_84 : f32 to vector<16x128xf32>
    %242 = arith.select %240, %238, %241 : vector<16x128xi1>, vector<16x128xf32>
    %cst_85 = arith.constant dense<0.000000e+00> : vector<16xf32>
    %243 = vector.multi_reduction <add>, %242, %cst_85 [1] : vector<16x128xf32> to vector<16xf32>
    %244 = vector.shape_cast %243 : vector<16xf32> to vector<16x1xf32>
    %cst_86 = arith.constant 3.125000e-02 : f32
    %245 = vector.broadcast %cst_86 : f32 to vector<16x1xf32>
    %246 = arith.mulf %244, %245 : vector<16x1xf32>
    %cst_87 = arith.constant 9.99999974E-6 : f32
    %247 = vector.broadcast %cst_87 : f32 to vector<16x1xf32>
    %248 = arith.addf %246, %247 : vector<16x1xf32>
    %249 = math.rsqrt %248 : vector<16x1xf32>
    %250 = vector.broadcast %249 : vector<16x1xf32> to vector<16x128xf32>
    %251 = arith.mulf %237, %250 : vector<16x128xf32>
    %252 = vector.broadcast %224 : vector<1x128xf32> to vector<16x128xf32>
    %253 = arith.mulf %251, %252 : vector<16x128xf32>
    %254 = vector.broadcast %225 : vector<1x128xf32> to vector<16x128xf32>
    %255 = arith.addf %253, %254 : vector<16x128xf32>
    %cst_88 = arith.constant 0.000000e+00 : f32
    %256 = vector.broadcast %cst_88 : f32 to vector<16x128xf32>
    %257 = arith.maximumf %255, %256 : vector<16x128xf32>
    %cst_89 = arith.constant dense<0.000000e+00> : vector<16x128xf32>
    %258 = tpu.matmul %257, %220, %cst_89 {dimension_numbers = #tpu.dot_dimension_numbers<[1], [0], [0], [1], [0, 0, 1, 1], [], []>} : vector<16x128xf32>, vector<128x128xf32>, vector<16x128xf32> -> vector<16x128xf32>
    %259 = vector.broadcast %226 : vector<1x128xf32> to vector<16x128xf32>
    %260 = arith.addf %258, %259 : vector<16x128xf32>
    %cst_90 = arith.constant dense<0.000000e+00> : vector<16xf32>
    %261 = vector.multi_reduction <add>, %260, %cst_90 [1] : vector<16x128xf32> to vector<16xf32>
    %262 = vector.shape_cast %261 : vector<16xf32> to vector<16x1xf32>
    %cst_91 = arith.constant 3.125000e-02 : f32
    %263 = vector.broadcast %cst_91 : f32 to vector<16x1xf32>
    %264 = arith.mulf %262, %263 : vector<16x1xf32>
    %265 = vector.broadcast %264 : vector<16x1xf32> to vector<16x128xf32>
    %266 = arith.subf %260, %265 : vector<16x128xf32>
    %267 = arith.mulf %266, %266 : vector<16x128xf32>
    %cst_92 = arith.constant 0.000000e+00 : f32
    %268 = vector.shape_cast %3 : vector<1x128xi1> to vector<1x128xi1>
    %269 = vector.broadcast %268 : vector<1x128xi1> to vector<16x128xi1>
    %270 = vector.broadcast %cst_92 : f32 to vector<16x128xf32>
    %271 = arith.select %269, %267, %270 : vector<16x128xi1>, vector<16x128xf32>
    %cst_93 = arith.constant dense<0.000000e+00> : vector<16xf32>
    %272 = vector.multi_reduction <add>, %271, %cst_93 [1] : vector<16x128xf32> to vector<16xf32>
    %273 = vector.shape_cast %272 : vector<16xf32> to vector<16x1xf32>
    %cst_94 = arith.constant 3.125000e-02 : f32
    %274 = vector.broadcast %cst_94 : f32 to vector<16x1xf32>
    %275 = arith.mulf %273, %274 : vector<16x1xf32>
    %cst_95 = arith.constant 9.99999974E-6 : f32
    %276 = vector.broadcast %cst_95 : f32 to vector<16x1xf32>
    %277 = arith.addf %275, %276 : vector<16x1xf32>
    %278 = math.rsqrt %277 : vector<16x1xf32>
    %279 = vector.broadcast %278 : vector<16x1xf32> to vector<16x128xf32>
    %280 = arith.mulf %266, %279 : vector<16x128xf32>
    %281 = vector.broadcast %227 : vector<1x128xf32> to vector<16x128xf32>
    %282 = arith.mulf %280, %281 : vector<16x128xf32>
    %283 = vector.broadcast %228 : vector<1x128xf32> to vector<16x128xf32>
    %284 = arith.addf %282, %283 : vector<16x128xf32>
    %cst_96 = arith.constant 0.000000e+00 : f32
    %285 = vector.broadcast %cst_96 : f32 to vector<16x128xf32>
    %286 = arith.maximumf %284, %285 : vector<16x128xf32>
    %287 = arith.addf %216, %286 : vector<16x128xf32>
    %c4 = arith.constant 4 : index
    %c0_97 = arith.constant 0 : index
    %c0_98 = arith.constant 0 : index
    %288 = vector.load %arg1[%c4, %c0_97, %c0_98] : memref<8x128x128xf32, #tpu.memory_space<vmem>>, vector<1x128x128xf32>
    %289 = vector.shape_cast %288 : vector<1x128x128xf32> to vector<128x128xf32>
    %c4_99 = arith.constant 4 : index
    %c0_100 = arith.constant 0 : index
    %c0_101 = arith.constant 0 : index
    %290 = vector.load %arg2[%c4_99, %c0_100, %c0_101] : memref<8x128x128xf32, #tpu.memory_space<vmem>>, vector<1x128x128xf32>
    %291 = vector.shape_cast %290 : vector<1x128x128xf32> to vector<128x128xf32>
    %c4_102 = arith.constant 4 : index
    %c0_103 = arith.constant 0 : index
    %c0_104 = arith.constant 0 : index
    %292 = vector.load %arg3[%c4_102, %c0_103, %c0_104] : memref<8x8x128xf32, #tpu.memory_space<vmem>>, vector<1x8x128xf32>
    %293 = vector.shape_cast %292 : vector<1x8x128xf32> to vector<8x128xf32>
    %294 = vector.extract_strided_slice %293 {offsets = [0, 0], sizes = [1, 128], strides = [1, 1]} : vector<8x128xf32> to vector<1x128xf32>
    %295 = vector.extract_strided_slice %293 {offsets = [1, 0], sizes = [1, 128], strides = [1, 1]} : vector<8x128xf32> to vector<1x128xf32>
    %296 = vector.extract_strided_slice %293 {offsets = [2, 0], sizes = [1, 128], strides = [1, 1]} : vector<8x128xf32> to vector<1x128xf32>
    %297 = vector.extract_strided_slice %293 {offsets = [3, 0], sizes = [1, 128], strides = [1, 1]} : vector<8x128xf32> to vector<1x128xf32>
    %298 = vector.extract_strided_slice %293 {offsets = [4, 0], sizes = [1, 128], strides = [1, 1]} : vector<8x128xf32> to vector<1x128xf32>
    %299 = vector.extract_strided_slice %293 {offsets = [5, 0], sizes = [1, 128], strides = [1, 1]} : vector<8x128xf32> to vector<1x128xf32>
    %cst_105 = arith.constant dense<0.000000e+00> : vector<16x128xf32>
    %300 = tpu.matmul %287, %289, %cst_105 {dimension_numbers = #tpu.dot_dimension_numbers<[1], [0], [0], [1], [0, 0, 1, 1], [], []>} : vector<16x128xf32>, vector<128x128xf32>, vector<16x128xf32> -> vector<16x128xf32>
    %301 = vector.broadcast %294 : vector<1x128xf32> to vector<16x128xf32>
    %302 = arith.addf %300, %301 : vector<16x128xf32>
    %cst_106 = arith.constant dense<0.000000e+00> : vector<16xf32>
    %303 = vector.multi_reduction <add>, %302, %cst_106 [1] : vector<16x128xf32> to vector<16xf32>
    %304 = vector.shape_cast %303 : vector<16xf32> to vector<16x1xf32>
    %cst_107 = arith.constant 3.125000e-02 : f32
    %305 = vector.broadcast %cst_107 : f32 to vector<16x1xf32>
    %306 = arith.mulf %304, %305 : vector<16x1xf32>
    %307 = vector.broadcast %306 : vector<16x1xf32> to vector<16x128xf32>
    %308 = arith.subf %302, %307 : vector<16x128xf32>
    %309 = arith.mulf %308, %308 : vector<16x128xf32>
    %cst_108 = arith.constant 0.000000e+00 : f32
    %310 = vector.shape_cast %3 : vector<1x128xi1> to vector<1x128xi1>
    %311 = vector.broadcast %310 : vector<1x128xi1> to vector<16x128xi1>
    %312 = vector.broadcast %cst_108 : f32 to vector<16x128xf32>
    %313 = arith.select %311, %309, %312 : vector<16x128xi1>, vector<16x128xf32>
    %cst_109 = arith.constant dense<0.000000e+00> : vector<16xf32>
    %314 = vector.multi_reduction <add>, %313, %cst_109 [1] : vector<16x128xf32> to vector<16xf32>
    %315 = vector.shape_cast %314 : vector<16xf32> to vector<16x1xf32>
    %cst_110 = arith.constant 3.125000e-02 : f32
    %316 = vector.broadcast %cst_110 : f32 to vector<16x1xf32>
    %317 = arith.mulf %315, %316 : vector<16x1xf32>
    %cst_111 = arith.constant 9.99999974E-6 : f32
    %318 = vector.broadcast %cst_111 : f32 to vector<16x1xf32>
    %319 = arith.addf %317, %318 : vector<16x1xf32>
    %320 = math.rsqrt %319 : vector<16x1xf32>
    %321 = vector.broadcast %320 : vector<16x1xf32> to vector<16x128xf32>
    %322 = arith.mulf %308, %321 : vector<16x128xf32>
    %323 = vector.broadcast %295 : vector<1x128xf32> to vector<16x128xf32>
    %324 = arith.mulf %322, %323 : vector<16x128xf32>
    %325 = vector.broadcast %296 : vector<1x128xf32> to vector<16x128xf32>
    %326 = arith.addf %324, %325 : vector<16x128xf32>
    %cst_112 = arith.constant 0.000000e+00 : f32
    %327 = vector.broadcast %cst_112 : f32 to vector<16x128xf32>
    %328 = arith.maximumf %326, %327 : vector<16x128xf32>
    %cst_113 = arith.constant dense<0.000000e+00> : vector<16x128xf32>
    %329 = tpu.matmul %328, %291, %cst_113 {dimension_numbers = #tpu.dot_dimension_numbers<[1], [0], [0], [1], [0, 0, 1, 1], [], []>} : vector<16x128xf32>, vector<128x128xf32>, vector<16x128xf32> -> vector<16x128xf32>
    %330 = vector.broadcast %297 : vector<1x128xf32> to vector<16x128xf32>
    %331 = arith.addf %329, %330 : vector<16x128xf32>
    %cst_114 = arith.constant dense<0.000000e+00> : vector<16xf32>
    %332 = vector.multi_reduction <add>, %331, %cst_114 [1] : vector<16x128xf32> to vector<16xf32>
    %333 = vector.shape_cast %332 : vector<16xf32> to vector<16x1xf32>
    %cst_115 = arith.constant 3.125000e-02 : f32
    %334 = vector.broadcast %cst_115 : f32 to vector<16x1xf32>
    %335 = arith.mulf %333, %334 : vector<16x1xf32>
    %336 = vector.broadcast %335 : vector<16x1xf32> to vector<16x128xf32>
    %337 = arith.subf %331, %336 : vector<16x128xf32>
    %338 = arith.mulf %337, %337 : vector<16x128xf32>
    %cst_116 = arith.constant 0.000000e+00 : f32
    %339 = vector.shape_cast %3 : vector<1x128xi1> to vector<1x128xi1>
    %340 = vector.broadcast %339 : vector<1x128xi1> to vector<16x128xi1>
    %341 = vector.broadcast %cst_116 : f32 to vector<16x128xf32>
    %342 = arith.select %340, %338, %341 : vector<16x128xi1>, vector<16x128xf32>
    %cst_117 = arith.constant dense<0.000000e+00> : vector<16xf32>
    %343 = vector.multi_reduction <add>, %342, %cst_117 [1] : vector<16x128xf32> to vector<16xf32>
    %344 = vector.shape_cast %343 : vector<16xf32> to vector<16x1xf32>
    %cst_118 = arith.constant 3.125000e-02 : f32
    %345 = vector.broadcast %cst_118 : f32 to vector<16x1xf32>
    %346 = arith.mulf %344, %345 : vector<16x1xf32>
    %cst_119 = arith.constant 9.99999974E-6 : f32
    %347 = vector.broadcast %cst_119 : f32 to vector<16x1xf32>
    %348 = arith.addf %346, %347 : vector<16x1xf32>
    %349 = math.rsqrt %348 : vector<16x1xf32>
    %350 = vector.broadcast %349 : vector<16x1xf32> to vector<16x128xf32>
    %351 = arith.mulf %337, %350 : vector<16x128xf32>
    %352 = vector.broadcast %298 : vector<1x128xf32> to vector<16x128xf32>
    %353 = arith.mulf %351, %352 : vector<16x128xf32>
    %354 = vector.broadcast %299 : vector<1x128xf32> to vector<16x128xf32>
    %355 = arith.addf %353, %354 : vector<16x128xf32>
    %cst_120 = arith.constant 0.000000e+00 : f32
    %356 = vector.broadcast %cst_120 : f32 to vector<16x128xf32>
    %357 = arith.maximumf %355, %356 : vector<16x128xf32>
    %358 = arith.addf %287, %357 : vector<16x128xf32>
    %c5 = arith.constant 5 : index
    %c0_121 = arith.constant 0 : index
    %c0_122 = arith.constant 0 : index
    %359 = vector.load %arg1[%c5, %c0_121, %c0_122] : memref<8x128x128xf32, #tpu.memory_space<vmem>>, vector<1x128x128xf32>
    %360 = vector.shape_cast %359 : vector<1x128x128xf32> to vector<128x128xf32>
    %c5_123 = arith.constant 5 : index
    %c0_124 = arith.constant 0 : index
    %c0_125 = arith.constant 0 : index
    %361 = vector.load %arg2[%c5_123, %c0_124, %c0_125] : memref<8x128x128xf32, #tpu.memory_space<vmem>>, vector<1x128x128xf32>
    %362 = vector.shape_cast %361 : vector<1x128x128xf32> to vector<128x128xf32>
    %c5_126 = arith.constant 5 : index
    %c0_127 = arith.constant 0 : index
    %c0_128 = arith.constant 0 : index
    %363 = vector.load %arg3[%c5_126, %c0_127, %c0_128] : memref<8x8x128xf32, #tpu.memory_space<vmem>>, vector<1x8x128xf32>
    %364 = vector.shape_cast %363 : vector<1x8x128xf32> to vector<8x128xf32>
    %365 = vector.extract_strided_slice %364 {offsets = [0, 0], sizes = [1, 128], strides = [1, 1]} : vector<8x128xf32> to vector<1x128xf32>
    %366 = vector.extract_strided_slice %364 {offsets = [1, 0], sizes = [1, 128], strides = [1, 1]} : vector<8x128xf32> to vector<1x128xf32>
    %367 = vector.extract_strided_slice %364 {offsets = [2, 0], sizes = [1, 128], strides = [1, 1]} : vector<8x128xf32> to vector<1x128xf32>
    %368 = vector.extract_strided_slice %364 {offsets = [3, 0], sizes = [1, 128], strides = [1, 1]} : vector<8x128xf32> to vector<1x128xf32>
    %369 = vector.extract_strided_slice %364 {offsets = [4, 0], sizes = [1, 128], strides = [1, 1]} : vector<8x128xf32> to vector<1x128xf32>
    %370 = vector.extract_strided_slice %364 {offsets = [5, 0], sizes = [1, 128], strides = [1, 1]} : vector<8x128xf32> to vector<1x128xf32>
    %cst_129 = arith.constant dense<0.000000e+00> : vector<16x128xf32>
    %371 = tpu.matmul %358, %360, %cst_129 {dimension_numbers = #tpu.dot_dimension_numbers<[1], [0], [0], [1], [0, 0, 1, 1], [], []>} : vector<16x128xf32>, vector<128x128xf32>, vector<16x128xf32> -> vector<16x128xf32>
    %372 = vector.broadcast %365 : vector<1x128xf32> to vector<16x128xf32>
    %373 = arith.addf %371, %372 : vector<16x128xf32>
    %cst_130 = arith.constant dense<0.000000e+00> : vector<16xf32>
    %374 = vector.multi_reduction <add>, %373, %cst_130 [1] : vector<16x128xf32> to vector<16xf32>
    %375 = vector.shape_cast %374 : vector<16xf32> to vector<16x1xf32>
    %cst_131 = arith.constant 3.125000e-02 : f32
    %376 = vector.broadcast %cst_131 : f32 to vector<16x1xf32>
    %377 = arith.mulf %375, %376 : vector<16x1xf32>
    %378 = vector.broadcast %377 : vector<16x1xf32> to vector<16x128xf32>
    %379 = arith.subf %373, %378 : vector<16x128xf32>
    %380 = arith.mulf %379, %379 : vector<16x128xf32>
    %cst_132 = arith.constant 0.000000e+00 : f32
    %381 = vector.shape_cast %3 : vector<1x128xi1> to vector<1x128xi1>
    %382 = vector.broadcast %381 : vector<1x128xi1> to vector<16x128xi1>
    %383 = vector.broadcast %cst_132 : f32 to vector<16x128xf32>
    %384 = arith.select %382, %380, %383 : vector<16x128xi1>, vector<16x128xf32>
    %cst_133 = arith.constant dense<0.000000e+00> : vector<16xf32>
    %385 = vector.multi_reduction <add>, %384, %cst_133 [1] : vector<16x128xf32> to vector<16xf32>
    %386 = vector.shape_cast %385 : vector<16xf32> to vector<16x1xf32>
    %cst_134 = arith.constant 3.125000e-02 : f32
    %387 = vector.broadcast %cst_134 : f32 to vector<16x1xf32>
    %388 = arith.mulf %386, %387 : vector<16x1xf32>
    %cst_135 = arith.constant 9.99999974E-6 : f32
    %389 = vector.broadcast %cst_135 : f32 to vector<16x1xf32>
    %390 = arith.addf %388, %389 : vector<16x1xf32>
    %391 = math.rsqrt %390 : vector<16x1xf32>
    %392 = vector.broadcast %391 : vector<16x1xf32> to vector<16x128xf32>
    %393 = arith.mulf %379, %392 : vector<16x128xf32>
    %394 = vector.broadcast %366 : vector<1x128xf32> to vector<16x128xf32>
    %395 = arith.mulf %393, %394 : vector<16x128xf32>
    %396 = vector.broadcast %367 : vector<1x128xf32> to vector<16x128xf32>
    %397 = arith.addf %395, %396 : vector<16x128xf32>
    %cst_136 = arith.constant 0.000000e+00 : f32
    %398 = vector.broadcast %cst_136 : f32 to vector<16x128xf32>
    %399 = arith.maximumf %397, %398 : vector<16x128xf32>
    %cst_137 = arith.constant dense<0.000000e+00> : vector<16x128xf32>
    %400 = tpu.matmul %399, %362, %cst_137 {dimension_numbers = #tpu.dot_dimension_numbers<[1], [0], [0], [1], [0, 0, 1, 1], [], []>} : vector<16x128xf32>, vector<128x128xf32>, vector<16x128xf32> -> vector<16x128xf32>
    %401 = vector.broadcast %368 : vector<1x128xf32> to vector<16x128xf32>
    %402 = arith.addf %400, %401 : vector<16x128xf32>
    %cst_138 = arith.constant dense<0.000000e+00> : vector<16xf32>
    %403 = vector.multi_reduction <add>, %402, %cst_138 [1] : vector<16x128xf32> to vector<16xf32>
    %404 = vector.shape_cast %403 : vector<16xf32> to vector<16x1xf32>
    %cst_139 = arith.constant 3.125000e-02 : f32
    %405 = vector.broadcast %cst_139 : f32 to vector<16x1xf32>
    %406 = arith.mulf %404, %405 : vector<16x1xf32>
    %407 = vector.broadcast %406 : vector<16x1xf32> to vector<16x128xf32>
    %408 = arith.subf %402, %407 : vector<16x128xf32>
    %409 = arith.mulf %408, %408 : vector<16x128xf32>
    %cst_140 = arith.constant 0.000000e+00 : f32
    %410 = vector.shape_cast %3 : vector<1x128xi1> to vector<1x128xi1>
    %411 = vector.broadcast %410 : vector<1x128xi1> to vector<16x128xi1>
    %412 = vector.broadcast %cst_140 : f32 to vector<16x128xf32>
    %413 = arith.select %411, %409, %412 : vector<16x128xi1>, vector<16x128xf32>
    %cst_141 = arith.constant dense<0.000000e+00> : vector<16xf32>
    %414 = vector.multi_reduction <add>, %413, %cst_141 [1] : vector<16x128xf32> to vector<16xf32>
    %415 = vector.shape_cast %414 : vector<16xf32> to vector<16x1xf32>
    %cst_142 = arith.constant 3.125000e-02 : f32
    %416 = vector.broadcast %cst_142 : f32 to vector<16x1xf32>
    %417 = arith.mulf %415, %416 : vector<16x1xf32>
    %cst_143 = arith.constant 9.99999974E-6 : f32
    %418 = vector.broadcast %cst_143 : f32 to vector<16x1xf32>
    %419 = arith.addf %417, %418 : vector<16x1xf32>
    %420 = math.rsqrt %419 : vector<16x1xf32>
    %421 = vector.broadcast %420 : vector<16x1xf32> to vector<16x128xf32>
    %422 = arith.mulf %408, %421 : vector<16x128xf32>
    %423 = vector.broadcast %369 : vector<1x128xf32> to vector<16x128xf32>
    %424 = arith.mulf %422, %423 : vector<16x128xf32>
    %425 = vector.broadcast %370 : vector<1x128xf32> to vector<16x128xf32>
    %426 = arith.addf %424, %425 : vector<16x128xf32>
    %cst_144 = arith.constant 0.000000e+00 : f32
    %427 = vector.broadcast %cst_144 : f32 to vector<16x128xf32>
    %428 = arith.maximumf %426, %427 : vector<16x128xf32>
    %429 = arith.addf %358, %428 : vector<16x128xf32>
    %c6 = arith.constant 6 : index
    %c0_145 = arith.constant 0 : index
    %c0_146 = arith.constant 0 : index
    %430 = vector.load %arg1[%c6, %c0_145, %c0_146] : memref<8x128x128xf32, #tpu.memory_space<vmem>>, vector<1x128x128xf32>
    %431 = vector.shape_cast %430 : vector<1x128x128xf32> to vector<128x128xf32>
    %c6_147 = arith.constant 6 : index
    %c0_148 = arith.constant 0 : index
    %c0_149 = arith.constant 0 : index
    %432 = vector.load %arg2[%c6_147, %c0_148, %c0_149] : memref<8x128x128xf32, #tpu.memory_space<vmem>>, vector<1x128x128xf32>
    %433 = vector.shape_cast %432 : vector<1x128x128xf32> to vector<128x128xf32>
    %c6_150 = arith.constant 6 : index
    %c0_151 = arith.constant 0 : index
    %c0_152 = arith.constant 0 : index
    %434 = vector.load %arg3[%c6_150, %c0_151, %c0_152] : memref<8x8x128xf32, #tpu.memory_space<vmem>>, vector<1x8x128xf32>
    %435 = vector.shape_cast %434 : vector<1x8x128xf32> to vector<8x128xf32>
    %436 = vector.extract_strided_slice %435 {offsets = [0, 0], sizes = [1, 128], strides = [1, 1]} : vector<8x128xf32> to vector<1x128xf32>
    %437 = vector.extract_strided_slice %435 {offsets = [1, 0], sizes = [1, 128], strides = [1, 1]} : vector<8x128xf32> to vector<1x128xf32>
    %438 = vector.extract_strided_slice %435 {offsets = [2, 0], sizes = [1, 128], strides = [1, 1]} : vector<8x128xf32> to vector<1x128xf32>
    %439 = vector.extract_strided_slice %435 {offsets = [3, 0], sizes = [1, 128], strides = [1, 1]} : vector<8x128xf32> to vector<1x128xf32>
    %440 = vector.extract_strided_slice %435 {offsets = [4, 0], sizes = [1, 128], strides = [1, 1]} : vector<8x128xf32> to vector<1x128xf32>
    %441 = vector.extract_strided_slice %435 {offsets = [5, 0], sizes = [1, 128], strides = [1, 1]} : vector<8x128xf32> to vector<1x128xf32>
    %cst_153 = arith.constant dense<0.000000e+00> : vector<16x128xf32>
    %442 = tpu.matmul %429, %431, %cst_153 {dimension_numbers = #tpu.dot_dimension_numbers<[1], [0], [0], [1], [0, 0, 1, 1], [], []>} : vector<16x128xf32>, vector<128x128xf32>, vector<16x128xf32> -> vector<16x128xf32>
    %443 = vector.broadcast %436 : vector<1x128xf32> to vector<16x128xf32>
    %444 = arith.addf %442, %443 : vector<16x128xf32>
    %cst_154 = arith.constant dense<0.000000e+00> : vector<16xf32>
    %445 = vector.multi_reduction <add>, %444, %cst_154 [1] : vector<16x128xf32> to vector<16xf32>
    %446 = vector.shape_cast %445 : vector<16xf32> to vector<16x1xf32>
    %cst_155 = arith.constant 3.125000e-02 : f32
    %447 = vector.broadcast %cst_155 : f32 to vector<16x1xf32>
    %448 = arith.mulf %446, %447 : vector<16x1xf32>
    %449 = vector.broadcast %448 : vector<16x1xf32> to vector<16x128xf32>
    %450 = arith.subf %444, %449 : vector<16x128xf32>
    %451 = arith.mulf %450, %450 : vector<16x128xf32>
    %cst_156 = arith.constant 0.000000e+00 : f32
    %452 = vector.shape_cast %3 : vector<1x128xi1> to vector<1x128xi1>
    %453 = vector.broadcast %452 : vector<1x128xi1> to vector<16x128xi1>
    %454 = vector.broadcast %cst_156 : f32 to vector<16x128xf32>
    %455 = arith.select %453, %451, %454 : vector<16x128xi1>, vector<16x128xf32>
    %cst_157 = arith.constant dense<0.000000e+00> : vector<16xf32>
    %456 = vector.multi_reduction <add>, %455, %cst_157 [1] : vector<16x128xf32> to vector<16xf32>
    %457 = vector.shape_cast %456 : vector<16xf32> to vector<16x1xf32>
    %cst_158 = arith.constant 3.125000e-02 : f32
    %458 = vector.broadcast %cst_158 : f32 to vector<16x1xf32>
    %459 = arith.mulf %457, %458 : vector<16x1xf32>
    %cst_159 = arith.constant 9.99999974E-6 : f32
    %460 = vector.broadcast %cst_159 : f32 to vector<16x1xf32>
    %461 = arith.addf %459, %460 : vector<16x1xf32>
    %462 = math.rsqrt %461 : vector<16x1xf32>
    %463 = vector.broadcast %462 : vector<16x1xf32> to vector<16x128xf32>
    %464 = arith.mulf %450, %463 : vector<16x128xf32>
    %465 = vector.broadcast %437 : vector<1x128xf32> to vector<16x128xf32>
    %466 = arith.mulf %464, %465 : vector<16x128xf32>
    %467 = vector.broadcast %438 : vector<1x128xf32> to vector<16x128xf32>
    %468 = arith.addf %466, %467 : vector<16x128xf32>
    %cst_160 = arith.constant 0.000000e+00 : f32
    %469 = vector.broadcast %cst_160 : f32 to vector<16x128xf32>
    %470 = arith.maximumf %468, %469 : vector<16x128xf32>
    %cst_161 = arith.constant dense<0.000000e+00> : vector<16x128xf32>
    %471 = tpu.matmul %470, %433, %cst_161 {dimension_numbers = #tpu.dot_dimension_numbers<[1], [0], [0], [1], [0, 0, 1, 1], [], []>} : vector<16x128xf32>, vector<128x128xf32>, vector<16x128xf32> -> vector<16x128xf32>
    %472 = vector.broadcast %439 : vector<1x128xf32> to vector<16x128xf32>
    %473 = arith.addf %471, %472 : vector<16x128xf32>
    %cst_162 = arith.constant dense<0.000000e+00> : vector<16xf32>
    %474 = vector.multi_reduction <add>, %473, %cst_162 [1] : vector<16x128xf32> to vector<16xf32>
    %475 = vector.shape_cast %474 : vector<16xf32> to vector<16x1xf32>
    %cst_163 = arith.constant 3.125000e-02 : f32
    %476 = vector.broadcast %cst_163 : f32 to vector<16x1xf32>
    %477 = arith.mulf %475, %476 : vector<16x1xf32>
    %478 = vector.broadcast %477 : vector<16x1xf32> to vector<16x128xf32>
    %479 = arith.subf %473, %478 : vector<16x128xf32>
    %480 = arith.mulf %479, %479 : vector<16x128xf32>
    %cst_164 = arith.constant 0.000000e+00 : f32
    %481 = vector.shape_cast %3 : vector<1x128xi1> to vector<1x128xi1>
    %482 = vector.broadcast %481 : vector<1x128xi1> to vector<16x128xi1>
    %483 = vector.broadcast %cst_164 : f32 to vector<16x128xf32>
    %484 = arith.select %482, %480, %483 : vector<16x128xi1>, vector<16x128xf32>
    %cst_165 = arith.constant dense<0.000000e+00> : vector<16xf32>
    %485 = vector.multi_reduction <add>, %484, %cst_165 [1] : vector<16x128xf32> to vector<16xf32>
    %486 = vector.shape_cast %485 : vector<16xf32> to vector<16x1xf32>
    %cst_166 = arith.constant 3.125000e-02 : f32
    %487 = vector.broadcast %cst_166 : f32 to vector<16x1xf32>
    %488 = arith.mulf %486, %487 : vector<16x1xf32>
    %cst_167 = arith.constant 9.99999974E-6 : f32
    %489 = vector.broadcast %cst_167 : f32 to vector<16x1xf32>
    %490 = arith.addf %488, %489 : vector<16x1xf32>
    %491 = math.rsqrt %490 : vector<16x1xf32>
    %492 = vector.broadcast %491 : vector<16x1xf32> to vector<16x128xf32>
    %493 = arith.mulf %479, %492 : vector<16x128xf32>
    %494 = vector.broadcast %440 : vector<1x128xf32> to vector<16x128xf32>
    %495 = arith.mulf %493, %494 : vector<16x128xf32>
    %496 = vector.broadcast %441 : vector<1x128xf32> to vector<16x128xf32>
    %497 = arith.addf %495, %496 : vector<16x128xf32>
    %cst_168 = arith.constant 0.000000e+00 : f32
    %498 = vector.broadcast %cst_168 : f32 to vector<16x128xf32>
    %499 = arith.maximumf %497, %498 : vector<16x128xf32>
    %500 = arith.addf %429, %499 : vector<16x128xf32>
    %c7 = arith.constant 7 : index
    %c0_169 = arith.constant 0 : index
    %c0_170 = arith.constant 0 : index
    %501 = vector.load %arg1[%c7, %c0_169, %c0_170] : memref<8x128x128xf32, #tpu.memory_space<vmem>>, vector<1x128x128xf32>
    %502 = vector.shape_cast %501 : vector<1x128x128xf32> to vector<128x128xf32>
    %c7_171 = arith.constant 7 : index
    %c0_172 = arith.constant 0 : index
    %c0_173 = arith.constant 0 : index
    %503 = vector.load %arg2[%c7_171, %c0_172, %c0_173] : memref<8x128x128xf32, #tpu.memory_space<vmem>>, vector<1x128x128xf32>
    %504 = vector.shape_cast %503 : vector<1x128x128xf32> to vector<128x128xf32>
    %c7_174 = arith.constant 7 : index
    %c0_175 = arith.constant 0 : index
    %c0_176 = arith.constant 0 : index
    %505 = vector.load %arg3[%c7_174, %c0_175, %c0_176] : memref<8x8x128xf32, #tpu.memory_space<vmem>>, vector<1x8x128xf32>
    %506 = vector.shape_cast %505 : vector<1x8x128xf32> to vector<8x128xf32>
    %507 = vector.extract_strided_slice %506 {offsets = [0, 0], sizes = [1, 128], strides = [1, 1]} : vector<8x128xf32> to vector<1x128xf32>
    %508 = vector.extract_strided_slice %506 {offsets = [1, 0], sizes = [1, 128], strides = [1, 1]} : vector<8x128xf32> to vector<1x128xf32>
    %509 = vector.extract_strided_slice %506 {offsets = [2, 0], sizes = [1, 128], strides = [1, 1]} : vector<8x128xf32> to vector<1x128xf32>
    %510 = vector.extract_strided_slice %506 {offsets = [3, 0], sizes = [1, 128], strides = [1, 1]} : vector<8x128xf32> to vector<1x128xf32>
    %511 = vector.extract_strided_slice %506 {offsets = [4, 0], sizes = [1, 128], strides = [1, 1]} : vector<8x128xf32> to vector<1x128xf32>
    %512 = vector.extract_strided_slice %506 {offsets = [5, 0], sizes = [1, 128], strides = [1, 1]} : vector<8x128xf32> to vector<1x128xf32>
    %cst_177 = arith.constant dense<0.000000e+00> : vector<16x128xf32>
    %513 = tpu.matmul %500, %502, %cst_177 {dimension_numbers = #tpu.dot_dimension_numbers<[1], [0], [0], [1], [0, 0, 1, 1], [], []>} : vector<16x128xf32>, vector<128x128xf32>, vector<16x128xf32> -> vector<16x128xf32>
    %514 = vector.broadcast %507 : vector<1x128xf32> to vector<16x128xf32>
    %515 = arith.addf %513, %514 : vector<16x128xf32>
    %cst_178 = arith.constant dense<0.000000e+00> : vector<16xf32>
    %516 = vector.multi_reduction <add>, %515, %cst_178 [1] : vector<16x128xf32> to vector<16xf32>
    %517 = vector.shape_cast %516 : vector<16xf32> to vector<16x1xf32>
    %cst_179 = arith.constant 3.125000e-02 : f32
    %518 = vector.broadcast %cst_179 : f32 to vector<16x1xf32>
    %519 = arith.mulf %517, %518 : vector<16x1xf32>
    %520 = vector.broadcast %519 : vector<16x1xf32> to vector<16x128xf32>
    %521 = arith.subf %515, %520 : vector<16x128xf32>
    %522 = arith.mulf %521, %521 : vector<16x128xf32>
    %cst_180 = arith.constant 0.000000e+00 : f32
    %523 = vector.shape_cast %3 : vector<1x128xi1> to vector<1x128xi1>
    %524 = vector.broadcast %523 : vector<1x128xi1> to vector<16x128xi1>
    %525 = vector.broadcast %cst_180 : f32 to vector<16x128xf32>
    %526 = arith.select %524, %522, %525 : vector<16x128xi1>, vector<16x128xf32>
    %cst_181 = arith.constant dense<0.000000e+00> : vector<16xf32>
    %527 = vector.multi_reduction <add>, %526, %cst_181 [1] : vector<16x128xf32> to vector<16xf32>
    %528 = vector.shape_cast %527 : vector<16xf32> to vector<16x1xf32>
    %cst_182 = arith.constant 3.125000e-02 : f32
    %529 = vector.broadcast %cst_182 : f32 to vector<16x1xf32>
    %530 = arith.mulf %528, %529 : vector<16x1xf32>
    %cst_183 = arith.constant 9.99999974E-6 : f32
    %531 = vector.broadcast %cst_183 : f32 to vector<16x1xf32>
    %532 = arith.addf %530, %531 : vector<16x1xf32>
    %533 = math.rsqrt %532 : vector<16x1xf32>
    %534 = vector.broadcast %533 : vector<16x1xf32> to vector<16x128xf32>
    %535 = arith.mulf %521, %534 : vector<16x128xf32>
    %536 = vector.broadcast %508 : vector<1x128xf32> to vector<16x128xf32>
    %537 = arith.mulf %535, %536 : vector<16x128xf32>
    %538 = vector.broadcast %509 : vector<1x128xf32> to vector<16x128xf32>
    %539 = arith.addf %537, %538 : vector<16x128xf32>
    %cst_184 = arith.constant 0.000000e+00 : f32
    %540 = vector.broadcast %cst_184 : f32 to vector<16x128xf32>
    %541 = arith.maximumf %539, %540 : vector<16x128xf32>
    %cst_185 = arith.constant dense<0.000000e+00> : vector<16x128xf32>
    %542 = tpu.matmul %541, %504, %cst_185 {dimension_numbers = #tpu.dot_dimension_numbers<[1], [0], [0], [1], [0, 0, 1, 1], [], []>} : vector<16x128xf32>, vector<128x128xf32>, vector<16x128xf32> -> vector<16x128xf32>
    %543 = vector.broadcast %510 : vector<1x128xf32> to vector<16x128xf32>
    %544 = arith.addf %542, %543 : vector<16x128xf32>
    %cst_186 = arith.constant dense<0.000000e+00> : vector<16xf32>
    %545 = vector.multi_reduction <add>, %544, %cst_186 [1] : vector<16x128xf32> to vector<16xf32>
    %546 = vector.shape_cast %545 : vector<16xf32> to vector<16x1xf32>
    %cst_187 = arith.constant 3.125000e-02 : f32
    %547 = vector.broadcast %cst_187 : f32 to vector<16x1xf32>
    %548 = arith.mulf %546, %547 : vector<16x1xf32>
    %549 = vector.broadcast %548 : vector<16x1xf32> to vector<16x128xf32>
    %550 = arith.subf %544, %549 : vector<16x128xf32>
    %551 = arith.mulf %550, %550 : vector<16x128xf32>
    %cst_188 = arith.constant 0.000000e+00 : f32
    %552 = vector.shape_cast %3 : vector<1x128xi1> to vector<1x128xi1>
    %553 = vector.broadcast %552 : vector<1x128xi1> to vector<16x128xi1>
    %554 = vector.broadcast %cst_188 : f32 to vector<16x128xf32>
    %555 = arith.select %553, %551, %554 : vector<16x128xi1>, vector<16x128xf32>
    %cst_189 = arith.constant dense<0.000000e+00> : vector<16xf32>
    %556 = vector.multi_reduction <add>, %555, %cst_189 [1] : vector<16x128xf32> to vector<16xf32>
    %557 = vector.shape_cast %556 : vector<16xf32> to vector<16x1xf32>
    %cst_190 = arith.constant 3.125000e-02 : f32
    %558 = vector.broadcast %cst_190 : f32 to vector<16x1xf32>
    %559 = arith.mulf %557, %558 : vector<16x1xf32>
    %cst_191 = arith.constant 9.99999974E-6 : f32
    %560 = vector.broadcast %cst_191 : f32 to vector<16x1xf32>
    %561 = arith.addf %559, %560 : vector<16x1xf32>
    %562 = math.rsqrt %561 : vector<16x1xf32>
    %563 = vector.broadcast %562 : vector<16x1xf32> to vector<16x128xf32>
    %564 = arith.mulf %550, %563 : vector<16x128xf32>
    %565 = vector.broadcast %511 : vector<1x128xf32> to vector<16x128xf32>
    %566 = arith.mulf %564, %565 : vector<16x128xf32>
    %567 = vector.broadcast %512 : vector<1x128xf32> to vector<16x128xf32>
    %568 = arith.addf %566, %567 : vector<16x128xf32>
    %cst_192 = arith.constant 0.000000e+00 : f32
    %569 = vector.broadcast %cst_192 : f32 to vector<16x128xf32>
    %570 = arith.maximumf %568, %569 : vector<16x128xf32>
    %571 = arith.addf %500, %570 : vector<16x128xf32>
    %c0_193 = arith.constant 0 : index
    %c0_194 = arith.constant 0 : index
    %572 = vector.load %arg4[%c0_193, %c0_194] : memref<128x128xf32, #tpu.memory_space<vmem>>, vector<128x128xf32>
    %cst_195 = arith.constant dense<0.000000e+00> : vector<16x128xf32>
    %573 = tpu.matmul %571, %572, %cst_195 {dimension_numbers = #tpu.dot_dimension_numbers<[1], [0], [0], [1], [0, 0, 1, 1], [], []>} : vector<16x128xf32>, vector<128x128xf32>, vector<16x128xf32> -> vector<16x128xf32>
    %c0_196 = arith.constant 0 : index
    %c0_197 = arith.constant 0 : index
    %574 = vector.load %arg5[%c0_196, %c0_197] : memref<1x128xf32, #tpu.memory_space<vmem>>, vector<1x128xf32>
    %575 = vector.broadcast %574 : vector<1x128xf32> to vector<16x128xf32>
    %576 = arith.addf %573, %575 : vector<16x128xf32>
    %c0_198 = arith.constant 0 : index
    %c0_199 = arith.constant 0 : index
    %577 = vector.load %arg6[%c0_198, %c0_199] : memref<16x128xf32, #tpu.memory_space<vmem>>, vector<16x128xf32>
    tpu.vector_store %arg6[%c0_198, %c0_199], %576 {strides = array<i32>} : memref<16x128xf32, #tpu.memory_space<vmem>>, vector<16x128xf32>,
    return
  }
}

</mosaic_0001>

<llo_original>
// kernel: nextitnet_forward.1
$region0: #{nextitnet_forward.1}
  #allocation0 [shape = 'u32[]', space=smem, size = 0x4, offset = 0x4, fixed_abs, tag = 'smem constant byte address 0x4 - core index']
  #allocation1 [shape = 'u32[144,128]{1,0:T(1,128)}', space=vmem, size = 0x12000, scoped, tag = 'internal scratch']
  %s0 = inlined_call_operand.vmem [shape: f32[16,128], index: 0, kind: input, shape index: {}]
  %s1 = inlined_call_operand.hbm [shape: f32[8,128,128], index: 1, kind: input, shape index: {}]
  %s2 = inlined_call_operand.hbm [shape: f32[8,128,128], index: 2, kind: input, shape index: {}]
  %s3 = inlined_call_operand.vmem [shape: f32[8,8,128], index: 3, kind: input, shape index: {}]
  %s4 = inlined_call_operand.vmem [shape: f32[128,128], index: 4, kind: input, shape index: {}]
  %s5 = inlined_call_operand.vmem [shape: f32[1,128], index: 5, kind: input, shape index: {}]
  %s6 = inlined_call_operand.vmem [shape: f32[16,128], index: 6, kind: output, shape index: {}]
  %s7 = sld [smem:[#allocation0]]
  $region42: #{nextitnet_forward.1} parent=0
    _
  %s9 = ssub.s32 1, %s7
  %s10 = scalar_select 0, %s9, %s7
  $region1: #{nextitnet_forward.1} parent=0
    #allocation2 [shape = 'u8[524288]{0}', space=vmem, size = 0x80000, scoped, tag = 'input window, operand 1, single buffered']
    #allocation3 [shape = 's32[1]{0}', space=sflag, size = 0x4, scoped, tag = 'scoped memory for nextitnet_forward.1']
    #allocation4 [shape = 'u8[524288]{0}', space=vmem, size = 0x80000, scoped, tag = 'input window, operand 2, single buffered']
    #allocation5 [shape = 's32[1]{0}', space=sflag, size = 0x4, scoped, tag = 'scoped memory for nextitnet_forward.1']
    %11 = vsyncpa [#allocation3], 0
    %12 = vsyncpa [#allocation5], 0
    // Predicated region
    $region2: #{nextitnet_forward.1} parent=1 // pred_check
      _
    $region3: #{nextitnet_forward.1} parent=1 // pred_check_branch
      %14 = sbr.rel (0) target = $region5
    $region4: #{nextitnet_forward.1} parent=1 // pred_region
      _
    $region5: #{nextitnet_forward.1} parent=1 // pred_fallthru
      _
    // Predicated region
    $region6: #{nextitnet_forward.1} parent=1 // pred_check
      _
    $region7: #{nextitnet_forward.1} parent=1 // pred_check_branch
      %16 = sbr.rel (0) target = $region9
    $region8: #{nextitnet_forward.1} parent=1 // pred_region
      %s18 = ssub.s32 16384, 16384
      %19 = vsyncadd [#allocation3], %s18
      %s20 = sshll.u32 [#allocation2], 4
      %s21 = int_to_ptr.vmem [resolvable:$true] %s20
      %26 = dma.hbm_to_vmem [thread:$0]  %s1, 16384, %s21, [#allocation3], 128, 128, 8
    $region9: #{nextitnet_forward.1} parent=1 // pred_fallthru
      _
    // Predicated region
    $region10: #{nextitnet_forward.1} parent=1 // pred_check
      _
    $region11: #{nextitnet_forward.1} parent=1 // pred_check_branch
      %28 = sbr.rel (0) target = $region13
    $region12: #{nextitnet_forward.1} parent=1 // pred_region
      %s30 = ssub.s32 16384, 16384
      %31 = vsyncadd [#allocation5], %s30
      %s32 = sshll.u32 [#allocation4], 4
      %s33 = int_to_ptr.vmem [resolvable:$true] %s32
      %38 = dma.hbm_to_vmem [thread:$0]  %s2, 16384, %s33, [#allocation5], 128, 128, 8
    $region13: #{nextitnet_forward.1} parent=1 // pred_fallthru
      _
    // Predicated region
    $region14: #{nextitnet_forward.1} parent=1 // pred_check
      _
    $region15: #{nextitnet_forward.1} parent=1 // pred_check_branch
      %40 = sbr.rel (0) target = $region17
    $region16: #{nextitnet_forward.1} parent=1 // pred_region
      _
    $region17: #{nextitnet_forward.1} parent=1 // pred_fallthru
      _
    // Predicated region
    $region18: #{nextitnet_forward.1} parent=1 // pred_check
      _
    $region19: #{nextitnet_forward.1} parent=1 // pred_check_branch
      %42 = sbr.rel (0) target = $region21
    $region20: #{nextitnet_forward.1} parent=1 // pred_region
      _
    $region21: #{nextitnet_forward.1} parent=1 // pred_fallthru
      _
    // Predicated region
    $region22: #{nextitnet_forward.1} parent=1 // pred_check
      _
    $region23: #{nextitnet_forward.1} parent=1 // pred_check_branch
      %44 = sbr.rel (0) target = $region25
    $region24: #{nextitnet_forward.1} parent=1 // pred_region
      _
    $region25: #{nextitnet_forward.1} parent=1 // pred_fallthru
      _
    // Predicated region
    $region26: #{nextitnet_forward.1} parent=1 // pred_check
      _
    $region27: #{nextitnet_forward.1} parent=1 // pred_check_branch
      %46 = sbr.rel (0) target = $region29
    $region28: #{nextitnet_forward.1} parent=1 // pred_region
      %47 = dma.done [#allocation3], 16384
    $region29: #{nextitnet_forward.1} parent=1 // pred_fallthru
      _
    // Predicated region
    $region30: #{nextitnet_forward.1} parent=1 // pred_check
      _
    $region31: #{nextitnet_forward.1} parent=1 // pred_check_branch
      %49 = sbr.rel (0) target = $region33
    $region32: #{nextitnet_forward.1} parent=1 // pred_region
      %50 = dma.done [#allocation5], 16384
    $region33: #{nextitnet_forward.1} parent=1 // pred_fallthru
      _
    %v51 = vld [vmem:[%s0] sm:$0xff]
    %v52 = vld [vmem:[%s0 + $0x8] sm:$0xff]
    %v53 = vlaneseq
    %v54 = vand.u32 %v53, 127
    %vm55 = vcmp.lt.s32.totalorder %v54, 32
    %v56 = vld [vmem:[#allocation2] sm:$0xff]
    %v57 = vld [vmem:[#allocation2 + $0x8] sm:$0xff]
    %v58 = vld [vmem:[#allocation2 + $0x10] sm:$0xff]
    %v59 = vld [vmem:[#allocation2 + $0x18] sm:$0xff]
    %v60 = vld [vmem:[#allocation2 + $0x20] sm:$0xff]
    %v61 = vld [vmem:[#allocation2 + $0x28] sm:$0xff]
    %v62 = vld [vmem:[#allocation2 + $0x30] sm:$0xff]
    %v63 = vld [vmem:[#allocation2 + $0x38] sm:$0xff]
    %v64 = vld [vmem:[#allocation2 + $0x40] sm:$0xff]
    %v65 = vld [vmem:[#allocation2 + $0x48] sm:$0xff]
    %v66 = vld [vmem:[#allocation2 + $0x50] sm:$0xff]
    %v67 = vld [vmem:[#allocation2 + $0x58] sm:$0xff]
    %v68 = vld [vmem:[#allocation2 + $0x60] sm:$0xff]
    %v69 = vld [vmem:[#allocation2 + $0x68] sm:$0xff]
    %v70 = vld [vmem:[#allocation2 + $0x70] sm:$0xff]
    %v71 = vld [vmem:[#allocation2 + $0x78] sm:$0xff]
    %v72 = vld [vmem:[#allocation4] sm:$0xff]
    %v73 = vld [vmem:[#allocation4 + $0x8] sm:$0xff]
    %v74 = vld [vmem:[#allocation4 + $0x10] sm:$0xff]
    %v75 = vld [vmem:[#allocation4 + $0x18] sm:$0xff]
    %v76 = vld [vmem:[#allocation4 + $0x20] sm:$0xff]
    %v77 = vld [vmem:[#allocation4 + $0x28] sm:$0xff]
    %v78 = vld [vmem:[#allocation4 + $0x30] sm:$0xff]
    %v79 = vld [vmem:[#allocation4 + $0x38] sm:$0xff]
    %v80 = vld [vmem:[#allocation4 + $0x40] sm:$0xff]
    %v81 = vld [vmem:[#allocation4 + $0x48] sm:$0xff]
    %v82 = vld [vmem:[#allocation4 + $0x50] sm:$0xff]
    %v83 = vld [vmem:[#allocation4 + $0x58] sm:$0xff]
    %v84 = vld [vmem:[#allocation4 + $0x60] sm:$0xff]
    %v85 = vld [vmem:[#allocation4 + $0x68] sm:$0xff]
    %v86 = vld [vmem:[#allocation4 + $0x70] sm:$0xff]
    %v87 = vld [vmem:[#allocation4 + $0x78] sm:$0xff]
    %v88 = vld [vmem:[%s3] sm:$0xff]
    %v89 = vlaneseq
    %v90 = vshrl.u32 %v89, 7
    %v91 = vsub.s32 0, %v90
    %v92 = vrot.slane %v88, %v91
    %93 = vmatprep.subr.mxu0 0.0
    %94 = vmatpush1.msra.mxu0 %v56
    %95 = vmatprep.subr.mxu0 0.0
    %96 = vmatpush1.msra.mxu0 %v57
    %97 = vmatprep.subr.mxu0 0.0
    %98 = vmatpush1.msra.mxu0 %v58
    %99 = vmatprep.subr.mxu0 0.0
    %100 = vmatpush1.msra.mxu0 %v59
    %101 = vmatprep.subr.mxu0 0.0
    %102 = vmatpush1.msra.mxu0 %v60
    %103 = vmatprep.subr.mxu0 0.0
    %104 = vmatpush1.msra.mxu0 %v61
    %105 = vmatprep.subr.mxu0 0.0
    %106 = vmatpush1.msra.mxu0 %v62
    %107 = vmatprep.subr.mxu0 0.0
    %108 = vmatpush1.msra.mxu0 %v63
    %109 = vmatprep.subr.mxu0 0.0
    %110 = vmatpush1.msra.mxu0 %v64
    %111 = vmatprep.subr.mxu0 0.0
    %112 = vmatpush1.msra.mxu0 %v65
    %113 = vmatprep.subr.mxu0 0.0
    %114 = vmatpush1.msra.mxu0 %v66
    %115 = vmatprep.subr.mxu0 0.0
    %116 = vmatpush1.msra.mxu0 %v67
    %117 = vmatprep.subr.mxu0 0.0
    %118 = vmatpush1.msra.mxu0 %v68
    %119 = vmatprep.subr.mxu0 0.0
    %120 = vmatpush1.msra.mxu0 %v69
    %121 = vmatprep.subr.mxu0 0.0
    %122 = vmatpush1.msra.mxu0 %v70
    %123 = vmatprep.subr.mxu0 0.0
    %124 = vmatpush1.msra.mxu0 %v71
    %125 = vmatprep.subr.mxu0 0.0
    %126 = vmatpush1.msra.mxu0 0.0
    %127 = vmatprep.subr.mxu0 0.0
    %128 = vmatpush1.msra.mxu0 0.0
    %129 = vmatprep.subr.mxu0 0.0
    %130 = vmatpush1.msra.mxu0 0.0
    %131 = vmatprep.subr.mxu0 0.0
    %132 = vmatpush1.msra.mxu0 0.0
    %133 = vmatprep.subr.mxu0 0.0
    %134 = vmatpush1.msra.mxu0 0.0
    %135 = vmatprep.subr.mxu0 0.0
    %136 = vmatpush1.msra.mxu0 0.0
    %137 = vmatprep.subr.mxu0 0.0
    %138 = vmatpush1.msra.mxu0 0.0
    %139 = vmatprep.subr.mxu0 0.0
    %140 = vmatpush1.msra.mxu0 0.0
    %141 = vmatprep.subr.mxu0 0.0
    %142 = vmatpush1.msra.mxu0 0.0
    %143 = vmatprep.subr.mxu0 0.0
    %144 = vmatpush1.msra.mxu0 0.0
    %145 = vmatprep.subr.mxu0 0.0
    %146 = vmatpush1.msra.mxu0 0.0
    %147 = vmatprep.subr.mxu0 0.0
    %148 = vmatpush1.msra.mxu0 0.0
    %149 = vmatprep.subr.mxu0 0.0
    %150 = vmatpush1.msra.mxu0 0.0
    %151 = vmatprep.subr.mxu0 0.0
    %152 = vmatpush1.msra.mxu0 0.0
    %153 = vmatprep.subr.mxu0 0.0
    %154 = vmatpush1.msra.mxu0 0.0
    %155 = vmatprep.subr.mxu0 0.0
    %156 = vmatpush1.msra.mxu0 0.0
    %157 = vmatprep.mubr.f32.mxu0 0.0
    %158 = vmatmul.mubr.f32.gmra.mrb[0].mxu0 %v51
    %v159 = vpop.f32.mrb[0].mxu0
    %v160 = vadd.f32 %v92, %v159
    %v161 = vpop.f32.mrb[0].mxu0
    %162 = vmatprep.mubr.f32.mxu0 0.0
    %163 = vmatmul.mubr.f32.gmra.mrb[0].mxu0 %v52
    %v164 = vpop.f32.mrb[0].mxu0
    %v165 = vadd.f32 %v92, %v164
    %v166 = vpop.f32.mrb[0].mxu0
    %167 = vdwg.mxu0
    %168 = vadd.xlane.f32.xlu0 %v160
    %v169 = vpop.xlane.xlu0 %168
    %170 = vadd.xlane.f32.xlu0 %v165
    %v171 = vpop.xlane.xlu0 %170
    %v172 = vmul.f32 %v169, 0.03125
    %v173 = vmul.f32 %v171, 0.03125
    %v174 = vsub.f32 %v160, %v172
    %v175 = vsub.f32 %v165, %v173
    %v176 = vmul.f32 %v174, %v174
    %v177 = vmul.f32 %v175, %v175
    %v178 = vsel %vm55, 1, 0
    %vm179 = vcmp.eq.s32.totalorder %v178, 1
    %v180 = vsel %vm179, %v176, 0.0
    %v181 = vsel %vm179, %v177, 0.0
    %182 = vadd.xlane.f32.xlu0 %v180
    %v183 = vpop.xlane.xlu0 %182
    %184 = vadd.xlane.f32.xlu0 %v181
    %v185 = vpop.xlane.xlu0 %184
    %v186 = vmul.f32 %v183, 0.03125
    %v187 = vmul.f32 %v185, 0.03125
    %v188 = vadd.f32 %v186, 1e-05
    %v189 = vadd.f32 %v187, 1e-05
    %v190 = vrsqrt.pop %v188
    %v191 = vrsqrt.pop %v189
    %v192 = vmul.f32 %v174, %v190
    %v193 = vmul.f32 %v175, %v191
    %v194 = vlaneseq
    %v195 = vshrl.u32 %v194, 7
    %v196 = vsub.s32 1, %v195
    %v197 = vrot.slane %v88, %v196
    %v198 = vmul.f32 %v192, %v197
    %v199 = vmul.f32 %v193, %v197
    %v200 = vlaneseq
    %v201 = vshrl.u32 %v200, 7
    %v202 = vsub.s32 2, %v201
    %v203 = vrot.slane %v88, %v202
    %v204 = vadd.f32 %v198, %v203
    %v205 = vadd.f32 %v199, %v203
    %v206 = vmax.f32 %v204, 0.0
    %v207 = vmax.f32 %v205, 0.0
    %v208 = vlaneseq
    %v209 = vshrl.u32 %v208, 7
    %v210 = vsub.s32 3, %v209
    %v211 = vrot.slane %v88, %v210
    %212 = vmatprep.subr.mxu0 0.0
    %213 = vmatpush1.msra.mxu0 %v72
    %214 = vmatprep.subr.mxu0 0.0
    %215 = vmatpush1.msra.mxu0 %v73
    %216 = vmatprep.subr.mxu0 0.0
    %217 = vmatpush1.msra.mxu0 %v74
    %218 = vmatprep.subr.mxu0 0.0
    %219 = vmatpush1.msra.mxu0 %v75
    %220 = vmatprep.subr.mxu0 0.0
    %221 = vmatpush1.msra.mxu0 %v76
    %222 = vmatprep.subr.mxu0 0.0
    %223 = vmatpush1.msra.mxu0 %v77
    %224 = vmatprep.subr.mxu0 0.0
    %225 = vmatpush1.msra.mxu0 %v78
    %226 = vmatprep.subr.mxu0 0.0
    %227 = vmatpush1.msra.mxu0 %v79
    %228 = vmatprep.subr.mxu0 0.0
    %229 = vmatpush1.msra.mxu0 %v80
    %230 = vmatprep.subr.mxu0 0.0
    %231 = vmatpush1.msra.mxu0 %v81
    %232 = vmatprep.subr.mxu0 0.0
    %233 = vmatpush1.msra.mxu0 %v82
    %234 = vmatprep.subr.mxu0 0.0
    %235 = vmatpush1.msra.mxu0 %v83
    %236 = vmatprep.subr.mxu0 0.0
    %237 = vmatpush1.msra.mxu0 %v84
    %238 = vmatprep.subr.mxu0 0.0
    %239 = vmatpush1.msra.mxu0 %v85
    %240 = vmatprep.subr.mxu0 0.0
    %241 = vmatpush1.msra.mxu0 %v86
    %242 = vmatprep.subr.mxu0 0.0
    %243 = vmatpush1.msra.mxu0 %v87
    %244 = vmatprep.subr.mxu0 0.0
    %245 = vmatpush1.msra.mxu0 0.0
    %246 = vmatprep.subr.mxu0 0.0
    %247 = vmatpush1.msra.mxu0 0.0
    %248 = vmatprep.subr.mxu0 0.0
    %249 = vmatpush1.msra.mxu0 0.0
    %250 = vmatprep.subr.mxu0 0.0
    %251 = vmatpush1.msra.mxu0 0.0
    %252 = vmatprep.subr.mxu0 0.0
    %253 = vmatpush1.msra.mxu0 0.0
    %254 = vmatprep.subr.mxu0 0.0
    %255 = vmatpush1.msra.mxu0 0.0
    %256 = vmatprep.subr.mxu0 0.0
    %257 = vmatpush1.msra.mxu0 0.0
    %258 = vmatprep.subr.mxu0 0.0
    %259 = vmatpush1.msra.mxu0 0.0
    %260 = vmatprep.subr.mxu0 0.0
    %261 = vmatpush1.msra.mxu0 0.0
    %262 = vmatprep.subr.mxu0 0.0
    %263 = vmatpush1.msra.mxu0 0.0
    %264 = vmatprep.subr.mxu0 0.0
    %265 = vmatpush1.msra.mxu0 0.0
    %266 = vmatprep.subr.mxu0 0.0
    %267 = vmatpush1.msra.mxu0 0.0
    %268 = vmatprep.subr.mxu0 0.0
    %269 = vmatpush1.msra.mxu0 0.0
    %270 = vmatprep.subr.mxu0 0.0
    %271 = vmatpush1.msra.mxu0 0.0
    %272 = vmatprep.subr.mxu0 0.0
    %273 = vmatpush1.msra.mxu0 0.0
    %274 = vmatprep.subr.mxu0 0.0
    %275 = vmatpush1.msra.mxu0 0.0
    %276 = vmatprep.mubr.f32.mxu0 0.0
    %277 = vmatmul.mubr.f32.gmra.mrb[0].mxu0 %v206
    %v278 = vpop.f32.mrb[0].mxu0
    %v279 = vadd.f32 %v211, %v278
    %v280 = vpop.f32.mrb[0].mxu0
    %281 = vmatprep.mubr.f32.mxu0 0.0
    %282 = vmatmul.mubr.f32.gmra.mrb[0].mxu0 %v207
    %v283 = vpop.f32.mrb[0].mxu0
    %v284 = vadd.f32 %v211, %v283
    %v285 = vpop.f32.mrb[0].mxu0
    %286 = vdwg.mxu0
    %287 = vadd.xlane.f32.xlu0 %v279
    %v288 = vpop.xlane.xlu0 %287
    %289 = vadd.xlane.f32.xlu0 %v284
    %v290 = vpop.xlane.xlu0 %289
    %v291 = vmul.f32 %v288, 0.03125
    %v292 = vmul.f32 %v290, 0.03125
    %v293 = vsub.f32 %v279, %v291
    %v294 = vsub.f32 %v284, %v292
    %v295 = vmul.f32 %v293, %v293
    %v296 = vmul.f32 %v294, %v294
    %v297 = vsel %vm179, %v295, 0.0
    %v298 = vsel %vm179, %v296, 0.0
    %299 = vadd.xlane.f32.xlu0 %v297
    %v300 = vpop.xlane.xlu0 %299
    %301 = vadd.xlane.f32.xlu0 %v298
    %v302 = vpop.xlane.xlu0 %301
    %v303 = vmul.f32 %v300, 0.03125
    %v304 = vmul.f32 %v302, 0.03125
    %v305 = vadd.f32 %v303, 1e-05
    %v306 = vadd.f32 %v304, 1e-05
    %v307 = vrsqrt.pop %v305
    %v308 = vrsqrt.pop %v306
    %v309 = vmul.f32 %v293, %v307
    %v310 = vmul.f32 %v294, %v308
    %v311 = vlaneseq
    %v312 = vshrl.u32 %v311, 7
    %v313 = vsub.s32 4, %v312
    %v314 = vrot.slane %v88, %v313
    %v315 = vmul.f32 %v309, %v314
    %v316 = vmul.f32 %v310, %v314
    %v317 = vlaneseq
    %v318 = vshrl.u32 %v317, 7
    %v319 = vsub.s32 5, %v318
    %v320 = vrot.slane %v88, %v319
    %v321 = vadd.f32 %v315, %v320
    %v322 = vadd.f32 %v316, %v320
    %v323 = vmax.f32 %v321, 0.0
    %v324 = vmax.f32 %v322, 0.0
    %v325 = vadd.f32 %v51, %v323
    %v326 = vadd.f32 %v52, %v324
    %s327 = scalar_lea.vmem [#allocation2], 128
    %v328 = vld [vmem:[%s327] sm:$0xff]
    %v329 = vld [vmem:[%s327 + $0x8] sm:$0xff]
    %v330 = vld [vmem:[%s327 + $0x10] sm:$0xff]
    %v331 = vld [vmem:[%s327 + $0x18] sm:$0xff]
    %v332 = vld [vmem:[%s327 + $0x20] sm:$0xff]
    %v333 = vld [vmem:[%s327 + $0x28] sm:$0xff]
    %v334 = vld [vmem:[%s327 + $0x30] sm:$0xff]
    %v335 = vld [vmem:[%s327 + $0x38] sm:$0xff]
    %v336 = vld [vmem:[%s327 + $0x40] sm:$0xff]
    %v337 = vld [vmem:[%s327 + $0x48] sm:$0xff]
    %v338 = vld [vmem:[%s327 + $0x50] sm:$0xff]
    %v339 = vld [vmem:[%s327 + $0x58] sm:$0xff]
    %v340 = vld [vmem:[%s327 + $0x60] sm:$0xff]
    %v341 = vld [vmem:[%s327 + $0x68] sm:$0xff]
    %v342 = vld [vmem:[%s327 + $0x70] sm:$0xff]
    %v343 = vld [vmem:[%s327 + $0x78] sm:$0xff]
    %s344 = scalar_lea.vmem [#allocation4], 128
    %v345 = vld [vmem:[%s344] sm:$0xff]
    %v346 = vld [vmem:[%s344 + $0x8] sm:$0xff]
    %v347 = vld [vmem:[%s344 + $0x10] sm:$0xff]
    %v348 = vld [vmem:[%s344 + $0x18] sm:$0xff]
    %v349 = vld [vmem:[%s344 + $0x20] sm:$0xff]
    %v350 = vld [vmem:[%s344 + $0x28] sm:$0xff]
    %v351 = vld [vmem:[%s344 + $0x30] sm:$0xff]
    %v352 = vld [vmem:[%s344 + $0x38] sm:$0xff]
    %v353 = vld [vmem:[%s344 + $0x40] sm:$0xff]
    %v354 = vld [vmem:[%s344 + $0x48] sm:$0xff]
    %v355 = vld [vmem:[%s344 + $0x50] sm:$0xff]
    %v356 = vld [vmem:[%s344 + $0x58] sm:$0xff]
    %v357 = vld [vmem:[%s344 + $0x60] sm:$0xff]
    %v358 = vld [vmem:[%s344 + $0x68] sm:$0xff]
    %v359 = vld [vmem:[%s344 + $0x70] sm:$0xff]
    %v360 = vld [vmem:[%s344 + $0x78] sm:$0xff]
    %s361 = scalar_lea.vmem %s3, 8
    %v362 = vld [vmem:[%s361] sm:$0xff]
    %v363 = vlaneseq
    %v364 = vshrl.u32 %v363, 7
    %v365 = vsub.s32 0, %v364
    %v366 = vrot.slane %v362, %v365
    %367 = vmatprep.subr.mxu0 0.0
    %368 = vmatpush1.msra.mxu0 %v328
    %369 = vmatprep.subr.mxu0 0.0
    %370 = vmatpush1.msra.mxu0 %v329
    %371 = vmatprep.subr.mxu0 0.0
    %372 = vmatpush1.msra.mxu0 %v330
    %373 = vmatprep.subr.mxu0 0.0
    %374 = vmatpush1.msra.mxu0 %v331
    %375 = vmatprep.subr.mxu0 0.0
    %376 = vmatpush1.msra.mxu0 %v332
    %377 = vmatprep.subr.mxu0 0.0
    %378 = vmatpush1.msra.mxu0 %v333
    %379 = vmatprep.subr.mxu0 0.0
    %380 = vmatpush1.msra.mxu0 %v334
    %381 = vmatprep.subr.mxu0 0.0
    %382 = vmatpush1.msra.mxu0 %v335
    %383 = vmatprep.subr.mxu0 0.0
    %384 = vmatpush1.msra.mxu0 %v336
    %385 = vmatprep.subr.mxu0 0.0
    %386 = vmatpush1.msra.mxu0 %v337
    %387 = vmatprep.subr.mxu0 0.0
    %388 = vmatpush1.msra.mxu0 %v338
    %389 = vmatprep.subr.mxu0 0.0
    %390 = vmatpush1.msra.mxu0 %v339
    %391 = vmatprep.subr.mxu0 0.0
    %392 = vmatpush1.msra.mxu0 %v340
    %393 = vmatprep.subr.mxu0 0.0
    %394 = vmatpush1.msra.mxu0 %v341
    %395 = vmatprep.subr.mxu0 0.0
    %396 = vmatpush1.msra.mxu0 %v342
    %397 = vmatprep.subr.mxu0 0.0
    %398 = vmatpush1.msra.mxu0 %v343
    %399 = vmatprep.subr.mxu0 0.0
    %400 = vmatpush1.msra.mxu0 0.0
    %401 = vmatprep.subr.mxu0 0.0
    %402 = vmatpush1.msra.mxu0 0.0
    %403 = vmatprep.subr.mxu0 0.0
    %404 = vmatpush1.msra.mxu0 0.0
    %405 = vmatprep.subr.mxu0 0.0
    %406 = vmatpush1.msra.mxu0 0.0
    %407 = vmatprep.subr.mxu0 0.0
    %408 = vmatpush1.msra.mxu0 0.0
    %409 = vmatprep.subr.mxu0 0.0
    %410 = vmatpush1.msra.mxu0 0.0
    %411 = vmatprep.subr.mxu0 0.0
    %412 = vmatpush1.msra.mxu0 0.0
    %413 = vmatprep.subr.mxu0 0.0
    %414 = vmatpush1.msra.mxu0 0.0
    %415 = vmatprep.subr.mxu0 0.0
    %416 = vmatpush1.msra.mxu0 0.0
    %417 = vmatprep.subr.mxu0 0.0
    %418 = vmatpush1.msra.mxu0 0.0
    %419 = vmatprep.subr.mxu0 0.0
    %420 = vmatpush1.msra.mxu0 0.0
    %421 = vmatprep.subr.mxu0 0.0
    %422 = vmatpush1.msra.mxu0 0.0
    %423 = vmatprep.subr.mxu0 0.0
    %424 = vmatpush1.msra.mxu0 0.0
    %425 = vmatprep.subr.mxu0 0.0
    %426 = vmatpush1.msra.mxu0 0.0
    %427 = vmatprep.subr.mxu0 0.0
    %428 = vmatpush1.msra.mxu0 0.0
    %429 = vmatprep.subr.mxu0 0.0
    %430 = vmatpush1.msra.mxu0 0.0
    %431 = vmatprep.mubr.f32.mxu0 0.0
    %432 = vmatmul.mubr.f32.gmra.mrb[0].mxu0 %v325
    %v433 = vpop.f32.mrb[0].mxu0
    %v434 = vadd.f32 %v366, %v433
    %v435 = vpop.f32.mrb[0].mxu0
    %436 = vmatprep.mubr.f32.mxu0 0.0
    %437 = vmatmul.mubr.f32.gmra.mrb[0].mxu0 %v326
    %v438 = vpop.f32.mrb[0].mxu0
    %v439 = vadd.f32 %v366, %v438
    %v440 = vpop.f32.mrb[0].mxu0
    %441 = vdwg.mxu0
    %442 = vadd.xlane.f32.xlu0 %v434
    %v443 = vpop.xlane.xlu0 %442
    %444 = vadd.xlane.f32.xlu0 %v439
    %v445 = vpop.xlane.xlu0 %444
    %v446 = vmul.f32 %v443, 0.03125
    %v447 = vmul.f32 %v445, 0.03125
    %v448 = vsub.f32 %v434, %v446
    %v449 = vsub.f32 %v439, %v447
    %v450 = vmul.f32 %v448, %v448
    %v451 = vmul.f32 %v449, %v449
    %v452 = vsel %vm179, %v450, 0.0
    %v453 = vsel %vm179, %v451, 0.0
    %454 = vadd.xlane.f32.xlu0 %v452
    %v455 = vpop.xlane.xlu0 %454
    %456 = vadd.xlane.f32.xlu0 %v453
    %v457 = vpop.xlane.xlu0 %456
    %v458 = vmul.f32 %v455, 0.03125
    %v459 = vmul.f32 %v457, 0.03125
    %v460 = vadd.f32 %v458, 1e-05
    %v461 = vadd.f32 %v459, 1e-05
    %v462 = vrsqrt.pop %v460
    %v463 = vrsqrt.pop %v461
    %v464 = vmul.f32 %v448, %v462
    %v465 = vmul.f32 %v449, %v463
    %v466 = vlaneseq
    %v467 = vshrl.u32 %v466, 7
    %v468 = vsub.s32 1, %v467
    %v469 = vrot.slane %v362, %v468
    %v470 = vmul.f32 %v464, %v469
    %v471 = vmul.f32 %v465, %v469
    %v472 = vlaneseq
    %v473 = vshrl.u32 %v472, 7
    %v474 = vsub.s32 2, %v473
    %v475 = vrot.slane %v362, %v474
    %v476 = vadd.f32 %v470, %v475
    %v477 = vadd.f32 %v471, %v475
    %v478 = vmax.f32 %v476, 0.0
    %v479 = vmax.f32 %v477, 0.0
    %v480 = vlaneseq
    %v481 = vshrl.u32 %v480, 7
    %v482 = vsub.s32 3, %v481
    %v483 = vrot.slane %v362, %v482
    %484 = vmatprep.subr.mxu0 0.0
    %485 = vmatpush1.msra.mxu0 %v345
    %486 = vmatprep.subr.mxu0 0.0
    %487 = vmatpush1.msra.mxu0 %v346
    %488 = vmatprep.subr.mxu0 0.0
    %489 = vmatpush1.msra.mxu0 %v347
    %490 = vmatprep.subr.mxu0 0.0
    %491 = vmatpush1.msra.mxu0 %v348
    %492 = vmatprep.subr.mxu0 0.0
    %493 = vmatpush1.msra.mxu0 %v349
    %494 = vmatprep.subr.mxu0 0.0
    %495 = vmatpush1.msra.mxu0 %v350
    %496 = vmatprep.subr.mxu0 0.0
    %497 = vmatpush1.msra.mxu0 %v351
    %498 = vmatprep.subr.mxu0 0.0
    %499 = vmatpush1.msra.mxu0 %v352
    %500 = vmatprep.subr.mxu0 0.0
    %501 = vmatpush1.msra.mxu0 %v353
    %502 = vmatprep.subr.mxu0 0.0
    %503 = vmatpush1.msra.mxu0 %v354
    %504 = vmatprep.subr.mxu0 0.0
    %505 = vmatpush1.msra.mxu0 %v355
    %506 = vmatprep.subr.mxu0 0.0
    %507 = vmatpush1.msra.mxu0 %v356
    %508 = vmatprep.subr.mxu0 0.0
    %509 = vmatpush1.msra.mxu0 %v357
    %510 = vmatprep.subr.mxu0 0.0
    %511 = vmatpush1.msra.mxu0 %v358
    %512 = vmatprep.subr.mxu0 0.0
    %513 = vmatpush1.msra.mxu0 %v359
    %514 = vmatprep.subr.mxu0 0.0
    %515 = vmatpush1.msra.mxu0 %v360
    %516 = vmatprep.subr.mxu0 0.0
    %517 = vmatpush1.msra.mxu0 0.0
    %518 = vmatprep.subr.mxu0 0.0
    %519 = vmatpush1.msra.mxu0 0.0
    %520 = vmatprep.subr.mxu0 0.0
    %521 = vmatpush1.msra.mxu0 0.0
    %522 = vmatprep.subr.mxu0 0.0
    %523 = vmatpush1.msra.mxu0 0.0
    %524 = vmatprep.subr.mxu0 0.0
    %525 = vmatpush1.msra.mxu0 0.0
    %526 = vmatprep.subr.mxu0 0.0
    %527 = vmatpush1.msra.mxu0 0.0
    %528 = vmatprep.subr.mxu0 0.0
    %529 = vmatpush1.msra.mxu0 0.0
    %530 = vmatprep.subr.mxu0 0.0
    %531 = vmatpush1.msra.mxu0 0.0
    %532 = vmatprep.subr.mxu0 0.0
    %533 = vmatpush1.msra.mxu0 0.0
    %534 = vmatprep.subr.mxu0 0.0
    %535 = vmatpush1.msra.mxu0 0.0
    %536 = vmatprep.subr.mxu0 0.0
    %537 = vmatpush1.msra.mxu0 0.0
    %538 = vmatprep.subr.mxu0 0.0
    %539 = vmatpush1.msra.mxu0 0.0
    %540 = vmatprep.subr.mxu0 0.0
    %541 = vmatpush1.msra.mxu0 0.0
    %542 = vmatprep.subr.mxu0 0.0
    %543 = vmatpush1.msra.mxu0 0.0
    %544 = vmatprep.subr.mxu0 0.0
    %545 = vmatpush1.msra.mxu0 0.0
    %546 = vmatprep.subr.mxu0 0.0
    %547 = vmatpush1.msra.mxu0 0.0
    %548 = vmatprep.mubr.f32.mxu0 0.0
    %549 = vmatmul.mubr.f32.gmra.mrb[0].mxu0 %v478
    %v550 = vpop.f32.mrb[0].mxu0
    %v551 = vadd.f32 %v483, %v550
    %v552 = vpop.f32.mrb[0].mxu0
    %553 = vmatprep.mubr.f32.mxu0 0.0
    %554 = vmatmul.mubr.f32.gmra.mrb[0].mxu0 %v479
    %v555 = vpop.f32.mrb[0].mxu0
    %v556 = vadd.f32 %v483, %v555
    %v557 = vpop.f32.mrb[0].mxu0
    %558 = vdwg.mxu0
    %559 = vadd.xlane.f32.xlu0 %v551
    %v560 = vpop.xlane.xlu0 %559
    %561 = vadd.xlane.f32.xlu0 %v556
    %v562 = vpop.xlane.xlu0 %561
    %v563 = vmul.f32 %v560, 0.03125
    %v564 = vmul.f32 %v562, 0.03125
    %v565 = vsub.f32 %v551, %v563
    %v566 = vsub.f32 %v556, %v564
    %v567 = vmul.f32 %v565, %v565
    %v568 = vmul.f32 %v566, %v566
    %v569 = vsel %vm179, %v567, 0.0
    %v570 = vsel %vm179, %v568, 0.0
    %571 = vadd.xlane.f32.xlu0 %v569
    %v572 = vpop.xlane.xlu0 %571
    %573 = vadd.xlane.f32.xlu0 %v570
    %v574 = vpop.xlane.xlu0 %573
    %v575 = vmul.f32 %v572, 0.03125
    %v576 = vmul.f32 %v574, 0.03125
    %v577 = vadd.f32 %v575, 1e-05
    %v578 = vadd.f32 %v576, 1e-05
    %v579 = vrsqrt.pop %v577
    %v580 = vrsqrt.pop %v578
    %v581 = vmul.f32 %v565, %v579
    %v582 = vmul.f32 %v566, %v580
    %v583 = vlaneseq
    %v584 = vshrl.u32 %v583, 7
    %v585 = vsub.s32 4, %v584
    %v586 = vrot.slane %v362, %v585
    %v587 = vmul.f32 %v581, %v586
    %v588 = vmul.f32 %v582, %v586
    %v589 = vlaneseq
    %v590 = vshrl.u32 %v589, 7
    %v591 = vsub.s32 5, %v590
    %v592 = vrot.slane %v362, %v591
    %v593 = vadd.f32 %v587, %v592
    %v594 = vadd.f32 %v588, %v592
    %v595 = vmax.f32 %v593, 0.0
    %v596 = vmax.f32 %v594, 0.0
    %v597 = vadd.f32 %v325, %v595
    %v598 = vadd.f32 %v326, %v596
    %s599 = scalar_lea.vmem [#allocation2], 256
    %v600 = vld [vmem:[%s599] sm:$0xff]
    %v601 = vld [vmem:[%s599 + $0x8] sm:$0xff]
    %v602 = vld [vmem:[%s599 + $0x10] sm:$0xff]
    %v603 = vld [vmem:[%s599 + $0x18] sm:$0xff]
    %v604 = vld [vmem:[%s599 + $0x20] sm:$0xff]
    %v605 = vld [vmem:[%s599 + $0x28] sm:$0xff]
    %v606 = vld [vmem:[%s599 + $0x30] sm:$0xff]
    %v607 = vld [vmem:[%s599 + $0x38] sm:$0xff]
    %v608 = vld [vmem:[%s599 + $0x40] sm:$0xff]
    %v609 = vld [vmem:[%s599 + $0x48] sm:$0xff]
    %v610 = vld [vmem:[%s599 + $0x50] sm:$0xff]
    %v611 = vld [vmem:[%s599 + $0x58] sm:$0xff]
    %v612 = vld [vmem:[%s599 + $0x60] sm:$0xff]
    %v613 = vld [vmem:[%s599 + $0x68] sm:$0xff]
    %v614 = vld [vmem:[%s599 + $0x70] sm:$0xff]
    %v615 = vld [vmem:[%s599 + $0x78] sm:$0xff]
    %s616 = scalar_lea.vmem [#allocation4], 256
    %v617 = vld [vmem:[%s616] sm:$0xff]
    %v618 = vld [vmem:[%s616 + $0x8] sm:$0xff]
    %v619 = vld [vmem:[%s616 + $0x10] sm:$0xff]
    %v620 = vld [vmem:[%s616 + $0x18] sm:$0xff]
    %v621 = vld [vmem:[%s616 + $0x20] sm:$0xff]
    %v622 = vld [vmem:[%s616 + $0x28] sm:$0xff]
    %v623 = vld [vmem:[%s616 + $0x30] sm:$0xff]
    %v624 = vld [vmem:[%s616 + $0x38] sm:$0xff]
    %v625 = vld [vmem:[%s616 + $0x40] sm:$0xff]
    %v626 = vld [vmem:[%s616 + $0x48] sm:$0xff]
    %v627 = vld [vmem:[%s616 + $0x50] sm:$0xff]
    %v628 = vld [vmem:[%s616 + $0x58] sm:$0xff]
    %v629 = vld [vmem:[%s616 + $0x60] sm:$0xff]
    %v630 = vld [vmem:[%s616 + $0x68] sm:$0xff]
    %v631 = vld [vmem:[%s616 + $0x70] sm:$0xff]
    %v632 = vld [vmem:[%s616 + $0x78] sm:$0xff]
    %s633 = scalar_lea.vmem %s3, 16
    %v634 = vld [vmem:[%s633] sm:$0xff]
    %v635 = vlaneseq
    %v636 = vshrl.u32 %v635, 7
    %v637 = vsub.s32 0, %v636
    %v638 = vrot.slane %v634, %v637
    %639 = vmatprep.subr.mxu0 0.0
    %640 = vmatpush1.msra.mxu0 %v600
    %641 = vmatprep.subr.mxu0 0.0
    %642 = vmatpush1.msra.mxu0 %v601
    %643 = vmatprep.subr.mxu0 0.0
    %644 = vmatpush1.msra.mxu0 %v602
    %645 = vmatprep.subr.mxu0 0.0
    %646 = vmatpush1.msra.mxu0 %v603
    %647 = vmatprep.subr.mxu0 0.0
    %648 = vmatpush1.msra.mxu0 %v604
    %649 = vmatprep.subr.mxu0 0.0
    %650 = vmatpush1.msra.mxu0 %v605
    %651 = vmatprep.subr.mxu0 0.0
    %652 = vmatpush1.msra.mxu0 %v606
    %653 = vmatprep.subr.mxu0 0.0
    %654 = vmatpush1.msra.mxu0 %v607
    %655 = vmatprep.subr.mxu0 0.0
    %656 = vmatpush1.msra.mxu0 %v608
    %657 = vmatprep.subr.mxu0 0.0
    %658 = vmatpush1.msra.mxu0 %v609
    %659 = vmatprep.subr.mxu0 0.0
    %660 = vmatpush1.msra.mxu0 %v610
    %661 = vmatprep.subr.mxu0 0.0
    %662 = vmatpush1.msra.mxu0 %v611
    %663 = vmatprep.subr.mxu0 0.0
    %664 = vmatpush1.msra.mxu0 %v612
    %665 = vmatprep.subr.mxu0 0.0
    %666 = vmatpush1.msra.mxu0 %v613
    %667 = vmatprep.subr.mxu0 0.0
    %668 = vmatpush1.msra.mxu0 %v614
    %669 = vmatprep.subr.mxu0 0.0
    %670 = vmatpush1.msra.mxu0 %v615
    %671 = vmatprep.subr.mxu0 0.0
    %672 = vmatpush1.msra.mxu0 0.0
    %673 = vmatprep.subr.mxu0 0.0
    %674 = vmatpush1.msra.mxu0 0.0
    %675 = vmatprep.subr.mxu0 0.0
    %676 = vmatpush1.msra.mxu0 0.0
    %677 = vmatprep.subr.mxu0 0.0
    %678 = vmatpush1.msra.mxu0 0.0
    %679 = vmatprep.subr.mxu0 0.0
    %680 = vmatpush1.msra.mxu0 0.0
    %681 = vmatprep.subr.mxu0 0.0
    %682 = vmatpush1.msra.mxu0 0.0
    %683 = vmatprep.subr.mxu0 0.0
    %684 = vmatpush1.msra.mxu0 0.0
    %685 = vmatprep.subr.mxu0 0.0
    %686 = vmatpush1.msra.mxu0 0.0
    %687 = vmatprep.subr.mxu0 0.0
    %688 = vmatpush1.msra.mxu0 0.0
    %689 = vmatprep.subr.mxu0 0.0
    %690 = vmatpush1.msra.mxu0 0.0
    %691 = vmatprep.subr.mxu0 0.0
    %692 = vmatpush1.msra.mxu0 0.0
    %693 = vmatprep.subr.mxu0 0.0
    %694 = vmatpush1.msra.mxu0 0.0
    %695 = vmatprep.subr.mxu0 0.0
    %696 = vmatpush1.msra.mxu0 0.0
    %697 = vmatprep.subr.mxu0 0.0
    %698 = vmatpush1.msra.mxu0 0.0
    %699 = vmatprep.subr.mxu0 0.0
    %700 = vmatpush1.msra.mxu0 0.0
    %701 = vmatprep.subr.mxu0 0.0
    %702 = vmatpush1.msra.mxu0 0.0
    %703 = vmatprep.mubr.f32.mxu0 0.0
    %704 = vmatmul.mubr.f32.gmra.mrb[0].mxu0 %v597
    %v705 = vpop.f32.mrb[0].mxu0
    %v706 = vadd.f32 %v638, %v705
    %v707 = vpop.f32.mrb[0].mxu0
    %708 = vmatprep.mubr.f32.mxu0 0.0
    %709 = vmatmul.mubr.f32.gmra.mrb[0].mxu0 %v598
    %v710 = vpop.f32.mrb[0].mxu0
    %v711 = vadd.f32 %v638, %v710
    %v712 = vpop.f32.mrb[0].mxu0
    %713 = vdwg.mxu0
    %714 = vadd.xlane.f32.xlu0 %v706
    %v715 = vpop.xlane.xlu0 %714
    %716 = vadd.xlane.f32.xlu0 %v711
    %v717 = vpop.xlane.xlu0 %716
    %v718 = vmul.f32 %v715, 0.03125
    %v719 = vmul.f32 %v717, 0.03125
    %v720 = vsub.f32 %v706, %v718
    %v721 = vsub.f32 %v711, %v719
    %v722 = vmul.f32 %v720, %v720
    %v723 = vmul.f32 %v721, %v721
    %v724 = vsel %vm179, %v722, 0.0
    %v725 = vsel %vm179, %v723, 0.0
    %726 = vadd.xlane.f32.xlu0 %v724
    %v727 = vpop.xlane.xlu0 %726
    %728 = vadd.xlane.f32.xlu0 %v725
    %v729 = vpop.xlane.xlu0 %728
    %v730 = vmul.f32 %v727, 0.03125
    %v731 = vmul.f32 %v729, 0.03125
    %v732 = vadd.f32 %v730, 1e-05
    %v733 = vadd.f32 %v731, 1e-05
    %v734 = vrsqrt.pop %v732
    %v735 = vrsqrt.pop %v733
    %v736 = vmul.f32 %v720, %v734
    %v737 = vmul.f32 %v721, %v735
    %v738 = vlaneseq
    %v739 = vshrl.u32 %v738, 7
    %v740 = vsub.s32 1, %v739
    %v741 = vrot.slane %v634, %v740
    %v742 = vmul.f32 %v736, %v741
    %v743 = vmul.f32 %v737, %v741
    %v744 = vlaneseq
    %v745 = vshrl.u32 %v744, 7
    %v746 = vsub.s32 2, %v745
    %v747 = vrot.slane %v634, %v746
    %v748 = vadd.f32 %v742, %v747
    %v749 = vadd.f32 %v743, %v747
    %v750 = vmax.f32 %v748, 0.0
    %v751 = vmax.f32 %v749, 0.0
    %v752 = vlaneseq
    %v753 = vshrl.u32 %v752, 7
    %v754 = vsub.s32 3, %v753
    %v755 = vrot.slane %v634, %v754
    %756 = vmatprep.subr.mxu0 0.0
    %757 = vmatpush1.msra.mxu0 %v617
    %758 = vmatprep.subr.mxu0 0.0
    %759 = vmatpush1.msra.mxu0 %v618
    %760 = vmatprep.subr.mxu0 0.0
    %761 = vmatpush1.msra.mxu0 %v619
    %762 = vmatprep.subr.mxu0 0.0
    %763 = vmatpush1.msra.mxu0 %v620
    %764 = vmatprep.subr.mxu0 0.0
    %765 = vmatpush1.msra.mxu0 %v621
    %766 = vmatprep.subr.mxu0 0.0
    %767 = vmatpush1.msra.mxu0 %v622
    %768 = vmatprep.subr.mxu0 0.0
    %769 = vmatpush1.msra.mxu0 %v623
    %770 = vmatprep.subr.mxu0 0.0
    %771 = vmatpush1.msra.mxu0 %v624
    %772 = vmatprep.subr.mxu0 0.0
    %773 = vmatpush1.msra.mxu0 %v625
    %774 = vmatprep.subr.mxu0 0.0
    %775 = vmatpush1.msra.mxu0 %v626
    %776 = vmatprep.subr.mxu0 0.0
    %777 = vmatpush1.msra.mxu0 %v627
    %778 = vmatprep.subr.mxu0 0.0
    %779 = vmatpush1.msra.mxu0 %v628
    %780 = vmatprep.subr.mxu0 0.0
    %781 = vmatpush1.msra.mxu0 %v629
    %782 = vmatprep.subr.mxu0 0.0
    %783 = vmatpush1.msra.mxu0 %v630
    %784 = vmatprep.subr.mxu0 0.0
    %785 = vmatpush1.msra.mxu0 %v631
    %786 = vmatprep.subr.mxu0 0.0
    %787 = vmatpush1.msra.mxu0 %v632
    %788 = vmatprep.subr.mxu0 0.0
    %789 = vmatpush1.msra.mxu0 0.0
    %790 = vmatprep.subr.mxu0 0.0
    %791 = vmatpush1.msra.mxu0 0.0
    %792 = vmatprep.subr.mxu0 0.0
    %793 = vmatpush1.msra.mxu0 0.0
    %794 = vmatprep.subr.mxu0 0.0
    %795 = vmatpush1.msra.mxu0 0.0
    %796 = vmatprep.subr.mxu0 0.0
    %797 = vmatpush1.msra.mxu0 0.0
    %798 = vmatprep.subr.mxu0 0.0
    %799 = vmatpush1.msra.mxu0 0.0
    %800 = vmatprep.subr.mxu0 0.0
    %801 = vmatpush1.msra.mxu0 0.0
    %802 = vmatprep.subr.mxu0 0.0
    %803 = vmatpush1.msra.mxu0 0.0
    %804 = vmatprep.subr.mxu0 0.0
    %805 = vmatpush1.msra.mxu0 0.0
    %806 = vmatprep.subr.mxu0 0.0
    %807 = vmatpush1.msra.mxu0 0.0
    %808 = vmatprep.subr.mxu0 0.0
    %809 = vmatpush1.msra.mxu0 0.0
    %810 = vmatprep.subr.mxu0 0.0
    %811 = vmatpush1.msra.mxu0 0.0
    %812 = vmatprep.subr.mxu0 0.0
    %813 = vmatpush1.msra.mxu0 0.0
    %814 = vmatprep.subr.mxu0 0.0
    %815 = vmatpush1.msra.mxu0 0.0
    %816 = vmatprep.subr.mxu0 0.0
    %817 = vmatpush1.msra.mxu0 0.0
    %818 = vmatprep.subr.mxu0 0.0
    %819 = vmatpush1.msra.mxu0 0.0
    %820 = vmatprep.mubr.f32.mxu0 0.0
    %821 = vmatmul.mubr.f32.gmra.mrb[0].mxu0 %v750
    %v822 = vpop.f32.mrb[0].mxu0
    %v823 = vadd.f32 %v755, %v822
    %v824 = vpop.f32.mrb[0].mxu0
    %825 = vmatprep.mubr.f32.mxu0 0.0
    %826 = vmatmul.mubr.f32.gmra.mrb[0].mxu0 %v751
    %v827 = vpop.f32.mrb[0].mxu0
    %v828 = vadd.f32 %v755, %v827
    %v829 = vpop.f32.mrb[0].mxu0
    %830 = vdwg.mxu0
    %831 = vadd.xlane.f32.xlu0 %v823
    %v832 = vpop.xlane.xlu0 %831
    %833 = vadd.xlane.f32.xlu0 %v828
    %v834 = vpop.xlane.xlu0 %833
    %v835 = vmul.f32 %v832, 0.03125
    %v836 = vmul.f32 %v834, 0.03125
    %v837 = vsub.f32 %v823, %v835
    %v838 = vsub.f32 %v828, %v836
    %v839 = vmul.f32 %v837, %v837
    %v840 = vmul.f32 %v838, %v838
    %v841 = vsel %vm179, %v839, 0.0
    %v842 = vsel %vm179, %v840, 0.0
    %843 = vadd.xlane.f32.xlu0 %v841
    %v844 = vpop.xlane.xlu0 %843
    %845 = vadd.xlane.f32.xlu0 %v842
    %v846 = vpop.xlane.xlu0 %845
    %v847 = vmul.f32 %v844, 0.03125
    %v848 = vmul.f32 %v846, 0.03125
    %v849 = vadd.f32 %v847, 1e-05
    %v850 = vadd.f32 %v848, 1e-05
    %v851 = vrsqrt.pop %v849
    %v852 = vrsqrt.pop %v850
    %v853 = vmul.f32 %v837, %v851
    %v854 = vmul.f32 %v838, %v852
    %v855 = vlaneseq
    %v856 = vshrl.u32 %v855, 7
    %v857 = vsub.s32 4, %v856
    %v858 = vrot.slane %v634, %v857
    %v859 = vmul.f32 %v853, %v858
    %v860 = vmul.f32 %v854, %v858
    %v861 = vlaneseq
    %v862 = vshrl.u32 %v861, 7
    %v863 = vsub.s32 5, %v862
    %v864 = vrot.slane %v634, %v863
    %v865 = vadd.f32 %v859, %v864
    %v866 = vadd.f32 %v860, %v864
    %v867 = vmax.f32 %v865, 0.0
    %v868 = vmax.f32 %v866, 0.0
    %v869 = vadd.f32 %v597, %v867
    %v870 = vadd.f32 %v598, %v868
    %s871 = scalar_lea.vmem [#allocation2], 384
    %v872 = vld [vmem:[%s871] sm:$0xff]
    %v873 = vld [vmem:[%s871 + $0x8] sm:$0xff]
    %v874 = vld [vmem:[%s871 + $0x10] sm:$0xff]
    %v875 = vld [vmem:[%s871 + $0x18] sm:$0xff]
    %v876 = vld [vmem:[%s871 + $0x20] sm:$0xff]
    %v877 = vld [vmem:[%s871 + $0x28] sm:$0xff]
    %v878 = vld [vmem:[%s871 + $0x30] sm:$0xff]
    %v879 = vld [vmem:[%s871 + $0x38] sm:$0xff]
    %v880 = vld [vmem:[%s871 + $0x40] sm:$0xff]
    %v881 = vld [vmem:[%s871 + $0x48] sm:$0xff]
    %v882 = vld [vmem:[%s871 + $0x50] sm:$0xff]
    %v883 = vld [vmem:[%s871 + $0x58] sm:$0xff]
    %v884 = vld [vmem:[%s871 + $0x60] sm:$0xff]
    %v885 = vld [vmem:[%s871 + $0x68] sm:$0xff]
    %v886 = vld [vmem:[%s871 + $0x70] sm:$0xff]
    %v887 = vld [vmem:[%s871 + $0x78] sm:$0xff]
    %s888 = scalar_lea.vmem [#allocation4], 384
    %v889 = vld [vmem:[%s888] sm:$0xff]
    %v890 = vld [vmem:[%s888 + $0x8] sm:$0xff]
    %v891 = vld [vmem:[%s888 + $0x10] sm:$0xff]
    %v892 = vld [vmem:[%s888 + $0x18] sm:$0xff]
    %v893 = vld [vmem:[%s888 + $0x20] sm:$0xff]
    %v894 = vld [vmem:[%s888 + $0x28] sm:$0xff]
    %v895 = vld [vmem:[%s888 + $0x30] sm:$0xff]
    %v896 = vld [vmem:[%s888 + $0x38] sm:$0xff]
    %v897 = vld [vmem:[%s888 + $0x40] sm:$0xff]
    %v898 = vld [vmem:[%s888 + $0x48] sm:$0xff]
    %v899 = vld [vmem:[%s888 + $0x50] sm:$0xff]
    %v900 = vld [vmem:[%s888 + $0x58] sm:$0xff]
    %v901 = vld [vmem:[%s888 + $0x60] sm:$0xff]
    %v902 = vld [vmem:[%s888 + $0x68] sm:$0xff]
    %v903 = vld [vmem:[%s888 + $0x70] sm:$0xff]
    %v904 = vld [vmem:[%s888 + $0x78] sm:$0xff]
    %s905 = scalar_lea.vmem %s3, 24
    %v906 = vld [vmem:[%s905] sm:$0xff]
    %v907 = vlaneseq
    %v908 = vshrl.u32 %v907, 7
    %v909 = vsub.s32 0, %v908
    %v910 = vrot.slane %v906, %v909
    %911 = vmatprep.subr.mxu0 0.0
    %912 = vmatpush1.msra.mxu0 %v872
    %913 = vmatprep.subr.mxu0 0.0
    %914 = vmatpush1.msra.mxu0 %v873
    %915 = vmatprep.subr.mxu0 0.0
    %916 = vmatpush1.msra.mxu0 %v874
    %917 = vmatprep.subr.mxu0 0.0
    %918 = vmatpush1.msra.mxu0 %v875
    %919 = vmatprep.subr.mxu0 0.0
    %920 = vmatpush1.msra.mxu0 %v876
    %921 = vmatprep.subr.mxu0 0.0
    %922 = vmatpush1.msra.mxu0 %v877
    %923 = vmatprep.subr.mxu0 0.0
    %924 = vmatpush1.msra.mxu0 %v878
    %925 = vmatprep.subr.mxu0 0.0
    %926 = vmatpush1.msra.mxu0 %v879
    %927 = vmatprep.subr.mxu0 0.0
    %928 = vmatpush1.msra.mxu0 %v880
    %929 = vmatprep.subr.mxu0 0.0
    %930 = vmatpush1.msra.mxu0 %v881
    %931 = vmatprep.subr.mxu0 0.0
    %932 = vmatpush1.msra.mxu0 %v882
    %933 = vmatprep.subr.mxu0 0.0
    %934 = vmatpush1.msra.mxu0 %v883
    %935 = vmatprep.subr.mxu0 0.0
    %936 = vmatpush1.msra.mxu0 %v884
    %937 = vmatprep.subr.mxu0 0.0
    %938 = vmatpush1.msra.mxu0 %v885
    %939 = vmatprep.subr.mxu0 0.0
    %940 = vmatpush1.msra.mxu0 %v886
    %941 = vmatprep.subr.mxu0 0.0
    %942 = vmatpush1.msra.mxu0 %v887
    %943 = vmatprep.subr.mxu0 0.0
    %944 = vmatpush1.msra.mxu0 0.0
    %945 = vmatprep.subr.mxu0 0.0
    %946 = vmatpush1.msra.mxu0 0.0
    %947 = vmatprep.subr.mxu0 0.0
    %948 = vmatpush1.msra.mxu0 0.0
    %949 = vmatprep.subr.mxu0 0.0
    %950 = vmatpush1.msra.mxu0 0.0
    %951 = vmatprep.subr.mxu0 0.0
    %952 = vmatpush1.msra.mxu0 0.0
    %953 = vmatprep.subr.mxu0 0.0
    %954 = vmatpush1.msra.mxu0 0.0
    %955 = vmatprep.subr.mxu0 0.0
    %956 = vmatpush1.msra.mxu0 0.0
    %957 = vmatprep.subr.mxu0 0.0
    %958 = vmatpush1.msra.mxu0 0.0
    %959 = vmatprep.subr.mxu0 0.0
    %960 = vmatpush1.msra.mxu0 0.0
    %961 = vmatprep.subr.mxu0 0.0
    %962 = vmatpush1.msra.mxu0 0.0
    %963 = vmatprep.subr.mxu0 0.0
    %964 = vmatpush1.msra.mxu0 0.0
    %965 = vmatprep.subr.mxu0 0.0
    %966 = vmatpush1.msra.mxu0 0.0
    %967 = vmatprep.subr.mxu0 0.0
    %968 = vmatpush1.msra.mxu0 0.0
    %969 = vmatprep.subr.mxu0 0.0
    %970 = vmatpush1.msra.mxu0 0.0
    %971 = vmatprep.subr.mxu0 0.0
    %972 = vmatpush1.msra.mxu0 0.0
    %973 = vmatprep.subr.mxu0 0.0
    %974 = vmatpush1.msra.mxu0 0.0
    %975 = vmatprep.mubr.f32.mxu0 0.0
    %976 = vmatmul.mubr.f32.gmra.mrb[0].mxu0 %v869
    %v977 = vpop.f32.mrb[0].mxu0
    %v978 = vadd.f32 %v910, %v977
    %v979 = vpop.f32.mrb[0].mxu0
    %980 = vmatprep.mubr.f32.mxu0 0.0
    %981 = vmatmul.mubr.f32.gmra.mrb[0].mxu0 %v870
    %v982 = vpop.f32.mrb[0].mxu0
    %v983 = vadd.f32 %v910, %v982
    %v984 = vpop.f32.mrb[0].mxu0
    %985 = vdwg.mxu0
    %986 = vadd.xlane.f32.xlu0 %v978
    %v987 = vpop.xlane.xlu0 %986
    %988 = vadd.xlane.f32.xlu0 %v983
    %v989 = vpop.xlane.xlu0 %988
    %v990 = vmul.f32 %v987, 0.03125
    %v991 = vmul.f32 %v989, 0.03125
    %v992 = vsub.f32 %v978, %v990
    %v993 = vsub.f32 %v983, %v991
    %v994 = vmul.f32 %v992, %v992
    %v995 = vmul.f32 %v993, %v993
    %v996 = vsel %vm179, %v994, 0.0
    %v997 = vsel %vm179, %v995, 0.0
    %998 = vadd.xlane.f32.xlu0 %v996
    %v999 = vpop.xlane.xlu0 %998
    %1000 = vadd.xlane.f32.xlu0 %v997
    %v1001 = vpop.xlane.xlu0 %1000
    %v1002 = vmul.f32 %v999, 0.03125
    %v1003 = vmul.f32 %v1001, 0.03125
    %v1004 = vadd.f32 %v1002, 1e-05
    %v1005 = vadd.f32 %v1003, 1e-05
    %v1006 = vrsqrt.pop %v1004
    %v1007 = vrsqrt.pop %v1005
    %v1008 = vmul.f32 %v992, %v1006
    %v1009 = vmul.f32 %v993, %v1007
    %v1010 = vlaneseq
    %v1011 = vshrl.u32 %v1010, 7
    %v1012 = vsub.s32 1, %v1011
    %v1013 = vrot.slane %v906, %v1012
    %v1014 = vmul.f32 %v1008, %v1013
    %v1015 = vmul.f32 %v1009, %v1013
    %v1016 = vlaneseq
    %v1017 = vshrl.u32 %v1016, 7
    %v1018 = vsub.s32 2, %v1017
    %v1019 = vrot.slane %v906, %v1018
    %v1020 = vadd.f32 %v1014, %v1019
    %v1021 = vadd.f32 %v1015, %v1019
    %v1022 = vmax.f32 %v1020, 0.0
    %v1023 = vmax.f32 %v1021, 0.0
    %v1024 = vlaneseq
    %v1025 = vshrl.u32 %v1024, 7
    %v1026 = vsub.s32 3, %v1025
    %v1027 = vrot.slane %v906, %v1026
    %1028 = vmatprep.subr.mxu0 0.0
    %1029 = vmatpush1.msra.mxu0 %v889
    %1030 = vmatprep.subr.mxu0 0.0
    %1031 = vmatpush1.msra.mxu0 %v890
    %1032 = vmatprep.subr.mxu0 0.0
    %1033 = vmatpush1.msra.mxu0 %v891
    %1034 = vmatprep.subr.mxu0 0.0
    %1035 = vmatpush1.msra.mxu0 %v892
    %1036 = vmatprep.subr.mxu0 0.0
    %1037 = vmatpush1.msra.mxu0 %v893
    %1038 = vmatprep.subr.mxu0 0.0
    %1039 = vmatpush1.msra.mxu0 %v894
    %1040 = vmatprep.subr.mxu0 0.0
    %1041 = vmatpush1.msra.mxu0 %v895
    %1042 = vmatprep.subr.mxu0 0.0
    %1043 = vmatpush1.msra.mxu0 %v896
    %1044 = vmatprep.subr.mxu0 0.0
    %1045 = vmatpush1.msra.mxu0 %v897
    %1046 = vmatprep.subr.mxu0 0.0
    %1047 = vmatpush1.msra.mxu0 %v898
    %1048 = vmatprep.subr.mxu0 0.0
    %1049 = vmatpush1.msra.mxu0 %v899
    %1050 = vmatprep.subr.mxu0 0.0
    %1051 = vmatpush1.msra.mxu0 %v900
    %1052 = vmatprep.subr.mxu0 0.0
    %1053 = vmatpush1.msra.mxu0 %v901
    %1054 = vmatprep.subr.mxu0 0.0
    %1055 = vmatpush1.msra.mxu0 %v902
    %1056 = vmatprep.subr.mxu0 0.0
    %1057 = vmatpush1.msra.mxu0 %v903
    %1058 = vmatprep.subr.mxu0 0.0
    %1059 = vmatpush1.msra.mxu0 %v904
    %1060 = vmatprep.subr.mxu0 0.0
    %1061 = vmatpush1.msra.mxu0 0.0
    %1062 = vmatprep.subr.mxu0 0.0
    %1063 = vmatpush1.msra.mxu0 0.0
    %1064 = vmatprep.subr.mxu0 0.0
    %1065 = vmatpush1.msra.mxu0 0.0
    %1066 = vmatprep.subr.mxu0 0.0
    %1067 = vmatpush1.msra.mxu0 0.0
    %1068 = vmatprep.subr.mxu0 0.0
    %1069 = vmatpush1.msra.mxu0 0.0
    %1070 = vmatprep.subr.mxu0 0.0
    %1071 = vmatpush1.msra.mxu0 0.0
    %1072 = vmatprep.subr.mxu0 0.0
    %1073 = vmatpush1.msra.mxu0 0.0
    %1074 = vmatprep.subr.mxu0 0.0
    %1075 = vmatpush1.msra.mxu0 0.0
    %1076 = vmatprep.subr.mxu0 0.0
    %1077 = vmatpush1.msra.mxu0 0.0
    %1078 = vmatprep.subr.mxu0 0.0
    %1079 = vmatpush1.msra.mxu0 0.0
    %1080 = vmatprep.subr.mxu0 0.0
    %1081 = vmatpush1.msra.mxu0 0.0
    %1082 = vmatprep.subr.mxu0 0.0
    %1083 = vmatpush1.msra.mxu0 0.0
    %1084 = vmatprep.subr.mxu0 0.0
    %1085 = vmatpush1.msra.mxu0 0.0
    %1086 = vmatprep.subr.mxu0 0.0
    %1087 = vmatpush1.msra.mxu0 0.0
    %1088 = vmatprep.subr.mxu0 0.0
    %1089 = vmatpush1.msra.mxu0 0.0
    %1090 = vmatprep.subr.mxu0 0.0
    %1091 = vmatpush1.msra.mxu0 0.0
    %1092 = vmatprep.mubr.f32.mxu0 0.0
    %1093 = vmatmul.mubr.f32.gmra.mrb[0].mxu0 %v1022
    %v1094 = vpop.f32.mrb[0].mxu0
    %v1095 = vadd.f32 %v1027, %v1094
    %v1096 = vpop.f32.mrb[0].mxu0
    %1097 = vmatprep.mubr.f32.mxu0 0.0
    %1098 = vmatmul.mubr.f32.gmra.mrb[0].mxu0 %v1023
    %v1099 = vpop.f32.mrb[0].mxu0
    %v1100 = vadd.f32 %v1027, %v1099
    %v1101 = vpop.f32.mrb[0].mxu0
    %1102 = vdwg.mxu0
    %1103 = vadd.xlane.f32.xlu0 %v1095
    %v1104 = vpop.xlane.xlu0 %1103
    %1105 = vadd.xlane.f32.xlu0 %v1100
    %v1106 = vpop.xlane.xlu0 %1105
    %v1107 = vmul.f32 %v1104, 0.03125
    %v1108 = vmul.f32 %v1106, 0.03125
    %v1109 = vsub.f32 %v1095, %v1107
    %v1110 = vsub.f32 %v1100, %v1108
    %v1111 = vmul.f32 %v1109, %v1109
    %v1112 = vmul.f32 %v1110, %v1110
    %v1113 = vsel %vm179, %v1111, 0.0
    %v1114 = vsel %vm179, %v1112, 0.0
    %1115 = vadd.xlane.f32.xlu0 %v1113
    %v1116 = vpop.xlane.xlu0 %1115
    %1117 = vadd.xlane.f32.xlu0 %v1114
    %v1118 = vpop.xlane.xlu0 %1117
    %v1119 = vmul.f32 %v1116, 0.03125
    %v1120 = vmul.f32 %v1118, 0.03125
    %v1121 = vadd.f32 %v1119, 1e-05
    %v1122 = vadd.f32 %v1120, 1e-05
    %v1123 = vrsqrt.pop %v1121
    %v1124 = vrsqrt.pop %v1122
    %v1125 = vmul.f32 %v1109, %v1123
    %v1126 = vmul.f32 %v1110, %v1124
    %v1127 = vlaneseq
    %v1128 = vshrl.u32 %v1127, 7
    %v1129 = vsub.s32 4, %v1128
    %v1130 = vrot.slane %v906, %v1129
    %v1131 = vmul.f32 %v1125, %v1130
    %v1132 = vmul.f32 %v1126, %v1130
    %v1133 = vlaneseq
    %v1134 = vshrl.u32 %v1133, 7
    %v1135 = vsub.s32 5, %v1134
    %v1136 = vrot.slane %v906, %v1135
    %v1137 = vadd.f32 %v1131, %v1136
    %v1138 = vadd.f32 %v1132, %v1136
    %v1139 = vmax.f32 %v1137, 0.0
    %v1140 = vmax.f32 %v1138, 0.0
    %v1141 = vadd.f32 %v869, %v1139
    %v1142 = vadd.f32 %v870, %v1140
    %s1143 = scalar_lea.vmem [#allocation2], 512
    %v1144 = vld [vmem:[%s1143] sm:$0xff]
    %v1145 = vld [vmem:[%s1143 + $0x8] sm:$0xff]
    %v1146 = vld [vmem:[%s1143 + $0x10] sm:$0xff]
    %v1147 = vld [vmem:[%s1143 + $0x18] sm:$0xff]
    %v1148 = vld [vmem:[%s1143 + $0x20] sm:$0xff]
    %v1149 = vld [vmem:[%s1143 + $0x28] sm:$0xff]
    %v1150 = vld [vmem:[%s1143 + $0x30] sm:$0xff]
    %v1151 = vld [vmem:[%s1143 + $0x38] sm:$0xff]
    %v1152 = vld [vmem:[%s1143 + $0x40] sm:$0xff]
    %v1153 = vld [vmem:[%s1143 + $0x48] sm:$0xff]
    %v1154 = vld [vmem:[%s1143 + $0x50] sm:$0xff]
    %v1155 = vld [vmem:[%s1143 + $0x58] sm:$0xff]
    %v1156 = vld [vmem:[%s1143 + $0x60] sm:$0xff]
    %v1157 = vld [vmem:[%s1143 + $0x68] sm:$0xff]
    %v1158 = vld [vmem:[%s1143 + $0x70] sm:$0xff]
    %v1159 = vld [vmem:[%s1143 + $0x78] sm:$0xff]
    %s1160 = scalar_lea.vmem [#allocation4], 512
    %v1161 = vld [vmem:[%s1160] sm:$0xff]
    %v1162 = vld [vmem:[%s1160 + $0x8] sm:$0xff]
    %v1163 = vld [vmem:[%s1160 + $0x10] sm:$0xff]
    %v1164 = vld [vmem:[%s1160 + $0x18] sm:$0xff]
    %v1165 = vld [vmem:[%s1160 + $0x20] sm:$0xff]
    %v1166 = vld [vmem:[%s1160 + $0x28] sm:$0xff]
    %v1167 = vld [vmem:[%s1160 + $0x30] sm:$0xff]
    %v1168 = vld [vmem:[%s1160 + $0x38] sm:$0xff]
    %v1169 = vld [vmem:[%s1160 + $0x40] sm:$0xff]
    %v1170 = vld [vmem:[%s1160 + $0x48] sm:$0xff]
    %v1171 = vld [vmem:[%s1160 + $0x50] sm:$0xff]
    %v1172 = vld [vmem:[%s1160 + $0x58] sm:$0xff]
    %v1173 = vld [vmem:[%s1160 + $0x60] sm:$0xff]
    %v1174 = vld [vmem:[%s1160 + $0x68] sm:$0xff]
    %v1175 = vld [vmem:[%s1160 + $0x70] sm:$0xff]
    %v1176 = vld [vmem:[%s1160 + $0x78] sm:$0xff]
    %s1177 = scalar_lea.vmem %s3, 32
    %v1178 = vld [vmem:[%s1177] sm:$0xff]
    %v1179 = vlaneseq
    %v1180 = vshrl.u32 %v1179, 7
    %v1181 = vsub.s32 0, %v1180
    %v1182 = vrot.slane %v1178, %v1181
    %1183 = vmatprep.subr.mxu0 0.0
    %1184 = vmatpush1.msra.mxu0 %v1144
    %1185 = vmatprep.subr.mxu0 0.0
    %1186 = vmatpush1.msra.mxu0 %v1145
    %1187 = vmatprep.subr.mxu0 0.0
    %1188 = vmatpush1.msra.mxu0 %v1146
    %1189 = vmatprep.subr.mxu0 0.0
    %1190 = vmatpush1.msra.mxu0 %v1147
    %1191 = vmatprep.subr.mxu0 0.0
    %1192 = vmatpush1.msra.mxu0 %v1148
    %1193 = vmatprep.subr.mxu0 0.0
    %1194 = vmatpush1.msra.mxu0 %v1149
    %1195 = vmatprep.subr.mxu0 0.0
    %1196 = vmatpush1.msra.mxu0 %v1150
    %1197 = vmatprep.subr.mxu0 0.0
    %1198 = vmatpush1.msra.mxu0 %v1151
    %1199 = vmatprep.subr.mxu0 0.0
    %1200 = vmatpush1.msra.mxu0 %v1152
    %1201 = vmatprep.subr.mxu0 0.0
    %1202 = vmatpush1.msra.mxu0 %v1153
    %1203 = vmatprep.subr.mxu0 0.0
    %1204 = vmatpush1.msra.mxu0 %v1154
    %1205 = vmatprep.subr.mxu0 0.0
    %1206 = vmatpush1.msra.mxu0 %v1155
    %1207 = vmatprep.subr.mxu0 0.0
    %1208 = vmatpush1.msra.mxu0 %v1156
    %1209 = vmatprep.subr.mxu0 0.0
    %1210 = vmatpush1.msra.mxu0 %v1157
    %1211 = vmatprep.subr.mxu0 0.0
    %1212 = vmatpush1.msra.mxu0 %v1158
    %1213 = vmatprep.subr.mxu0 0.0
    %1214 = vmatpush1.msra.mxu0 %v1159
    %1215 = vmatprep.subr.mxu0 0.0
    %1216 = vmatpush1.msra.mxu0 0.0
    %1217 = vmatprep.subr.mxu0 0.0
    %1218 = vmatpush1.msra.mxu0 0.0
    %1219 = vmatprep.subr.mxu0 0.0
    %1220 = vmatpush1.msra.mxu0 0.0
    %1221 = vmatprep.subr.mxu0 0.0
    %1222 = vmatpush1.msra.mxu0 0.0
    %1223 = vmatprep.subr.mxu0 0.0
    %1224 = vmatpush1.msra.mxu0 0.0
    %1225 = vmatprep.subr.mxu0 0.0
    %1226 = vmatpush1.msra.mxu0 0.0
    %1227 = vmatprep.subr.mxu0 0.0
    %1228 = vmatpush1.msra.mxu0 0.0
    %1229 = vmatprep.subr.mxu0 0.0
    %1230 = vmatpush1.msra.mxu0 0.0
    %1231 = vmatprep.subr.mxu0 0.0
    %1232 = vmatpush1.msra.mxu0 0.0
    %1233 = vmatprep.subr.mxu0 0.0
    %1234 = vmatpush1.msra.mxu0 0.0
    %1235 = vmatprep.subr.mxu0 0.0
    %1236 = vmatpush1.msra.mxu0 0.0
    %1237 = vmatprep.subr.mxu0 0.0
    %1238 = vmatpush1.msra.mxu0 0.0
    %1239 = vmatprep.subr.mxu0 0.0
    %1240 = vmatpush1.msra.mxu0 0.0
    %1241 = vmatprep.subr.mxu0 0.0
    %1242 = vmatpush1.msra.mxu0 0.0
    %1243 = vmatprep.subr.mxu0 0.0
    %1244 = vmatpush1.msra.mxu0 0.0
    %1245 = vmatprep.subr.mxu0 0.0
    %1246 = vmatpush1.msra.mxu0 0.0
    %1247 = vmatprep.mubr.f32.mxu0 0.0
    %1248 = vmatmul.mubr.f32.gmra.mrb[0].mxu0 %v1141
    %v1249 = vpop.f32.mrb[0].mxu0
    %v1250 = vadd.f32 %v1182, %v1249
    %v1251 = vpop.f32.mrb[0].mxu0
    %1252 = vmatprep.mubr.f32.mxu0 0.0
    %1253 = vmatmul.mubr.f32.gmra.mrb[0].mxu0 %v1142
    %v1254 = vpop.f32.mrb[0].mxu0
    %v1255 = vadd.f32 %v1182, %v1254
    %v1256 = vpop.f32.mrb[0].mxu0
    %1257 = vdwg.mxu0
    %1258 = vadd.xlane.f32.xlu0 %v1250
    %v1259 = vpop.xlane.xlu0 %1258
    %1260 = vadd.xlane.f32.xlu0 %v1255
    %v1261 = vpop.xlane.xlu0 %1260
    %v1262 = vmul.f32 %v1259, 0.03125
    %v1263 = vmul.f32 %v1261, 0.03125
    %v1264 = vsub.f32 %v1250, %v1262
    %v1265 = vsub.f32 %v1255, %v1263
    %v1266 = vmul.f32 %v1264, %v1264
    %v1267 = vmul.f32 %v1265, %v1265
    %v1268 = vsel %vm179, %v1266, 0.0
    %v1269 = vsel %vm179, %v1267, 0.0
    %1270 = vadd.xlane.f32.xlu0 %v1268
    %v1271 = vpop.xlane.xlu0 %1270
    %1272 = vadd.xlane.f32.xlu0 %v1269
    %v1273 = vpop.xlane.xlu0 %1272
    %v1274 = vmul.f32 %v1271, 0.03125
    %v1275 = vmul.f32 %v1273, 0.03125
    %v1276 = vadd.f32 %v1274, 1e-05
    %v1277 = vadd.f32 %v1275, 1e-05
    %v1278 = vrsqrt.pop %v1276
    %v1279 = vrsqrt.pop %v1277
    %v1280 = vmul.f32 %v1264, %v1278
    %v1281 = vmul.f32 %v1265, %v1279
    %v1282 = vlaneseq
    %v1283 = vshrl.u32 %v1282, 7
    %v1284 = vsub.s32 1, %v1283
    %v1285 = vrot.slane %v1178, %v1284
    %v1286 = vmul.f32 %v1280, %v1285
    %v1287 = vmul.f32 %v1281, %v1285
    %v1288 = vlaneseq
    %v1289 = vshrl.u32 %v1288, 7
    %v1290 = vsub.s32 2, %v1289
    %v1291 = vrot.slane %v1178, %v1290
    %v1292 = vadd.f32 %v1286, %v1291
    %v1293 = vadd.f32 %v1287, %v1291
    %v1294 = vmax.f32 %v1292, 0.0
    %v1295 = vmax.f32 %v1293, 0.0
    %v1296 = vlaneseq
    %v1297 = vshrl.u32 %v1296, 7
    %v1298 = vsub.s32 3, %v1297
    %v1299 = vrot.slane %v1178, %v1298
    %1300 = vmatprep.subr.mxu0 0.0
    %1301 = vmatpush1.msra.mxu0 %v1161
    %1302 = vmatprep.subr.mxu0 0.0
    %1303 = vmatpush1.msra.mxu0 %v1162
    %1304 = vmatprep.subr.mxu0 0.0
    %1305 = vmatpush1.msra.mxu0 %v1163
    %1306 = vmatprep.subr.mxu0 0.0
    %1307 = vmatpush1.msra.mxu0 %v1164
    %1308 = vmatprep.subr.mxu0 0.0
    %1309 = vmatpush1.msra.mxu0 %v1165
    %1310 = vmatprep.subr.mxu0 0.0
    %1311 = vmatpush1.msra.mxu0 %v1166
    %1312 = vmatprep.subr.mxu0 0.0
    %1313 = vmatpush1.msra.mxu0 %v1167
    %1314 = vmatprep.subr.mxu0 0.0
    %1315 = vmatpush1.msra.mxu0 %v1168
    %1316 = vmatprep.subr.mxu0 0.0
    %1317 = vmatpush1.msra.mxu0 %v1169
    %1318 = vmatprep.subr.mxu0 0.0
    %1319 = vmatpush1.msra.mxu0 %v1170
    %1320 = vmatprep.subr.mxu0 0.0
    %1321 = vmatpush1.msra.mxu0 %v1171
    %1322 = vmatprep.subr.mxu0 0.0
    %1323 = vmatpush1.msra.mxu0 %v1172
    %1324 = vmatprep.subr.mxu0 0.0
    %1325 = vmatpush1.msra.mxu0 %v1173
    %1326 = vmatprep.subr.mxu0 0.0
    %1327 = vmatpush1.msra.mxu0 %v1174
    %1328 = vmatprep.subr.mxu0 0.0
    %1329 = vmatpush1.msra.mxu0 %v1175
    %1330 = vmatprep.subr.mxu0 0.0
    %1331 = vmatpush1.msra.mxu0 %v1176
    %1332 = vmatprep.subr.mxu0 0.0
    %1333 = vmatpush1.msra.mxu0 0.0
    %1334 = vmatprep.subr.mxu0 0.0
    %1335 = vmatpush1.msra.mxu0 0.0
    %1336 = vmatprep.subr.mxu0 0.0
    %1337 = vmatpush1.msra.mxu0 0.0
    %1338 = vmatprep.subr.mxu0 0.0
    %1339 = vmatpush1.msra.mxu0 0.0
    %1340 = vmatprep.subr.mxu0 0.0
    %1341 = vmatpush1.msra.mxu0 0.0
    %1342 = vmatprep.subr.mxu0 0.0
    %1343 = vmatpush1.msra.mxu0 0.0
    %1344 = vmatprep.subr.mxu0 0.0
    %1345 = vmatpush1.msra.mxu0 0.0
    %1346 = vmatprep.subr.mxu0 0.0
    %1347 = vmatpush1.msra.mxu0 0.0
    %1348 = vmatprep.subr.mxu0 0.0
    %1349 = vmatpush1.msra.mxu0 0.0
    %1350 = vmatprep.subr.mxu0 0.0
    %1351 = vmatpush1.msra.mxu0 0.0
    %1352 = vmatprep.subr.mxu0 0.0
    %1353 = vmatpush1.msra.mxu0 0.0
    %1354 = vmatprep.subr.mxu0 0.0
    %1355 = vmatpush1.msra.mxu0 0.0
    %1356 = vmatprep.subr.mxu0 0.0
    %1357 = vmatpush1.msra.mxu0 0.0
    %1358 = vmatprep.subr.mxu0 0.0
    %1359 = vmatpush1.msra.mxu0 0.0
    %1360 = vmatprep.subr.mxu0 0.0
    %1361 = vmatpush1.msra.mxu0 0.0
    %1362 = vmatprep.subr.mxu0 0.0
    %1363 = vmatpush1.msra.mxu0 0.0
    %1364 = vmatprep.mubr.f32.mxu0 0.0
    %1365 = vmatmul.mubr.f32.gmra.mrb[0].mxu0 %v1294
    %v1366 = vpop.f32.mrb[0].mxu0
    %v1367 = vadd.f32 %v1299, %v1366
    %v1368 = vpop.f32.mrb[0].mxu0
    %1369 = vmatprep.mubr.f32.mxu0 0.0
    %1370 = vmatmul.mubr.f32.gmra.mrb[0].mxu0 %v1295
    %v1371 = vpop.f32.mrb[0].mxu0
    %v1372 = vadd.f32 %v1299, %v1371
    %v1373 = vpop.f32.mrb[0].mxu0
    %1374 = vdwg.mxu0
    %1375 = vadd.xlane.f32.xlu0 %v1367
    %v1376 = vpop.xlane.xlu0 %1375
    %1377 = vadd.xlane.f32.xlu0 %v1372
    %v1378 = vpop.xlane.xlu0 %1377
    %v1379 = vmul.f32 %v1376, 0.03125
    %v1380 = vmul.f32 %v1378, 0.03125
    %v1381 = vsub.f32 %v1367, %v1379
    %v1382 = vsub.f32 %v1372, %v1380
    %v1383 = vmul.f32 %v1381, %v1381
    %v1384 = vmul.f32 %v1382, %v1382
    %v1385 = vsel %vm179, %v1383, 0.0
    %v1386 = vsel %vm179, %v1384, 0.0
    %1387 = vadd.xlane.f32.xlu0 %v1385
    %v1388 = vpop.xlane.xlu0 %1387
    %1389 = vadd.xlane.f32.xlu0 %v1386
    %v1390 = vpop.xlane.xlu0 %1389
    %v1391 = vmul.f32 %v1388, 0.03125
    %v1392 = vmul.f32 %v1390, 0.03125
    %v1393 = vadd.f32 %v1391, 1e-05
    %v1394 = vadd.f32 %v1392, 1e-05
    %v1395 = vrsqrt.pop %v1393
    %v1396 = vrsqrt.pop %v1394
    %v1397 = vmul.f32 %v1381, %v1395
    %v1398 = vmul.f32 %v1382, %v1396
    %v1399 = vlaneseq
    %v1400 = vshrl.u32 %v1399, 7
    %v1401 = vsub.s32 4, %v1400
    %v1402 = vrot.slane %v1178, %v1401
    %v1403 = vmul.f32 %v1397, %v1402
    %v1404 = vmul.f32 %v1398, %v1402
    %v1405 = vlaneseq
    %v1406 = vshrl.u32 %v1405, 7
    %v1407 = vsub.s32 5, %v1406
    %v1408 = vrot.slane %v1178, %v1407
    %v1409 = vadd.f32 %v1403, %v1408
    %v1410 = vadd.f32 %v1404, %v1408
    %v1411 = vmax.f32 %v1409, 0.0
    %v1412 = vmax.f32 %v1410, 0.0
    %v1413 = vadd.f32 %v1141, %v1411
    %v1414 = vadd.f32 %v1142, %v1412
    %s1415 = scalar_lea.vmem [#allocation2], 640
    %v1416 = vld [vmem:[%s1415] sm:$0xff]
    %v1417 = vld [vmem:[%s1415 + $0x8] sm:$0xff]
    %v1418 = vld [vmem:[%s1415 + $0x10] sm:$0xff]
    %v1419 = vld [vmem:[%s1415 + $0x18] sm:$0xff]
    %v1420 = vld [vmem:[%s1415 + $0x20] sm:$0xff]
    %v1421 = vld [vmem:[%s1415 + $0x28] sm:$0xff]
    %v1422 = vld [vmem:[%s1415 + $0x30] sm:$0xff]
    %v1423 = vld [vmem:[%s1415 + $0x38] sm:$0xff]
    %v1424 = vld [vmem:[%s1415 + $0x40] sm:$0xff]
    %v1425 = vld [vmem:[%s1415 + $0x48] sm:$0xff]
    %v1426 = vld [vmem:[%s1415 + $0x50] sm:$0xff]
    %v1427 = vld [vmem:[%s1415 + $0x58] sm:$0xff]
    %v1428 = vld [vmem:[%s1415 + $0x60] sm:$0xff]
    %v1429 = vld [vmem:[%s1415 + $0x68] sm:$0xff]
    %v1430 = vld [vmem:[%s1415 + $0x70] sm:$0xff]
    %v1431 = vld [vmem:[%s1415 + $0x78] sm:$0xff]
    %s1432 = scalar_lea.vmem [#allocation4], 640
    %v1433 = vld [vmem:[%s1432] sm:$0xff]
    %v1434 = vld [vmem:[%s1432 + $0x8] sm:$0xff]
    %v1435 = vld [vmem:[%s1432 + $0x10] sm:$0xff]
    %v1436 = vld [vmem:[%s1432 + $0x18] sm:$0xff]
    %v1437 = vld [vmem:[%s1432 + $0x20] sm:$0xff]
    %v1438 = vld [vmem:[%s1432 + $0x28] sm:$0xff]
    %v1439 = vld [vmem:[%s1432 + $0x30] sm:$0xff]
    %v1440 = vld [vmem:[%s1432 + $0x38] sm:$0xff]
    %v1441 = vld [vmem:[%s1432 + $0x40] sm:$0xff]
    %v1442 = vld [vmem:[%s1432 + $0x48] sm:$0xff]
    %v1443 = vld [vmem:[%s1432 + $0x50] sm:$0xff]
    %v1444 = vld [vmem:[%s1432 + $0x58] sm:$0xff]
    %v1445 = vld [vmem:[%s1432 + $0x60] sm:$0xff]
    %v1446 = vld [vmem:[%s1432 + $0x68] sm:$0xff]
    %v1447 = vld [vmem:[%s1432 + $0x70] sm:$0xff]
    %v1448 = vld [vmem:[%s1432 + $0x78] sm:$0xff]
    %s1449 = scalar_lea.vmem %s3, 40
    %v1450 = vld [vmem:[%s1449] sm:$0xff]
    %v1451 = vlaneseq
    %v1452 = vshrl.u32 %v1451, 7
    %v1453 = vsub.s32 0, %v1452
    %v1454 = vrot.slane %v1450, %v1453
    %1455 = vmatprep.subr.mxu0 0.0
    %1456 = vmatpush1.msra.mxu0 %v1416
    %1457 = vmatprep.subr.mxu0 0.0
    %1458 = vmatpush1.msra.mxu0 %v1417
    %1459 = vmatprep.subr.mxu0 0.0
    %1460 = vmatpush1.msra.mxu0 %v1418
    %1461 = vmatprep.subr.mxu0 0.0
    %1462 = vmatpush1.msra.mxu0 %v1419
    %1463 = vmatprep.subr.mxu0 0.0
    %1464 = vmatpush1.msra.mxu0 %v1420
    %1465 = vmatprep.subr.mxu0 0.0
    %1466 = vmatpush1.msra.mxu0 %v1421
    %1467 = vmatprep.subr.mxu0 0.0
    %1468 = vmatpush1.msra.mxu0 %v1422
    %1469 = vmatprep.subr.mxu0 0.0
    %1470 = vmatpush1.msra.mxu0 %v1423
    %1471 = vmatprep.subr.mxu0 0.0
    %1472 = vmatpush1.msra.mxu0 %v1424
    %1473 = vmatprep.subr.mxu0 0.0
    %1474 = vmatpush1.msra.mxu0 %v1425
    %1475 = vmatprep.subr.mxu0 0.0
    %1476 = vmatpush1.msra.mxu0 %v1426
    %1477 = vmatprep.subr.mxu0 0.0
    %1478 = vmatpush1.msra.mxu0 %v1427
    %1479 = vmatprep.subr.mxu0 0.0
    %1480 = vmatpush1.msra.mxu0 %v1428
    %1481 = vmatprep.subr.mxu0 0.0
    %1482 = vmatpush1.msra.mxu0 %v1429
    %1483 = vmatprep.subr.mxu0 0.0
    %1484 = vmatpush1.msra.mxu0 %v1430
    %1485 = vmatprep.subr.mxu0 0.0
    %1486 = vmatpush1.msra.mxu0 %v1431
    %1487 = vmatprep.subr.mxu0 0.0
    %1488 = vmatpush1.msra.mxu0 0.0
    %1489 = vmatprep.subr.mxu0 0.0
    %1490 = vmatpush1.msra.mxu0 0.0
    %1491 = vmatprep.subr.mxu0 0.0
    %1492 = vmatpush1.msra.mxu0 0.0
    %1493 = vmatprep.subr.mxu0 0.0
    %1494 = vmatpush1.msra.mxu0 0.0
    %1495 = vmatprep.subr.mxu0 0.0
    %1496 = vmatpush1.msra.mxu0 0.0
    %1497 = vmatprep.subr.mxu0 0.0
    %1498 = vmatpush1.msra.mxu0 0.0
    %1499 = vmatprep.subr.mxu0 0.0
    %1500 = vmatpush1.msra.mxu0 0.0
    %1501 = vmatprep.subr.mxu0 0.0
    %1502 = vmatpush1.msra.mxu0 0.0
    %1503 = vmatprep.subr.mxu0 0.0
    %1504 = vmatpush1.msra.mxu0 0.0
    %1505 = vmatprep.subr.mxu0 0.0
    %1506 = vmatpush1.msra.mxu0 0.0
    %1507 = vmatprep.subr.mxu0 0.0
    %1508 = vmatpush1.msra.mxu0 0.0
    %1509 = vmatprep.subr.mxu0 0.0
    %1510 = vmatpush1.msra.mxu0 0.0
    %1511 = vmatprep.subr.mxu0 0.0
    %1512 = vmatpush1.msra.mxu0 0.0
    %1513 = vmatprep.subr.mxu0 0.0
    %1514 = vmatpush1.msra.mxu0 0.0
    %1515 = vmatprep.subr.mxu0 0.0
    %1516 = vmatpush1.msra.mxu0 0.0
    %1517 = vmatprep.subr.mxu0 0.0
    %1518 = vmatpush1.msra.mxu0 0.0
    %1519 = vmatprep.mubr.f32.mxu0 0.0
    %1520 = vmatmul.mubr.f32.gmra.mrb[0].mxu0 %v1413
    %v1521 = vpop.f32.mrb[0].mxu0
    %v1522 = vadd.f32 %v1454, %v1521
    %v1523 = vpop.f32.mrb[0].mxu0
    %1524 = vmatprep.mubr.f32.mxu0 0.0
    %1525 = vmatmul.mubr.f32.gmra.mrb[0].mxu0 %v1414
    %v1526 = vpop.f32.mrb[0].mxu0
    %v1527 = vadd.f32 %v1454, %v1526
    %v1528 = vpop.f32.mrb[0].mxu0
    %1529 = vdwg.mxu0
    %1530 = vadd.xlane.f32.xlu0 %v1522
    %v1531 = vpop.xlane.xlu0 %1530
    %1532 = vadd.xlane.f32.xlu0 %v1527
    %v1533 = vpop.xlane.xlu0 %1532
    %v1534 = vmul.f32 %v1531, 0.03125
    %v1535 = vmul.f32 %v1533, 0.03125
    %v1536 = vsub.f32 %v1522, %v1534
    %v1537 = vsub.f32 %v1527, %v1535
    %v1538 = vmul.f32 %v1536, %v1536
    %v1539 = vmul.f32 %v1537, %v1537
    %v1540 = vsel %vm179, %v1538, 0.0
    %v1541 = vsel %vm179, %v1539, 0.0
    %1542 = vadd.xlane.f32.xlu0 %v1540
    %v1543 = vpop.xlane.xlu0 %1542
    %1544 = vadd.xlane.f32.xlu0 %v1541
    %v1545 = vpop.xlane.xlu0 %1544
    %v1546 = vmul.f32 %v1543, 0.03125
    %v1547 = vmul.f32 %v1545, 0.03125
    %v1548 = vadd.f32 %v1546, 1e-05
    %v1549 = vadd.f32 %v1547, 1e-05
    %v1550 = vrsqrt.pop %v1548
    %v1551 = vrsqrt.pop %v1549
    %v1552 = vmul.f32 %v1536, %v1550
    %v1553 = vmul.f32 %v1537, %v1551
    %v1554 = vlaneseq
    %v1555 = vshrl.u32 %v1554, 7
    %v1556 = vsub.s32 1, %v1555
    %v1557 = vrot.slane %v1450, %v1556
    %v1558 = vmul.f32 %v1552, %v1557
    %v1559 = vmul.f32 %v1553, %v1557
    %v1560 = vlaneseq
    %v1561 = vshrl.u32 %v1560, 7
    %v1562 = vsub.s32 2, %v1561
    %v1563 = vrot.slane %v1450, %v1562
    %v1564 = vadd.f32 %v1558, %v1563
    %v1565 = vadd.f32 %v1559, %v1563
    %v1566 = vmax.f32 %v1564, 0.0
    %v1567 = vmax.f32 %v1565, 0.0
    %v1568 = vlaneseq
    %v1569 = vshrl.u32 %v1568, 7
    %v1570 = vsub.s32 3, %v1569
    %v1571 = vrot.slane %v1450, %v1570
    %1572 = vmatprep.subr.mxu0 0.0
    %1573 = vmatpush1.msra.mxu0 %v1433
    %1574 = vmatprep.subr.mxu0 0.0
    %1575 = vmatpush1.msra.mxu0 %v1434
    %1576 = vmatprep.subr.mxu0 0.0
    %1577 = vmatpush1.msra.mxu0 %v1435
    %1578 = vmatprep.subr.mxu0 0.0
    %1579 = vmatpush1.msra.mxu0 %v1436
    %1580 = vmatprep.subr.mxu0 0.0
    %1581 = vmatpush1.msra.mxu0 %v1437
    %1582 = vmatprep.subr.mxu0 0.0
    %1583 = vmatpush1.msra.mxu0 %v1438
    %1584 = vmatprep.subr.mxu0 0.0
    %1585 = vmatpush1.msra.mxu0 %v1439
    %1586 = vmatprep.subr.mxu0 0.0
    %1587 = vmatpush1.msra.mxu0 %v1440
    %1588 = vmatprep.subr.mxu0 0.0
    %1589 = vmatpush1.msra.mxu0 %v1441
    %1590 = vmatprep.subr.mxu0 0.0
    %1591 = vmatpush1.msra.mxu0 %v1442
    %1592 = vmatprep.subr.mxu0 0.0
    %1593 = vmatpush1.msra.mxu0 %v1443
    %1594 = vmatprep.subr.mxu0 0.0
    %1595 = vmatpush1.msra.mxu0 %v1444
    %1596 = vmatprep.subr.mxu0 0.0
    %1597 = vmatpush1.msra.mxu0 %v1445
    %1598 = vmatprep.subr.mxu0 0.0
    %1599 = vmatpush1.msra.mxu0 %v1446
    %1600 = vmatprep.subr.mxu0 0.0
    %1601 = vmatpush1.msra.mxu0 %v1447
    %1602 = vmatprep.subr.mxu0 0.0
    %1603 = vmatpush1.msra.mxu0 %v1448
    %1604 = vmatprep.subr.mxu0 0.0
    %1605 = vmatpush1.msra.mxu0 0.0
    %1606 = vmatprep.subr.mxu0 0.0
    %1607 = vmatpush1.msra.mxu0 0.0
    %1608 = vmatprep.subr.mxu0 0.0
    %1609 = vmatpush1.msra.mxu0 0.0
    %1610 = vmatprep.subr.mxu0 0.0
    %1611 = vmatpush1.msra.mxu0 0.0
    %1612 = vmatprep.subr.mxu0 0.0
    %1613 = vmatpush1.msra.mxu0 0.0
    %1614 = vmatprep.subr.mxu0 0.0
    %1615 = vmatpush1.msra.mxu0 0.0
    %1616 = vmatprep.subr.mxu0 0.0
    %1617 = vmatpush1.msra.mxu0 0.0
    %1618 = vmatprep.subr.mxu0 0.0
    %1619 = vmatpush1.msra.mxu0 0.0
    %1620 = vmatprep.subr.mxu0 0.0
    %1621 = vmatpush1.msra.mxu0 0.0
    %1622 = vmatprep.subr.mxu0 0.0
    %1623 = vmatpush1.msra.mxu0 0.0
    %1624 = vmatprep.subr.mxu0 0.0
    %1625 = vmatpush1.msra.mxu0 0.0
    %1626 = vmatprep.subr.mxu0 0.0
    %1627 = vmatpush1.msra.mxu0 0.0
    %1628 = vmatprep.subr.mxu0 0.0
    %1629 = vmatpush1.msra.mxu0 0.0
    %1630 = vmatprep.subr.mxu0 0.0
    %1631 = vmatpush1.msra.mxu0 0.0
    %1632 = vmatprep.subr.mxu0 0.0
    %1633 = vmatpush1.msra.mxu0 0.0
    %1634 = vmatprep.subr.mxu0 0.0
    %1635 = vmatpush1.msra.mxu0 0.0
    %1636 = vmatprep.mubr.f32.mxu0 0.0
    %1637 = vmatmul.mubr.f32.gmra.mrb[0].mxu0 %v1566
    %v1638 = vpop.f32.mrb[0].mxu0
    %v1639 = vadd.f32 %v1571, %v1638
    %v1640 = vpop.f32.mrb[0].mxu0
    %1641 = vmatprep.mubr.f32.mxu0 0.0
    %1642 = vmatmul.mubr.f32.gmra.mrb[0].mxu0 %v1567
    %v1643 = vpop.f32.mrb[0].mxu0
    %v1644 = vadd.f32 %v1571, %v1643
    %v1645 = vpop.f32.mrb[0].mxu0
    %1646 = vdwg.mxu0
    %1647 = vadd.xlane.f32.xlu0 %v1639
    %v1648 = vpop.xlane.xlu0 %1647
    %1649 = vadd.xlane.f32.xlu0 %v1644
    %v1650 = vpop.xlane.xlu0 %1649
    %v1651 = vmul.f32 %v1648, 0.03125
    %v1652 = vmul.f32 %v1650, 0.03125
    %v1653 = vsub.f32 %v1639, %v1651
    %v1654 = vsub.f32 %v1644, %v1652
    %v1655 = vmul.f32 %v1653, %v1653
    %v1656 = vmul.f32 %v1654, %v1654
    %v1657 = vsel %vm179, %v1655, 0.0
    %v1658 = vsel %vm179, %v1656, 0.0
    %1659 = vadd.xlane.f32.xlu0 %v1657
    %v1660 = vpop.xlane.xlu0 %1659
    %1661 = vadd.xlane.f32.xlu0 %v1658
    %v1662 = vpop.xlane.xlu0 %1661
    %v1663 = vmul.f32 %v1660, 0.03125
    %v1664 = vmul.f32 %v1662, 0.03125
    %v1665 = vadd.f32 %v1663, 1e-05
    %v1666 = vadd.f32 %v1664, 1e-05
    %v1667 = vrsqrt.pop %v1665
    %v1668 = vrsqrt.pop %v1666
    %v1669 = vmul.f32 %v1653, %v1667
    %v1670 = vmul.f32 %v1654, %v1668
    %v1671 = vlaneseq
    %v1672 = vshrl.u32 %v1671, 7
    %v1673 = vsub.s32 4, %v1672
    %v1674 = vrot.slane %v1450, %v1673
    %v1675 = vmul.f32 %v1669, %v1674
    %v1676 = vmul.f32 %v1670, %v1674
    %v1677 = vlaneseq
    %v1678 = vshrl.u32 %v1677, 7
    %v1679 = vsub.s32 5, %v1678
    %v1680 = vrot.slane %v1450, %v1679
    %v1681 = vadd.f32 %v1675, %v1680
    %v1682 = vadd.f32 %v1676, %v1680
    %v1683 = vmax.f32 %v1681, 0.0
    %v1684 = vmax.f32 %v1682, 0.0
    %v1685 = vadd.f32 %v1413, %v1683
    %v1686 = vadd.f32 %v1414, %v1684
    %s1687 = scalar_lea.vmem [#allocation2], 768
    %v1688 = vld [vmem:[%s1687] sm:$0xff]
    %v1689 = vld [vmem:[%s1687 + $0x8] sm:$0xff]
    %v1690 = vld [vmem:[%s1687 + $0x10] sm:$0xff]
    %v1691 = vld [vmem:[%s1687 + $0x18] sm:$0xff]
    %v1692 = vld [vmem:[%s1687 + $0x20] sm:$0xff]
    %v1693 = vld [vmem:[%s1687 + $0x28] sm:$0xff]
    %v1694 = vld [vmem:[%s1687 + $0x30] sm:$0xff]
    %v1695 = vld [vmem:[%s1687 + $0x38] sm:$0xff]
    %v1696 = vld [vmem:[%s1687 + $0x40] sm:$0xff]
    %v1697 = vld [vmem:[%s1687 + $0x48] sm:$0xff]
    %v1698 = vld [vmem:[%s1687 + $0x50] sm:$0xff]
    %v1699 = vld [vmem:[%s1687 + $0x58] sm:$0xff]
    %v1700 = vld [vmem:[%s1687 + $0x60] sm:$0xff]
    %v1701 = vld [vmem:[%s1687 + $0x68] sm:$0xff]
    %v1702 = vld [vmem:[%s1687 + $0x70] sm:$0xff]
    %v1703 = vld [vmem:[%s1687 + $0x78] sm:$0xff]
    %s1704 = scalar_lea.vmem [#allocation4], 768
    %v1705 = vld [vmem:[%s1704] sm:$0xff]
    %v1706 = vld [vmem:[%s1704 + $0x8] sm:$0xff]
    %v1707 = vld [vmem:[%s1704 + $0x10] sm:$0xff]
    %v1708 = vld [vmem:[%s1704 + $0x18] sm:$0xff]
    %v1709 = vld [vmem:[%s1704 + $0x20] sm:$0xff]
    %v1710 = vld [vmem:[%s1704 + $0x28] sm:$0xff]
    %v1711 = vld [vmem:[%s1704 + $0x30] sm:$0xff]
    %v1712 = vld [vmem:[%s1704 + $0x38] sm:$0xff]
    %v1713 = vld [vmem:[%s1704 + $0x40] sm:$0xff]
    %v1714 = vld [vmem:[%s1704 + $0x48] sm:$0xff]
    %v1715 = vld [vmem:[%s1704 + $0x50] sm:$0xff]
    %v1716 = vld [vmem:[%s1704 + $0x58] sm:$0xff]
    %v1717 = vld [vmem:[%s1704 + $0x60] sm:$0xff]
    %v1718 = vld [vmem:[%s1704 + $0x68] sm:$0xff]
    %v1719 = vld [vmem:[%s1704 + $0x70] sm:$0xff]
    %v1720 = vld [vmem:[%s1704 + $0x78] sm:$0xff]
    %s1721 = scalar_lea.vmem %s3, 48
    %v1722 = vld [vmem:[%s1721] sm:$0xff]
    %v1723 = vlaneseq
    %v1724 = vshrl.u32 %v1723, 7
    %v1725 = vsub.s32 0, %v1724
    %v1726 = vrot.slane %v1722, %v1725
    %1727 = vmatprep.subr.mxu0 0.0
    %1728 = vmatpush1.msra.mxu0 %v1688
    %1729 = vmatprep.subr.mxu0 0.0
    %1730 = vmatpush1.msra.mxu0 %v1689
    %1731 = vmatprep.subr.mxu0 0.0
    %1732 = vmatpush1.msra.mxu0 %v1690
    %1733 = vmatprep.subr.mxu0 0.0
    %1734 = vmatpush1.msra.mxu0 %v1691
    %1735 = vmatprep.subr.mxu0 0.0
    %1736 = vmatpush1.msra.mxu0 %v1692
    %1737 = vmatprep.subr.mxu0 0.0
    %1738 = vmatpush1.msra.mxu0 %v1693
    %1739 = vmatprep.subr.mxu0 0.0
    %1740 = vmatpush1.msra.mxu0 %v1694
    %1741 = vmatprep.subr.mxu0 0.0
    %1742 = vmatpush1.msra.mxu0 %v1695
    %1743 = vmatprep.subr.mxu0 0.0
    %1744 = vmatpush1.msra.mxu0 %v1696
    %1745 = vmatprep.subr.mxu0 0.0
    %1746 = vmatpush1.msra.mxu0 %v1697
    %1747 = vmatprep.subr.mxu0 0.0
    %1748 = vmatpush1.msra.mxu0 %v1698
    %1749 = vmatprep.subr.mxu0 0.0
    %1750 = vmatpush1.msra.mxu0 %v1699
    %1751 = vmatprep.subr.mxu0 0.0
    %1752 = vmatpush1.msra.mxu0 %v1700
    %1753 = vmatprep.subr.mxu0 0.0
    %1754 = vmatpush1.msra.mxu0 %v1701
    %1755 = vmatprep.subr.mxu0 0.0
    %1756 = vmatpush1.msra.mxu0 %v1702
    %1757 = vmatprep.subr.mxu0 0.0
    %1758 = vmatpush1.msra.mxu0 %v1703
    %1759 = vmatprep.subr.mxu0 0.0
    %1760 = vmatpush1.msra.mxu0 0.0
    %1761 = vmatprep.subr.mxu0 0.0
    %1762 = vmatpush1.msra.mxu0 0.0
    %1763 = vmatprep.subr.mxu0 0.0
    %1764 = vmatpush1.msra.mxu0 0.0
    %1765 = vmatprep.subr.mxu0 0.0
    %1766 = vmatpush1.msra.mxu0 0.0
    %1767 = vmatprep.subr.mxu0 0.0
    %1768 = vmatpush1.msra.mxu0 0.0
    %1769 = vmatprep.subr.mxu0 0.0
    %1770 = vmatpush1.msra.mxu0 0.0
    %1771 = vmatprep.subr.mxu0 0.0
    %1772 = vmatpush1.msra.mxu0 0.0
    %1773 = vmatprep.subr.mxu0 0.0
    %1774 = vmatpush1.msra.mxu0 0.0
    %1775 = vmatprep.subr.mxu0 0.0
    %1776 = vmatpush1.msra.mxu0 0.0
    %1777 = vmatprep.subr.mxu0 0.0
    %1778 = vmatpush1.msra.mxu0 0.0
    %1779 = vmatprep.subr.mxu0 0.0
    %1780 = vmatpush1.msra.mxu0 0.0
    %1781 = vmatprep.subr.mxu0 0.0
    %1782 = vmatpush1.msra.mxu0 0.0
    %1783 = vmatprep.subr.mxu0 0.0
    %1784 = vmatpush1.msra.mxu0 0.0
    %1785 = vmatprep.subr.mxu0 0.0
    %1786 = vmatpush1.msra.mxu0 0.0
    %1787 = vmatprep.subr.mxu0 0.0
    %1788 = vmatpush1.msra.mxu0 0.0
    %1789 = vmatprep.subr.mxu0 0.0
    %1790 = vmatpush1.msra.mxu0 0.0
    %1791 = vmatprep.mubr.f32.mxu0 0.0
    %1792 = vmatmul.mubr.f32.gmra.mrb[0].mxu0 %v1685
    %v1793 = vpop.f32.mrb[0].mxu0
    %v1794 = vadd.f32 %v1726, %v1793
    %v1795 = vpop.f32.mrb[0].mxu0
    %1796 = vmatprep.mubr.f32.mxu0 0.0
    %1797 = vmatmul.mubr.f32.gmra.mrb[0].mxu0 %v1686
    %v1798 = vpop.f32.mrb[0].mxu0
    %v1799 = vadd.f32 %v1726, %v1798
    %v1800 = vpop.f32.mrb[0].mxu0
    %1801 = vdwg.mxu0
    %1802 = vadd.xlane.f32.xlu0 %v1794
    %v1803 = vpop.xlane.xlu0 %1802
    %1804 = vadd.xlane.f32.xlu0 %v1799
    %v1805 = vpop.xlane.xlu0 %1804
    %v1806 = vmul.f32 %v1803, 0.03125
    %v1807 = vmul.f32 %v1805, 0.03125
    %v1808 = vsub.f32 %v1794, %v1806
    %v1809 = vsub.f32 %v1799, %v1807
    %v1810 = vmul.f32 %v1808, %v1808
    %v1811 = vmul.f32 %v1809, %v1809
    %v1812 = vsel %vm179, %v1810, 0.0
    %v1813 = vsel %vm179, %v1811, 0.0
    %1814 = vadd.xlane.f32.xlu0 %v1812
    %v1815 = vpop.xlane.xlu0 %1814
    %1816 = vadd.xlane.f32.xlu0 %v1813
    %v1817 = vpop.xlane.xlu0 %1816
    %v1818 = vmul.f32 %v1815, 0.03125
    %v1819 = vmul.f32 %v1817, 0.03125
    %v1820 = vadd.f32 %v1818, 1e-05
    %v1821 = vadd.f32 %v1819, 1e-05
    %v1822 = vrsqrt.pop %v1820
    %v1823 = vrsqrt.pop %v1821
    %v1824 = vmul.f32 %v1808, %v1822
    %v1825 = vmul.f32 %v1809, %v1823
    %v1826 = vlaneseq
    %v1827 = vshrl.u32 %v1826, 7
    %v1828 = vsub.s32 1, %v1827
    %v1829 = vrot.slane %v1722, %v1828
    %v1830 = vmul.f32 %v1824, %v1829
    %v1831 = vmul.f32 %v1825, %v1829
    %v1832 = vlaneseq
    %v1833 = vshrl.u32 %v1832, 7
    %v1834 = vsub.s32 2, %v1833
    %v1835 = vrot.slane %v1722, %v1834
    %v1836 = vadd.f32 %v1830, %v1835
    %v1837 = vadd.f32 %v1831, %v1835
    %v1838 = vmax.f32 %v1836, 0.0
    %v1839 = vmax.f32 %v1837, 0.0
    %v1840 = vlaneseq
    %v1841 = vshrl.u32 %v1840, 7
    %v1842 = vsub.s32 3, %v1841
    %v1843 = vrot.slane %v1722, %v1842
    %1844 = vmatprep.subr.mxu0 0.0
    %1845 = vmatpush1.msra.mxu0 %v1705
    %1846 = vmatprep.subr.mxu0 0.0
    %1847 = vmatpush1.msra.mxu0 %v1706
    %1848 = vmatprep.subr.mxu0 0.0
    %1849 = vmatpush1.msra.mxu0 %v1707
    %1850 = vmatprep.subr.mxu0 0.0
    %1851 = vmatpush1.msra.mxu0 %v1708
    %1852 = vmatprep.subr.mxu0 0.0
    %1853 = vmatpush1.msra.mxu0 %v1709
    %1854 = vmatprep.subr.mxu0 0.0
    %1855 = vmatpush1.msra.mxu0 %v1710
    %1856 = vmatprep.subr.mxu0 0.0
    %1857 = vmatpush1.msra.mxu0 %v1711
    %1858 = vmatprep.subr.mxu0 0.0
    %1859 = vmatpush1.msra.mxu0 %v1712
    %1860 = vmatprep.subr.mxu0 0.0
    %1861 = vmatpush1.msra.mxu0 %v1713
    %1862 = vmatprep.subr.mxu0 0.0
    %1863 = vmatpush1.msra.mxu0 %v1714
    %1864 = vmatprep.subr.mxu0 0.0
    %1865 = vmatpush1.msra.mxu0 %v1715
    %1866 = vmatprep.subr.mxu0 0.0
    %1867 = vmatpush1.msra.mxu0 %v1716
    %1868 = vmatprep.subr.mxu0 0.0
    %1869 = vmatpush1.msra.mxu0 %v1717
    %1870 = vmatprep.subr.mxu0 0.0
    %1871 = vmatpush1.msra.mxu0 %v1718
    %1872 = vmatprep.subr.mxu0 0.0
    %1873 = vmatpush1.msra.mxu0 %v1719
    %1874 = vmatprep.subr.mxu0 0.0
    %1875 = vmatpush1.msra.mxu0 %v1720
    %1876 = vmatprep.subr.mxu0 0.0
    %1877 = vmatpush1.msra.mxu0 0.0
    %1878 = vmatprep.subr.mxu0 0.0
    %1879 = vmatpush1.msra.mxu0 0.0
    %1880 = vmatprep.subr.mxu0 0.0
    %1881 = vmatpush1.msra.mxu0 0.0
    %1882 = vmatprep.subr.mxu0 0.0
    %1883 = vmatpush1.msra.mxu0 0.0
    %1884 = vmatprep.subr.mxu0 0.0
    %1885 = vmatpush1.msra.mxu0 0.0
    %1886 = vmatprep.subr.mxu0 0.0
    %1887 = vmatpush1.msra.mxu0 0.0
    %1888 = vmatprep.subr.mxu0 0.0
    %1889 = vmatpush1.msra.mxu0 0.0
    %1890 = vmatprep.subr.mxu0 0.0
    %1891 = vmatpush1.msra.mxu0 0.0
    %1892 = vmatprep.subr.mxu0 0.0
    %1893 = vmatpush1.msra.mxu0 0.0
    %1894 = vmatprep.subr.mxu0 0.0
    %1895 = vmatpush1.msra.mxu0 0.0
    %1896 = vmatprep.subr.mxu0 0.0
    %1897 = vmatpush1.msra.mxu0 0.0
    %1898 = vmatprep.subr.mxu0 0.0
    %1899 = vmatpush1.msra.mxu0 0.0
    %1900 = vmatprep.subr.mxu0 0.0
    %1901 = vmatpush1.msra.mxu0 0.0
    %1902 = vmatprep.subr.mxu0 0.0
    %1903 = vmatpush1.msra.mxu0 0.0
    %1904 = vmatprep.subr.mxu0 0.0
    %1905 = vmatpush1.msra.mxu0 0.0
    %1906 = vmatprep.subr.mxu0 0.0
    %1907 = vmatpush1.msra.mxu0 0.0
    %1908 = vmatprep.mubr.f32.mxu0 0.0
    %1909 = vmatmul.mubr.f32.gmra.mrb[0].mxu0 %v1838
    %v1910 = vpop.f32.mrb[0].mxu0
    %v1911 = vadd.f32 %v1843, %v1910
    %v1912 = vpop.f32.mrb[0].mxu0
    %1913 = vmatprep.mubr.f32.mxu0 0.0
    %1914 = vmatmul.mubr.f32.gmra.mrb[0].mxu0 %v1839
    %v1915 = vpop.f32.mrb[0].mxu0
    %v1916 = vadd.f32 %v1843, %v1915
    %v1917 = vpop.f32.mrb[0].mxu0
    %1918 = vdwg.mxu0
    %1919 = vadd.xlane.f32.xlu0 %v1911
    %v1920 = vpop.xlane.xlu0 %1919
    %1921 = vadd.xlane.f32.xlu0 %v1916
    %v1922 = vpop.xlane.xlu0 %1921
    %v1923 = vmul.f32 %v1920, 0.03125
    %v1924 = vmul.f32 %v1922, 0.03125
    %v1925 = vsub.f32 %v1911, %v1923
    %v1926 = vsub.f32 %v1916, %v1924
    %v1927 = vmul.f32 %v1925, %v1925
    %v1928 = vmul.f32 %v1926, %v1926
    %v1929 = vsel %vm179, %v1927, 0.0
    %v1930 = vsel %vm179, %v1928, 0.0
    %1931 = vadd.xlane.f32.xlu0 %v1929
    %v1932 = vpop.xlane.xlu0 %1931
    %1933 = vadd.xlane.f32.xlu0 %v1930
    %v1934 = vpop.xlane.xlu0 %1933
    %v1935 = vmul.f32 %v1932, 0.03125
    %v1936 = vmul.f32 %v1934, 0.03125
    %v1937 = vadd.f32 %v1935, 1e-05
    %v1938 = vadd.f32 %v1936, 1e-05
    %v1939 = vrsqrt.pop %v1937
    %v1940 = vrsqrt.pop %v1938
    %v1941 = vmul.f32 %v1925, %v1939
    %v1942 = vmul.f32 %v1926, %v1940
    %v1943 = vlaneseq
    %v1944 = vshrl.u32 %v1943, 7
    %v1945 = vsub.s32 4, %v1944
    %v1946 = vrot.slane %v1722, %v1945
    %v1947 = vmul.f32 %v1941, %v1946
    %v1948 = vmul.f32 %v1942, %v1946
    %v1949 = vlaneseq
    %v1950 = vshrl.u32 %v1949, 7
    %v1951 = vsub.s32 5, %v1950
    %v1952 = vrot.slane %v1722, %v1951
    %v1953 = vadd.f32 %v1947, %v1952
    %v1954 = vadd.f32 %v1948, %v1952
    %v1955 = vmax.f32 %v1953, 0.0
    %v1956 = vmax.f32 %v1954, 0.0
    %v1957 = vadd.f32 %v1685, %v1955
    %v1958 = vadd.f32 %v1686, %v1956
    %s1959 = scalar_lea.vmem [#allocation2], 896
    %v1960 = vld [vmem:[%s1959] sm:$0xff]
    %v1961 = vld [vmem:[%s1959 + $0x8] sm:$0xff]
    %v1962 = vld [vmem:[%s1959 + $0x10] sm:$0xff]
    %v1963 = vld [vmem:[%s1959 + $0x18] sm:$0xff]
    %v1964 = vld [vmem:[%s1959 + $0x20] sm:$0xff]
    %v1965 = vld [vmem:[%s1959 + $0x28] sm:$0xff]
    %v1966 = vld [vmem:[%s1959 + $0x30] sm:$0xff]
    %v1967 = vld [vmem:[%s1959 + $0x38] sm:$0xff]
    %v1968 = vld [vmem:[%s1959 + $0x40] sm:$0xff]
    %v1969 = vld [vmem:[%s1959 + $0x48] sm:$0xff]
    %v1970 = vld [vmem:[%s1959 + $0x50] sm:$0xff]
    %v1971 = vld [vmem:[%s1959 + $0x58] sm:$0xff]
    %v1972 = vld [vmem:[%s1959 + $0x60] sm:$0xff]
    %v1973 = vld [vmem:[%s1959 + $0x68] sm:$0xff]
    %v1974 = vld [vmem:[%s1959 + $0x70] sm:$0xff]
    %v1975 = vld [vmem:[%s1959 + $0x78] sm:$0xff]
    %s1976 = scalar_lea.vmem [#allocation4], 896
    %v1977 = vld [vmem:[%s1976] sm:$0xff]
    %v1978 = vld [vmem:[%s1976 + $0x8] sm:$0xff]
    %v1979 = vld [vmem:[%s1976 + $0x10] sm:$0xff]
    %v1980 = vld [vmem:[%s1976 + $0x18] sm:$0xff]
    %v1981 = vld [vmem:[%s1976 + $0x20] sm:$0xff]
    %v1982 = vld [vmem:[%s1976 + $0x28] sm:$0xff]
    %v1983 = vld [vmem:[%s1976 + $0x30] sm:$0xff]
    %v1984 = vld [vmem:[%s1976 + $0x38] sm:$0xff]
    %v1985 = vld [vmem:[%s1976 + $0x40] sm:$0xff]
    %v1986 = vld [vmem:[%s1976 + $0x48] sm:$0xff]
    %v1987 = vld [vmem:[%s1976 + $0x50] sm:$0xff]
    %v1988 = vld [vmem:[%s1976 + $0x58] sm:$0xff]
    %v1989 = vld [vmem:[%s1976 + $0x60] sm:$0xff]
    %v1990 = vld [vmem:[%s1976 + $0x68] sm:$0xff]
    %v1991 = vld [vmem:[%s1976 + $0x70] sm:$0xff]
    %v1992 = vld [vmem:[%s1976 + $0x78] sm:$0xff]
    %s1993 = scalar_lea.vmem %s3, 56
    %v1994 = vld [vmem:[%s1993] sm:$0xff]
    %v1995 = vlaneseq
    %v1996 = vshrl.u32 %v1995, 7
    %v1997 = vsub.s32 0, %v1996
    %v1998 = vrot.slane %v1994, %v1997
    %1999 = vmatprep.subr.mxu0 0.0
    %2000 = vmatpush1.msra.mxu0 %v1960
    %2001 = vmatprep.subr.mxu0 0.0
    %2002 = vmatpush1.msra.mxu0 %v1961
    %2003 = vmatprep.subr.mxu0 0.0
    %2004 = vmatpush1.msra.mxu0 %v1962
    %2005 = vmatprep.subr.mxu0 0.0
    %2006 = vmatpush1.msra.mxu0 %v1963
    %2007 = vmatprep.subr.mxu0 0.0
    %2008 = vmatpush1.msra.mxu0 %v1964
    %2009 = vmatprep.subr.mxu0 0.0
    %2010 = vmatpush1.msra.mxu0 %v1965
    %2011 = vmatprep.subr.mxu0 0.0
    %2012 = vmatpush1.msra.mxu0 %v1966
    %2013 = vmatprep.subr.mxu0 0.0
    %2014 = vmatpush1.msra.mxu0 %v1967
    %2015 = vmatprep.subr.mxu0 0.0
    %2016 = vmatpush1.msra.mxu0 %v1968
    %2017 = vmatprep.subr.mxu0 0.0
    %2018 = vmatpush1.msra.mxu0 %v1969
    %2019 = vmatprep.subr.mxu0 0.0
    %2020 = vmatpush1.msra.mxu0 %v1970
    %2021 = vmatprep.subr.mxu0 0.0
    %2022 = vmatpush1.msra.mxu0 %v1971
    %2023 = vmatprep.subr.mxu0 0.0
    %2024 = vmatpush1.msra.mxu0 %v1972
    %2025 = vmatprep.subr.mxu0 0.0
    %2026 = vmatpush1.msra.mxu0 %v1973
    %2027 = vmatprep.subr.mxu0 0.0
    %2028 = vmatpush1.msra.mxu0 %v1974
    %2029 = vmatprep.subr.mxu0 0.0
    %2030 = vmatpush1.msra.mxu0 %v1975
    %2031 = vmatprep.subr.mxu0 0.0
    %2032 = vmatpush1.msra.mxu0 0.0
    %2033 = vmatprep.subr.mxu0 0.0
    %2034 = vmatpush1.msra.mxu0 0.0
    %2035 = vmatprep.subr.mxu0 0.0
    %2036 = vmatpush1.msra.mxu0 0.0
    %2037 = vmatprep.subr.mxu0 0.0
    %2038 = vmatpush1.msra.mxu0 0.0
    %2039 = vmatprep.subr.mxu0 0.0
    %2040 = vmatpush1.msra.mxu0 0.0
    %2041 = vmatprep.subr.mxu0 0.0
    %2042 = vmatpush1.msra.mxu0 0.0
    %2043 = vmatprep.subr.mxu0 0.0
    %2044 = vmatpush1.msra.mxu0 0.0
    %2045 = vmatprep.subr.mxu0 0.0
    %2046 = vmatpush1.msra.mxu0 0.0
    %2047 = vmatprep.subr.mxu0 0.0
    %2048 = vmatpush1.msra.mxu0 0.0
    %2049 = vmatprep.subr.mxu0 0.0
    %2050 = vmatpush1.msra.mxu0 0.0
    %2051 = vmatprep.subr.mxu0 0.0
    %2052 = vmatpush1.msra.mxu0 0.0
    %2053 = vmatprep.subr.mxu0 0.0
    %2054 = vmatpush1.msra.mxu0 0.0
    %2055 = vmatprep.subr.mxu0 0.0
    %2056 = vmatpush1.msra.mxu0 0.0
    %2057 = vmatprep.subr.mxu0 0.0
    %2058 = vmatpush1.msra.mxu0 0.0
    %2059 = vmatprep.subr.mxu0 0.0
    %2060 = vmatpush1.msra.mxu0 0.0
    %2061 = vmatprep.subr.mxu0 0.0
    %2062 = vmatpush1.msra.mxu0 0.0
    %2063 = vmatprep.mubr.f32.mxu0 0.0
    %2064 = vmatmul.mubr.f32.gmra.mrb[0].mxu0 %v1957
    %v2065 = vpop.f32.mrb[0].mxu0
    %v2066 = vadd.f32 %v1998, %v2065
    %v2067 = vpop.f32.mrb[0].mxu0
    %2068 = vmatprep.mubr.f32.mxu0 0.0
    %2069 = vmatmul.mubr.f32.gmra.mrb[0].mxu0 %v1958
    %v2070 = vpop.f32.mrb[0].mxu0
    %v2071 = vadd.f32 %v1998, %v2070
    %v2072 = vpop.f32.mrb[0].mxu0
    %2073 = vdwg.mxu0
    %2074 = vadd.xlane.f32.xlu0 %v2066
    %v2075 = vpop.xlane.xlu0 %2074
    %2076 = vadd.xlane.f32.xlu0 %v2071
    %v2077 = vpop.xlane.xlu0 %2076
    %v2078 = vmul.f32 %v2075, 0.03125
    %v2079 = vmul.f32 %v2077, 0.03125
    %v2080 = vsub.f32 %v2066, %v2078
    %v2081 = vsub.f32 %v2071, %v2079
    %v2082 = vmul.f32 %v2080, %v2080
    %v2083 = vmul.f32 %v2081, %v2081
    %v2084 = vsel %vm179, %v2082, 0.0
    %v2085 = vsel %vm179, %v2083, 0.0
    %2086 = vadd.xlane.f32.xlu0 %v2084
    %v2087 = vpop.xlane.xlu0 %2086
    %2088 = vadd.xlane.f32.xlu0 %v2085
    %v2089 = vpop.xlane.xlu0 %2088
    %v2090 = vmul.f32 %v2087, 0.03125
    %v2091 = vmul.f32 %v2089, 0.03125
    %v2092 = vadd.f32 %v2090, 1e-05
    %v2093 = vadd.f32 %v2091, 1e-05
    %v2094 = vrsqrt.pop %v2092
    %v2095 = vrsqrt.pop %v2093
    %v2096 = vmul.f32 %v2080, %v2094
    %v2097 = vmul.f32 %v2081, %v2095
    %v2098 = vlaneseq
    %v2099 = vshrl.u32 %v2098, 7
    %v2100 = vsub.s32 1, %v2099
    %v2101 = vrot.slane %v1994, %v2100
    %v2102 = vmul.f32 %v2096, %v2101
    %v2103 = vmul.f32 %v2097, %v2101
    %v2104 = vlaneseq
    %v2105 = vshrl.u32 %v2104, 7
    %v2106 = vsub.s32 2, %v2105
    %v2107 = vrot.slane %v1994, %v2106
    %v2108 = vadd.f32 %v2102, %v2107
    %v2109 = vadd.f32 %v2103, %v2107
    %v2110 = vmax.f32 %v2108, 0.0
    %v2111 = vmax.f32 %v2109, 0.0
    %v2112 = vlaneseq
    %v2113 = vshrl.u32 %v2112, 7
    %v2114 = vsub.s32 3, %v2113
    %v2115 = vrot.slane %v1994, %v2114
    %2116 = vmatprep.subr.mxu0 0.0
    %2117 = vmatpush1.msra.mxu0 %v1977
    %2118 = vmatprep.subr.mxu0 0.0
    %2119 = vmatpush1.msra.mxu0 %v1978
    %2120 = vmatprep.subr.mxu0 0.0
    %2121 = vmatpush1.msra.mxu0 %v1979
    %2122 = vmatprep.subr.mxu0 0.0
    %2123 = vmatpush1.msra.mxu0 %v1980
    %2124 = vmatprep.subr.mxu0 0.0
    %2125 = vmatpush1.msra.mxu0 %v1981
    %2126 = vmatprep.subr.mxu0 0.0
    %2127 = vmatpush1.msra.mxu0 %v1982
    %2128 = vmatprep.subr.mxu0 0.0
    %2129 = vmatpush1.msra.mxu0 %v1983
    %2130 = vmatprep.subr.mxu0 0.0
    %2131 = vmatpush1.msra.mxu0 %v1984
    %2132 = vmatprep.subr.mxu0 0.0
    %2133 = vmatpush1.msra.mxu0 %v1985
    %2134 = vmatprep.subr.mxu0 0.0
    %2135 = vmatpush1.msra.mxu0 %v1986
    %2136 = vmatprep.subr.mxu0 0.0
    %2137 = vmatpush1.msra.mxu0 %v1987
    %2138 = vmatprep.subr.mxu0 0.0
    %2139 = vmatpush1.msra.mxu0 %v1988
    %2140 = vmatprep.subr.mxu0 0.0
    %2141 = vmatpush1.msra.mxu0 %v1989
    %2142 = vmatprep.subr.mxu0 0.0
    %2143 = vmatpush1.msra.mxu0 %v1990
    %2144 = vmatprep.subr.mxu0 0.0
    %2145 = vmatpush1.msra.mxu0 %v1991
    %2146 = vmatprep.subr.mxu0 0.0
    %2147 = vmatpush1.msra.mxu0 %v1992
    %2148 = vmatprep.subr.mxu0 0.0
    %2149 = vmatpush1.msra.mxu0 0.0
    %2150 = vmatprep.subr.mxu0 0.0
    %2151 = vmatpush1.msra.mxu0 0.0
    %2152 = vmatprep.subr.mxu0 0.0
    %2153 = vmatpush1.msra.mxu0 0.0
    %2154 = vmatprep.subr.mxu0 0.0
    %2155 = vmatpush1.msra.mxu0 0.0
    %2156 = vmatprep.subr.mxu0 0.0
    %2157 = vmatpush1.msra.mxu0 0.0
    %2158 = vmatprep.subr.mxu0 0.0
    %2159 = vmatpush1.msra.mxu0 0.0
    %2160 = vmatprep.subr.mxu0 0.0
    %2161 = vmatpush1.msra.mxu0 0.0
    %2162 = vmatprep.subr.mxu0 0.0
    %2163 = vmatpush1.msra.mxu0 0.0
    %2164 = vmatprep.subr.mxu0 0.0
    %2165 = vmatpush1.msra.mxu0 0.0
    %2166 = vmatprep.subr.mxu0 0.0
    %2167 = vmatpush1.msra.mxu0 0.0
    %2168 = vmatprep.subr.mxu0 0.0
    %2169 = vmatpush1.msra.mxu0 0.0
    %2170 = vmatprep.subr.mxu0 0.0
    %2171 = vmatpush1.msra.mxu0 0.0
    %2172 = vmatprep.subr.mxu0 0.0
    %2173 = vmatpush1.msra.mxu0 0.0
    %2174 = vmatprep.subr.mxu0 0.0
    %2175 = vmatpush1.msra.mxu0 0.0
    %2176 = vmatprep.subr.mxu0 0.0
    %2177 = vmatpush1.msra.mxu0 0.0
    %2178 = vmatprep.subr.mxu0 0.0
    %2179 = vmatpush1.msra.mxu0 0.0
    %2180 = vmatprep.mubr.f32.mxu0 0.0
    %2181 = vmatmul.mubr.f32.gmra.mrb[0].mxu0 %v2110
    %v2182 = vpop.f32.mrb[0].mxu0
    %v2183 = vadd.f32 %v2115, %v2182
    %v2184 = vpop.f32.mrb[0].mxu0
    %2185 = vmatprep.mubr.f32.mxu0 0.0
    %2186 = vmatmul.mubr.f32.gmra.mrb[0].mxu0 %v2111
    %v2187 = vpop.f32.mrb[0].mxu0
    %v2188 = vadd.f32 %v2115, %v2187
    %v2189 = vpop.f32.mrb[0].mxu0
    %2190 = vdwg.mxu0
    %2191 = vadd.xlane.f32.xlu0 %v2183
    %v2192 = vpop.xlane.xlu0 %2191
    %2193 = vadd.xlane.f32.xlu0 %v2188
    %v2194 = vpop.xlane.xlu0 %2193
    %v2195 = vmul.f32 %v2192, 0.03125
    %v2196 = vmul.f32 %v2194, 0.03125
    %v2197 = vsub.f32 %v2183, %v2195
    %v2198 = vsub.f32 %v2188, %v2196
    %v2199 = vmul.f32 %v2197, %v2197
    %v2200 = vmul.f32 %v2198, %v2198
    %v2201 = vsel %vm179, %v2199, 0.0
    %v2202 = vsel %vm179, %v2200, 0.0
    %2203 = vadd.xlane.f32.xlu0 %v2201
    %v2204 = vpop.xlane.xlu0 %2203
    %2205 = vadd.xlane.f32.xlu0 %v2202
    %v2206 = vpop.xlane.xlu0 %2205
    %v2207 = vmul.f32 %v2204, 0.03125
    %v2208 = vmul.f32 %v2206, 0.03125
    %v2209 = vadd.f32 %v2207, 1e-05
    %v2210 = vadd.f32 %v2208, 1e-05
    %v2211 = vrsqrt.pop %v2209
    %v2212 = vrsqrt.pop %v2210
    %v2213 = vmul.f32 %v2197, %v2211
    %v2214 = vmul.f32 %v2198, %v2212
    %v2215 = vlaneseq
    %v2216 = vshrl.u32 %v2215, 7
    %v2217 = vsub.s32 4, %v2216
    %v2218 = vrot.slane %v1994, %v2217
    %v2219 = vmul.f32 %v2213, %v2218
    %v2220 = vmul.f32 %v2214, %v2218
    %v2221 = vlaneseq
    %v2222 = vshrl.u32 %v2221, 7
    %v2223 = vsub.s32 5, %v2222
    %v2224 = vrot.slane %v1994, %v2223
    %v2225 = vadd.f32 %v2219, %v2224
    %v2226 = vadd.f32 %v2220, %v2224
    %v2227 = vmax.f32 %v2225, 0.0
    %v2228 = vmax.f32 %v2226, 0.0
    %v2229 = vadd.f32 %v1957, %v2227
    %v2230 = vadd.f32 %v1958, %v2228
    %v2231 = vld [vmem:[%s4] sm:$0xff]
    %v2232 = vld [vmem:[%s4 + $0x8] sm:$0xff]
    %v2233 = vld [vmem:[%s4 + $0x10] sm:$0xff]
    %v2234 = vld [vmem:[%s4 + $0x18] sm:$0xff]
    %v2235 = vld [vmem:[%s4 + $0x20] sm:$0xff]
    %v2236 = vld [vmem:[%s4 + $0x28] sm:$0xff]
    %v2237 = vld [vmem:[%s4 + $0x30] sm:$0xff]
    %v2238 = vld [vmem:[%s4 + $0x38] sm:$0xff]
    %v2239 = vld [vmem:[%s4 + $0x40] sm:$0xff]
    %v2240 = vld [vmem:[%s4 + $0x48] sm:$0xff]
    %v2241 = vld [vmem:[%s4 + $0x50] sm:$0xff]
    %v2242 = vld [vmem:[%s4 + $0x58] sm:$0xff]
    %v2243 = vld [vmem:[%s4 + $0x60] sm:$0xff]
    %v2244 = vld [vmem:[%s4 + $0x68] sm:$0xff]
    %v2245 = vld [vmem:[%s4 + $0x70] sm:$0xff]
    %v2246 = vld [vmem:[%s4 + $0x78] sm:$0xff]
    %v2247 = vld [vmem:[%s5] sm:$0x1]
    %v2249 = vlaneseq
    %v2250 = vshrl.u32 %v2249, 7
    %v2251 = vsub.s32 0, %v2250
    %v2252 = vrot.slane %v2247, %v2251
    %2254 = vmatprep.subr.mxu0 0.0
    %2255 = vmatpush1.msra.mxu0 %v2231
    %2256 = vmatprep.subr.mxu0 0.0
    %2257 = vmatpush1.msra.mxu0 %v2232
    %2258 = vmatprep.subr.mxu0 0.0
    %2259 = vmatpush1.msra.mxu0 %v2233
    %2260 = vmatprep.subr.mxu0 0.0
    %2261 = vmatpush1.msra.mxu0 %v2234
    %2262 = vmatprep.subr.mxu0 0.0
    %2263 = vmatpush1.msra.mxu0 %v2235
    %2264 = vmatprep.subr.mxu0 0.0
    %2265 = vmatpush1.msra.mxu0 %v2236
    %2266 = vmatprep.subr.mxu0 0.0
    %2267 = vmatpush1.msra.mxu0 %v2237
    %2268 = vmatprep.subr.mxu0 0.0
    %2269 = vmatpush1.msra.mxu0 %v2238
    %2270 = vmatprep.subr.mxu0 0.0
    %2271 = vmatpush1.msra.mxu0 %v2239
    %2272 = vmatprep.subr.mxu0 0.0
    %2273 = vmatpush1.msra.mxu0 %v2240
    %2274 = vmatprep.subr.mxu0 0.0
    %2275 = vmatpush1.msra.mxu0 %v2241
    %2276 = vmatprep.subr.mxu0 0.0
    %2277 = vmatpush1.msra.mxu0 %v2242
    %2278 = vmatprep.subr.mxu0 0.0
    %2279 = vmatpush1.msra.mxu0 %v2243
    %2280 = vmatprep.subr.mxu0 0.0
    %2281 = vmatpush1.msra.mxu0 %v2244
    %2282 = vmatprep.subr.mxu0 0.0
    %2283 = vmatpush1.msra.mxu0 %v2245
    %2284 = vmatprep.subr.mxu0 0.0
    %2285 = vmatpush1.msra.mxu0 %v2246
    %2286 = vmatprep.subr.mxu0 0.0
    %2287 = vmatpush1.msra.mxu0 0.0
    %2288 = vmatprep.subr.mxu0 0.0
    %2289 = vmatpush1.msra.mxu0 0.0
    %2290 = vmatprep.subr.mxu0 0.0
    %2291 = vmatpush1.msra.mxu0 0.0
    %2292 = vmatprep.subr.mxu0 0.0
    %2293 = vmatpush1.msra.mxu0 0.0
    %2294 = vmatprep.subr.mxu0 0.0
    %2295 = vmatpush1.msra.mxu0 0.0
    %2296 = vmatprep.subr.mxu0 0.0
    %2297 = vmatpush1.msra.mxu0 0.0
    %2298 = vmatprep.subr.mxu0 0.0
    %2299 = vmatpush1.msra.mxu0 0.0
    %2300 = vmatprep.subr.mxu0 0.0
    %2301 = vmatpush1.msra.mxu0 0.0
    %2302 = vmatprep.subr.mxu0 0.0
    %2303 = vmatpush1.msra.mxu0 0.0
    %2304 = vmatprep.subr.mxu0 0.0
    %2305 = vmatpush1.msra.mxu0 0.0
    %2306 = vmatprep.subr.mxu0 0.0
    %2307 = vmatpush1.msra.mxu0 0.0
    %2308 = vmatprep.subr.mxu0 0.0
    %2309 = vmatpush1.msra.mxu0 0.0
    %2310 = vmatprep.subr.mxu0 0.0
    %2311 = vmatpush1.msra.mxu0 0.0
    %2312 = vmatprep.subr.mxu0 0.0
    %2313 = vmatpush1.msra.mxu0 0.0
    %2314 = vmatprep.subr.mxu0 0.0
    %2315 = vmatpush1.msra.mxu0 0.0
    %2316 = vmatprep.subr.mxu0 0.0
    %2317 = vmatpush1.msra.mxu0 0.0
    %2318 = vmatprep.mubr.f32.mxu0 0.0
    %2319 = vmatmul.mubr.f32.gmra.mrb[0].mxu0 %v2229
    %v2320 = vpop.f32.mrb[0].mxu0
    %v2321 = vadd.f32 %v2252, %v2320
    %v2322 = vpop.f32.mrb[0].mxu0
    %2323 = vmatprep.mubr.f32.mxu0 0.0
    %2324 = vmatmul.mubr.f32.gmra.mrb[0].mxu0 %v2230
    %v2325 = vpop.f32.mrb[0].mxu0
    %v2326 = vadd.f32 %v2252, %v2325
    %v2327 = vpop.f32.mrb[0].mxu0
    %2328 = vdwg.mxu0
    %2329 = vst [vmem:[%s6] sm:$0xff] %v2321
    %2330 = vst [vmem:[%s6 + $0x8] sm:$0xff] %v2326
    // Predicated region
    $region34: #{nextitnet_forward.1} parent=1 // pred_check
      _
    $region35: #{nextitnet_forward.1} parent=1 // pred_check_branch
      %2332 = sbr.rel (0) target = $region37
    $region36: #{nextitnet_forward.1} parent=1 // pred_region
      _
    $region37: #{nextitnet_forward.1} parent=1 // pred_fallthru
      _
    // Predicated region
    $region38: #{nextitnet_forward.1} parent=1 // pred_check
      _
    $region39: #{nextitnet_forward.1} parent=1 // pred_check_branch
      %2334 = sbr.rel (0) target = $region41
    $region40: #{nextitnet_forward.1} parent=1 // pred_region
      _
    $region41: #{nextitnet_forward.1} parent=1 // pred_fallthru
      _
    %2335 = vsyncpa [#allocation3], 1
    %2336 = vsyncpa [#allocation5], 1

</llo_original>
